<compile_context>
chip_gen: v6e
topology: v6e:2x2x1
jax: 0.10.0
libtpu: 0.0.40
codegen_flags: <defaults>
</compile_context>

<pallas_src>
import functools

import jax
import jax.numpy as jnp
from jax import lax
from jax.experimental import pallas as pl
from jax.experimental.pallas import tpu as pltpu


def _focal_loss_tile_kernel(x_ref, t_ref, psum_ref, *, alpha, gamma,
                            valid_rows, block_rows):
    pid = pl.program_id(0)

    x = x_ref[...].astype(jnp.float32)
    t = t_ref[...].astype(jnp.float32)

    # Numerically stable BCE-with-logits (matches F.binary_cross_entropy_with_logits):
    #   loss = max(x, 0) - x*t + log(1 + exp(-|x|))
    bce = jnp.maximum(x, 0.0) - x * t + jnp.log1p(jnp.exp(-jnp.abs(x)))

    # alpha gather: alpha_vec = [alpha, 1 - alpha]; at = alpha_vec[target]
    at = jnp.where(t > 0.5, 1.0 - alpha, alpha)

    pt = jnp.exp(-bce)
    u = 1.0 - pt
    # (1 - pt)**gamma : multiply chain for integer gamma (avoids log/exp on EUP).
    if float(gamma) == float(int(gamma)) and int(gamma) >= 0:
        w = jnp.ones_like(u)
        for _ in range(int(gamma)):
            w = w * u
    else:
        w = u ** jnp.float32(gamma)

    focal = at * w * bce

    # Zero out contributions from rows padded to a multiple of block_rows.
    row_ids = pid * block_rows + lax.broadcasted_iota(jnp.int32, focal.shape, 0)
    focal = jnp.where(row_ids < valid_rows, focal, 0.0)

    # One cross-lane/sublane reduce per tile, written as a lane-dense block.
    psum_ref[...] = jnp.full((1, 1, 128), jnp.sum(focal), dtype=jnp.float32)


def focal_loss(inputs, targets, alpha=0.25, gamma=2):
    """inputs: (..., N) logits; targets: same shape, {0, 1} labels (any float dtype)."""
    assert inputs.shape == targets.shape
    n_elems = inputs.size

    # Flatten to 2-D (rows, lanes); the feature/last axis maps to TPU lanes.
    if inputs.ndim >= 2:
        x2 = inputs.reshape(-1, inputs.shape[-1])
    else:
        x2 = inputs.reshape(1, -1)
    t2 = targets.reshape(x2.shape)
    R, C = x2.shape

    # Tile rows: ~2 MiB per f32 tile, multiple of 8, capped at 512 rows, and no
    # bigger than the (8-rounded) row count.  2 inputs x 2 pipeline buffers of
    # this size stay far below the 32 MiB scoped-VMEM limit set below (v7x-safe).
    bytes_per_row = C * 4
    block_rows = max(8, min(512, (2 * 1024 * 1024 // max(bytes_per_row, 1)) // 8 * 8))
    block_rows = min(block_rows, ((R + 7) // 8) * 8)
    padded_rows = ((R + block_rows - 1) // block_rows) * block_rows
    num_tiles = padded_rows // block_rows

    if padded_rows != R:
        pad = ((0, padded_rows - R), (0, 0))
        x2 = jnp.pad(x2, pad)
        t2 = jnp.pad(t2, pad)

    kernel = functools.partial(
        _focal_loss_tile_kernel,
        alpha=float(alpha),
        gamma=gamma,
        valid_rows=R,
        block_rows=block_rows,
    )

    psums = pl.pallas_call(
        kernel,
        out_shape=jax.ShapeDtypeStruct((num_tiles, 1, 128), jnp.float32),
        grid=(num_tiles,),
        in_specs=[
            pl.BlockSpec((block_rows, C), lambda i: (i, 0)),
            pl.BlockSpec((block_rows, C), lambda i: (i, 0)),
        ],
        out_specs=pl.BlockSpec((1, 1, 128), lambda i: (i, 0, 0)),
        compiler_params=pltpu.CompilerParams(
            dimension_semantics=("parallel",),
            vmem_limit_bytes=32 * 1024 * 1024,
        ),
    )(x2, t2)

    # Tiny final reduction + mean in the wrapper (partials array is ~num_tiles floats).
    total = jnp.sum(psums[:, 0, 0])
    return total / jnp.float32(n_elems)


def _focal_loss_ref(inputs, targets, alpha=0.25, gamma=2):
    x = inputs.astype(jnp.float32)
    t = targets.astype(jnp.float32)
    bce = jnp.maximum(x, 0.0) - x * t + jnp.log1p(jnp.exp(-jnp.abs(x)))
    at = jnp.where(t > 0.5, 1.0 - alpha, alpha)
    pt = jnp.exp(-bce)
    return jnp.mean(at * (1.0 - pt) ** gamma * bce)


if __name__ == "__main__":
    # Deterministic synthetic inputs (no checkpoint loading).
    key = jax.random.PRNGKey(0)
    k_x, k_t = jax.random.split(key)

    # Small but multi-tile: 1000 rows is not a multiple of the 512-row tile,
    # so the padded-row masking path is exercised too.
    B, N = 1000, 256
    inputs = jax.random.normal(k_x, (B, N), dtype=jnp.float32)
    targets = (jax.random.uniform(k_t, (B, N)) > 0.5).astype(jnp.float32)

    loss = focal_loss(inputs, targets, alpha=0.25, gamma=2)
    loss = jax.block_until_ready(loss)

    ref = jax.block_until_ready(_focal_loss_ref(inputs, targets))
    assert jnp.allclose(loss, ref, atol=1e-5, rtol=1e-5), (loss, ref)

    print("KERNEL_OK")
</pallas_src>

<mosaic_0001>
module attributes {stable_mosaic.version = 11 : i64} {
  func.func @_focal_loss_tile_kernel(%arg0: i32, %arg1: memref<512x256xf32, #tpu.memory_space<vmem>>, %arg2: memref<512x256xf32, #tpu.memory_space<vmem>>, %arg3: memref<1x1x128xf32, #tpu.memory_space<vmem>>) attributes {dimension_semantics = [#tpu.dimension_semantics<parallel>], iteration_bounds = array<i64: 2>, scalar_prefetch = 0 : i64, scratch_operands = 0 : i64, tpu.core_type = #tpu.core_type<tc>, window_params = [{transform_indices = @transform_0, window_bounds = array<i64: 512, 256>}, {transform_indices = @transform_1, window_bounds = array<i64: 512, 256>}, {transform_indices = @transform_2, window_bounds = array<i64: 1, 1, 128>}]} {
    %c0 = arith.constant 0 : index
    %c0_0 = arith.constant 0 : index
    %0 = vector.load %arg1[%c0, %c0_0] : memref<512x256xf32, #tpu.memory_space<vmem>>, vector<512x256xf32>
    %c0_1 = arith.constant 0 : index
    %c0_2 = arith.constant 0 : index
    %1 = vector.load %arg2[%c0_1, %c0_2] : memref<512x256xf32, #tpu.memory_space<vmem>>, vector<512x256xf32>
    %cst = arith.constant 0.000000e+00 : f32
    %2 = vector.broadcast %cst : f32 to vector<512x256xf32>
    %3 = arith.maximumf %0, %2 : vector<512x256xf32>
    %4 = arith.mulf %0, %1 : vector<512x256xf32>
    %5 = arith.subf %3, %4 : vector<512x256xf32>
    %6 = math.absf %0 : vector<512x256xf32>
    %cst_3 = arith.constant 0.000000e+00 : f32
    %7 = vector.broadcast %cst_3 : f32 to vector<512x256xf32>
    %8 = arith.subf %7, %6 : vector<512x256xf32>
    %9 = math.exp %8 : vector<512x256xf32>
    %10 = math.log1p %9 : vector<512x256xf32>
    %11 = arith.addf %5, %10 : vector<512x256xf32>
    %cst_4 = arith.constant 5.000000e-01 : f32
    %12 = vector.broadcast %cst_4 : f32 to vector<512x256xf32>
    %13 = arith.cmpf ogt, %1, %12 : vector<512x256xf32>
    %cst_5 = arith.constant 7.500000e-01 : f32
    %cst_6 = arith.constant 2.500000e-01 : f32
    %14 = vector.broadcast %cst_5 : f32 to vector<512x256xf32>
    %15 = vector.broadcast %cst_6 : f32 to vector<512x256xf32>
    %16 = arith.select %13, %14, %15 : vector<512x256xi1>, vector<512x256xf32>
    %cst_7 = arith.constant 0.000000e+00 : f32
    %17 = vector.broadcast %cst_7 : f32 to vector<512x256xf32>
    %18 = arith.subf %17, %11 : vector<512x256xf32>
    %19 = math.exp %18 : vector<512x256xf32>
    %cst_8 = arith.constant 1.000000e+00 : f32
    %20 = vector.broadcast %cst_8 : f32 to vector<512x256xf32>
    %21 = arith.subf %20, %19 : vector<512x256xf32>
    %cst_9 = arith.constant 1.000000e+00 : f32
    %22 = vector.broadcast %cst_9 : f32 to vector<512x256xf32>
    %23 = arith.mulf %22, %21 : vector<512x256xf32>
    %24 = arith.mulf %23, %21 : vector<512x256xf32>
    %25 = arith.mulf %16, %24 : vector<512x256xf32>
    %26 = arith.mulf %25, %11 : vector<512x256xf32>
    %c512_i32 = arith.constant 512 : i32
    %27 = arith.muli %arg0, %c512_i32 : i32
    %28 = tpu.iota {dimensions = array<i32: 0>} : vector<512x256xi32>
    %29 = vector.broadcast %27 : i32 to vector<512x256xi32>
    %30 = arith.addi %29, %28 : vector<512x256xi32>
    %c1000_i32 = arith.constant 1000 : i32
    %31 = vector.broadcast %c1000_i32 : i32 to vector<512x256xi32>
    %32 = arith.cmpi slt, %30, %31 : vector<512x256xi32>
    %cst_10 = arith.constant 0.000000e+00 : f32
    %33 = vector.broadcast %cst_10 : f32 to vector<512x256xf32>
    %34 = arith.select %32, %26, %33 : vector<512x256xi1>, vector<512x256xf32>
    %35 = vector.shape_cast %34 : vector<512x256xf32> to vector<1x512x256xf32>
    %cst_11 = arith.constant dense<0.000000e+00> : vector<1xf32>
    %36 = vector.multi_reduction <add>, %35, %cst_11 [1, 2] : vector<1x512x256xf32> to vector<1xf32>
    %37 = vector.shape_cast %36 : vector<1xf32> to vector<1x1x1xf32>
    %38 = vector.extract %37[0, 0, 0] : f32 from vector<1x1x1xf32>
    %39 = vector.broadcast %38 : f32 to vector<1x1x128xf32>
    %c0_12 = arith.constant 0 : index
    %c0_13 = arith.constant 0 : index
    %c0_14 = arith.constant 0 : index
    %40 = vector.load %arg3[%c0_12, %c0_13, %c0_14] : memref<1x1x128xf32, #tpu.memory_space<vmem>>, vector<1x1x128xf32>
    tpu.vector_store %arg3[%c0_12, %c0_13, %c0_14], %39 {strides = array<i32>} : memref<1x1x128xf32, #tpu.memory_space<vmem>>, vector<1x1x128xf32>,
    return
  }
  func.func @transform_0(%arg0: i32) -> (i32, i32) {
    %c0_i32 = arith.constant 0 : i32
    %c0_i32_0 = arith.constant 0 : i32
    return %arg0, %c0_i32 : i32, i32
  }
  func.func @transform_1(%arg0: i32) -> (i32, i32) {
    %c0_i32 = arith.constant 0 : i32
    %c0_i32_0 = arith.constant 0 : i32
    return %arg0, %c0_i32 : i32, i32
  }
  func.func @transform_2(%arg0: i32) -> (i32, i32, i32) {
    %c0_i32 = arith.constant 0 : i32
    %c0_i32_0 = arith.constant 0 : i32
    %c0_i32_1 = arith.constant 0 : i32
    return %arg0, %c0_i32, %c0_i32_0 : i32, i32, i32
  }
}

</mosaic_0001>

<llo_original>
// kernel: tpu_custom_call.1
$region0: #{tpu_custom_call.1}
  #allocation0 [shape = 'u32[]', space=smem, size = 0x4, offset = 0x4, fixed_abs, tag = 'smem constant byte address 0x4 - core index']
  #allocation1 [shape = 'u32[144,128]{1,0:T(1,128)}', space=vmem, size = 0x12000, scoped, tag = 'internal scratch']
  %s0 = inlined_call_operand.hbm [shape: f32[1024,256], index: 0, kind: input, shape index: {}]
  %s1 = inlined_call_operand.hbm [shape: f32[1024,256], index: 1, kind: input, shape index: {}]
  %s2 = inlined_call_operand.hbm [shape: f32[2,1,128], index: 2, kind: output, shape index: {}]
  %s3 = sld [smem:[#allocation0]]
  $region49: #{tpu_custom_call.1} parent=0
    _
  %s5 = ssub.s32 1, %s3
  %s6 = scalar_select 0, %s5, %s3
  $region1: #{tpu_custom_call.1} parent=0
    #allocation2 [shape = 'u8[1048576]{0}', space=vmem, size = 0x100000, scoped, tag = 'input window, operand 0']
    #allocation3 [shape = 's32[2]{0}', space=sflag, size = 0x8, scoped, tag = 'scoped memory for tpu_custom_call.1']
    #allocation4 [shape = 's32[2]{0}', space=sflag, size = 0x8, scoped, tag = 'scoped memory for tpu_custom_call.1']
    #allocation5 [shape = 'u8[1048576]{0}', space=vmem, size = 0x100000, scoped, tag = 'input window, operand 1']
    #allocation6 [shape = 's32[2]{0}', space=sflag, size = 0x8, scoped, tag = 'scoped memory for tpu_custom_call.1']
    #allocation7 [shape = 'u8[1024]{0}', space=vmem, size = 0x400, scoped, tag = 'output window, operand 0']
    %7 = vsyncpa [#allocation3], 0
    %s8 = scalar_lea.sflag [#allocation3], 1
    %9 = vsyncpa %s8, 0
    %10 = vsyncpa [#allocation6], 0
    %s11 = scalar_lea.sflag [#allocation6], 1
    %12 = vsyncpa %s11, 0
    %13 = vsyncpa [#allocation4], 0
    %s14 = scalar_lea.sflag [#allocation4], 1
    %15 = vsyncpa %s14, 0
    loop: start=0, step=1, limit=4
    $region2: #{tpu_custom_call.1} parent=1 // loop_pre_header
      _
    $region3: #{tpu_custom_call.1} parent=1 // loop_header
      %s17 = sphi 0, %s21
      %p18 = scmp.ge.s32.totalorder %s17, 4
      %s27 = sphi 0, %s29
      %s30 = sphi 0, %s27
      %s31 = sphi 0, %s30
      %s47 = sphi 0, %s31
      %s53 = sphi 0, %s55
      %s56 = sphi 0, %s53
      %s57 = sphi 0, %s56
      %s73 = sphi 0, %s57
      %s79 = sphi 0, %s81
      %s82 = sphi 0, %s79
      %s83 = sphi 0, %s82
      %s99 = sphi 0, %s83
    $region4: #{tpu_custom_call.1} parent=1 // loop_header_branch
      %20 = sbr.rel (%p18) target = $region8
    $region5: #{tpu_custom_call.1} parent=1 // loop_body
      %s22 = ssub.s32 %s17, 1
      %s23 = ssub.s32 %s17, 2
      %s24 = sadd.s32 %s17, 1
      %s25 = ssub.s32 %s17, %s24
      %p26 = scmp.eq.s32.totalorder %s25, 0
      %s28 = sadd.s32 %s27, 1
      %s29 = scalar_select %p26, %s27, %s28
      %p32 = pneg %p26
      %p33 = scmp.eq.s32.totalorder %s17, 1
      %p34 = por %p32, %p33
      %p35 = scmp.ne.s32.totalorder %s27, %s30
      %p36 = scmp.eq.s32.totalorder %s17, 0
      %p37 = por %p35, %p36
      %p38 = scmp.ne.s32.totalorder %s27, %s30
      %p39 = scmp.eq.s32.totalorder %s22, 1
      %p40 = por %p38, %p39
      %p41 = scmp.ne.s32.totalorder %s30, %s31
      %p42 = scmp.eq.s32.totalorder %s22, 0
      %p43 = por %p41, %p42
      %p44 = scmp.ne.s32.totalorder %s30, %s31
      %p45 = scmp.eq.s32.totalorder %s23, 1
      %p46 = por %p44, %p45
      %p48 = scmp.ne.s32.totalorder %s31, %s47
      %p49 = scmp.eq.s32.totalorder %s23, 0
      %p50 = por %p48, %p49
      %s51 = ssub.s32 %s17, %s24
      %p52 = scmp.eq.s32.totalorder %s51, 0
      %s54 = sadd.s32 %s53, 1
      %s55 = scalar_select %p52, %s53, %s54
      %p58 = pneg %p52
      %p59 = scmp.eq.s32.totalorder %s17, 1
      %p60 = por %p58, %p59
      %p61 = scmp.ne.s32.totalorder %s53, %s56
      %p62 = scmp.eq.s32.totalorder %s17, 0
      %p63 = por %p61, %p62
      %p64 = scmp.ne.s32.totalorder %s53, %s56
      %p65 = scmp.eq.s32.totalorder %s22, 1
      %p66 = por %p64, %p65
      %p67 = scmp.ne.s32.totalorder %s56, %s57
      %p68 = scmp.eq.s32.totalorder %s22, 0
      %p69 = por %p67, %p68
      %p70 = scmp.ne.s32.totalorder %s56, %s57
      %p71 = scmp.eq.s32.totalorder %s23, 1
      %p72 = por %p70, %p71
      %p74 = scmp.ne.s32.totalorder %s57, %s73
      %p75 = scmp.eq.s32.totalorder %s23, 0
      %p76 = por %p74, %p75
      %s77 = ssub.s32 %s17, %s24
      %p78 = scmp.eq.s32.totalorder %s77, 0
      %s80 = sadd.s32 %s79, 1
      %s81 = scalar_select %p78, %s79, %s80
      %p84 = pneg %p78
      %p85 = scmp.eq.s32.totalorder %s17, 1
      %p86 = por %p84, %p85
      %p87 = scmp.ne.s32.totalorder %s79, %s82
      %p88 = scmp.eq.s32.totalorder %s17, 0
      %p89 = por %p87, %p88
      %p90 = scmp.ne.s32.totalorder %s79, %s82
      %p91 = scmp.eq.s32.totalorder %s22, 1
      %p92 = por %p90, %p91
      %p93 = scmp.ne.s32.totalorder %s82, %s83
      %p94 = scmp.eq.s32.totalorder %s22, 0
      %p95 = por %p93, %p94
      %p96 = scmp.ne.s32.totalorder %s82, %s83
      %p97 = scmp.eq.s32.totalorder %s23, 1
      %p98 = por %p96, %p97
      %p100 = scmp.ne.s32.totalorder %s83, %s99
      %p101 = scmp.eq.s32.totalorder %s23, 0
      %p102 = por %p100, %p101
      %p103 = scmp.le.s32.totalorder 1, %s17
      %p104 = scmp.lt.s32.totalorder %s17, 3
      %p105 = pnand %p103, %p104
      %p106 = pneg %p105
      // Predicated region
      $region9: #{tpu_custom_call.1} parent=5 // pred_check
        _
      $region10: #{tpu_custom_call.1} parent=5 // pred_check_branch
        %108 = sbr.rel (%p105) target = $region12
      $region11: #{tpu_custom_call.1} parent=5 // pred_region
        %s109 = ssub.s32 %s17, 1
      $region12: #{tpu_custom_call.1} parent=5 // pred_fallthru
        _
      %p110 = scmp.lt.s32.totalorder %s17, 2
      // Predicated region
      $region13: #{tpu_custom_call.1} parent=5 // pred_check
        %p111 = pneg %p110
      $region14: #{tpu_custom_call.1} parent=5 // pred_check_branch
        %113 = sbr.rel (%p111) target = $region16
      $region15: #{tpu_custom_call.1} parent=5 // pred_region
        // Predicated region
        $region17: #{tpu_custom_call.1} parent=15 // pred_check
          %p114 = pneg %p37
        $region18: #{tpu_custom_call.1} parent=15 // pred_check_branch
          %116 = sbr.rel (%p114) target = $region20
        $region19: #{tpu_custom_call.1} parent=15 // pred_region
          %s117 = sand.u32 %s27, 1
          %s118 = scalar_lea.sflag [#allocation3], %s117
          %s119 = sand.u32 %s27, 1
          %s120 = smul.addr %s119, 1024
          %s121 = scalar_lea.vmem [#allocation2], %s120
          %s122 = smul.u32 64, %s17
          %s124 = ssub.s32 16384, 16384
          %125 = vsyncadd %s118, %s124
          %s126 = smul.addr %s122, 2
          %s127 = smul.addr %s126, 128
          %s128 = scalar_lea.hbm %s0, %s127
          %s129 = sshll.u32 %s121, 4
          %s130 = int_to_ptr.vmem [resolvable:$true] %s129
          %135 = dma.hbm_to_vmem [thread:$0]  %s128, 16384, %s130, %s118, 256, 256, 16
        $region20: #{tpu_custom_call.1} parent=15 // pred_fallthru
          _
        // Predicated region
        $region21: #{tpu_custom_call.1} parent=15 // pred_check
          %p136 = pneg %p63
        $region22: #{tpu_custom_call.1} parent=15 // pred_check_branch
          %138 = sbr.rel (%p136) target = $region24
        $region23: #{tpu_custom_call.1} parent=15 // pred_region
          %s139 = sand.u32 %s53, 1
          %s140 = scalar_lea.sflag [#allocation6], %s139
          %s141 = sand.u32 %s53, 1
          %s142 = smul.addr %s141, 1024
          %s143 = scalar_lea.vmem [#allocation5], %s142
          %s144 = smul.u32 64, %s17
          %s146 = ssub.s32 16384, 16384
          %147 = vsyncadd %s140, %s146
          %s148 = smul.addr %s144, 2
          %s149 = smul.addr %s148, 128
          %s150 = scalar_lea.hbm %s1, %s149
          %s151 = sshll.u32 %s143, 4
          %s152 = int_to_ptr.vmem [resolvable:$true] %s151
          %157 = dma.hbm_to_vmem [thread:$0]  %s150, 16384, %s152, %s140, 256, 256, 16
        $region24: #{tpu_custom_call.1} parent=15 // pred_fallthru
          _
      $region16: #{tpu_custom_call.1} parent=5 // pred_fallthru
        _
      %p158 = scmp.le.s32.totalorder 1, %s17
      %p159 = scmp.lt.s32.totalorder %s17, 3
      %p160 = pnand %p158, %p159
      %p161 = pneg %p160
      // Predicated region
      $region25: #{tpu_custom_call.1} parent=5 // pred_check
        _
      $region26: #{tpu_custom_call.1} parent=5 // pred_check_branch
        %163 = sbr.rel (%p160) target = $region28
      $region27: #{tpu_custom_call.1} parent=5 // pred_region
        %s164 = ssub.s32 %s17, 1
        %s165 = sand.u32 %s30, 1
        %s166 = scalar_lea.sflag [#allocation3], %s165
        %s167 = sand.u32 %s30, 1
        %s168 = smul.addr %s167, 1024
        %s169 = scalar_lea.vmem [#allocation2], %s168
        // Predicated region
        $region29: #{tpu_custom_call.1} parent=27 // pred_check
          %p170 = pneg %p43
        $region30: #{tpu_custom_call.1} parent=27 // pred_check_branch
          %172 = sbr.rel (%p170) target = $region32
        $region31: #{tpu_custom_call.1} parent=27 // pred_region
          %173 = dma.done %s166, 16384
        $region32: #{tpu_custom_call.1} parent=27 // pred_fallthru
          _
        %s174 = sand.u32 %s56, 1
        %s175 = scalar_lea.sflag [#allocation6], %s174
        %s176 = sand.u32 %s56, 1
        %s177 = smul.addr %s176, 1024
        %s178 = scalar_lea.vmem [#allocation5], %s177
        // Predicated region
        $region33: #{tpu_custom_call.1} parent=27 // pred_check
          %p179 = pneg %p69
        $region34: #{tpu_custom_call.1} parent=27 // pred_check_branch
          %181 = sbr.rel (%p179) target = $region36
        $region35: #{tpu_custom_call.1} parent=27 // pred_region
          %182 = dma.done %s175, 16384
        $region36: #{tpu_custom_call.1} parent=27 // pred_fallthru
          _
        %s183 = sand.u32 %s30, 1
        %s184 = scalar_lea.sflag [#allocation3], %s183
        %s185 = sand.u32 %s30, 1
        %s186 = smul.addr %s185, 1024
        %s187 = scalar_lea.vmem [#allocation2], %s186
        %p188 = pneg %p43
        %p189 = pneg %p40
        %s190 = sand.u32 %s56, 1
        %s191 = scalar_lea.sflag [#allocation6], %s190
        %s192 = sand.u32 %s56, 1
        %s193 = smul.addr %s192, 1024
        %s194 = scalar_lea.vmem [#allocation5], %s193
        %p195 = pneg %p69
        %p196 = pneg %p66
        %p197 = pneg %p95
        %p198 = pneg %p92
        %s199 = sand.u32 %s82, 1
        %s200 = scalar_lea.sflag [#allocation4], %s199
        %s201 = sand.u32 %s82, 1
        %s202 = scalar_lea.vmem [#allocation7], %s201
        %s203 = smul.u32 64, %s22
        %s204 = smul.u32 64, %s22
        %v205 = vld [vmem:[%s169] sm:$0xff]
        %v206 = vld [vmem:[%s169 + $0x8] sm:$0xff]
        %v207 = vld [vmem:[%s169 + $0x10] sm:$0xff]
        %v208 = vld [vmem:[%s169 + $0x18] sm:$0xff]
        %v209 = vld [vmem:[%s169 + $0x20] sm:$0xff]
        %v210 = vld [vmem:[%s169 + $0x28] sm:$0xff]
        %v211 = vld [vmem:[%s169 + $0x30] sm:$0xff]
        %v212 = vld [vmem:[%s169 + $0x38] sm:$0xff]
        %v213 = vld [vmem:[%s169 + $0x40] sm:$0xff]
        %v214 = vld [vmem:[%s169 + $0x48] sm:$0xff]
        %v215 = vld [vmem:[%s169 + $0x50] sm:$0xff]
        %v216 = vld [vmem:[%s169 + $0x58] sm:$0xff]
        %v217 = vld [vmem:[%s169 + $0x60] sm:$0xff]
        %v218 = vld [vmem:[%s169 + $0x68] sm:$0xff]
        %v219 = vld [vmem:[%s169 + $0x70] sm:$0xff]
        %v220 = vld [vmem:[%s169 + $0x78] sm:$0xff]
        %v221 = vld [vmem:[%s169 + $0x80] sm:$0xff]
        %v222 = vld [vmem:[%s169 + $0x88] sm:$0xff]
        %v223 = vld [vmem:[%s169 + $0x90] sm:$0xff]
        %v224 = vld [vmem:[%s169 + $0x98] sm:$0xff]
        %v225 = vld [vmem:[%s169 + $0xa0] sm:$0xff]
        %v226 = vld [vmem:[%s169 + $0xa8] sm:$0xff]
        %v227 = vld [vmem:[%s169 + $0xb0] sm:$0xff]
        %v228 = vld [vmem:[%s169 + $0xb8] sm:$0xff]
        %v229 = vld [vmem:[%s169 + $0xc0] sm:$0xff]
        %v230 = vld [vmem:[%s169 + $0xc8] sm:$0xff]
        %v231 = vld [vmem:[%s169 + $0xd0] sm:$0xff]
        %v232 = vld [vmem:[%s169 + $0xd8] sm:$0xff]
        %v233 = vld [vmem:[%s169 + $0xe0] sm:$0xff]
        %v234 = vld [vmem:[%s169 + $0xe8] sm:$0xff]
        %v235 = vld [vmem:[%s169 + $0xf0] sm:$0xff]
        %v236 = vld [vmem:[%s169 + $0xf8] sm:$0xff]
        %v237 = vld [vmem:[%s169 + $0x100] sm:$0xff]
        %v238 = vld [vmem:[%s169 + $0x108] sm:$0xff]
        %v239 = vld [vmem:[%s169 + $0x110] sm:$0xff]
        %v240 = vld [vmem:[%s169 + $0x118] sm:$0xff]
        %v241 = vld [vmem:[%s169 + $0x120] sm:$0xff]
        %v242 = vld [vmem:[%s169 + $0x128] sm:$0xff]
        %v243 = vld [vmem:[%s169 + $0x130] sm:$0xff]
        %v244 = vld [vmem:[%s169 + $0x138] sm:$0xff]
        %v245 = vld [vmem:[%s169 + $0x140] sm:$0xff]
        %v246 = vld [vmem:[%s169 + $0x148] sm:$0xff]
        %v247 = vld [vmem:[%s169 + $0x150] sm:$0xff]
        %v248 = vld [vmem:[%s169 + $0x158] sm:$0xff]
        %v249 = vld [vmem:[%s169 + $0x160] sm:$0xff]
        %v250 = vld [vmem:[%s169 + $0x168] sm:$0xff]
        %v251 = vld [vmem:[%s169 + $0x170] sm:$0xff]
        %v252 = vld [vmem:[%s169 + $0x178] sm:$0xff]
        %v253 = vld [vmem:[%s169 + $0x180] sm:$0xff]
        %v254 = vld [vmem:[%s169 + $0x188] sm:$0xff]
        %v255 = vld [vmem:[%s169 + $0x190] sm:$0xff]
        %v256 = vld [vmem:[%s169 + $0x198] sm:$0xff]
        %v257 = vld [vmem:[%s169 + $0x1a0] sm:$0xff]
        %v258 = vld [vmem:[%s169 + $0x1a8] sm:$0xff]
        %v259 = vld [vmem:[%s169 + $0x1b0] sm:$0xff]
        %v260 = vld [vmem:[%s169 + $0x1b8] sm:$0xff]
        %v261 = vld [vmem:[%s169 + $0x1c0] sm:$0xff]
        %v262 = vld [vmem:[%s169 + $0x1c8] sm:$0xff]
        %v263 = vld [vmem:[%s169 + $0x1d0] sm:$0xff]
        %v264 = vld [vmem:[%s169 + $0x1d8] sm:$0xff]
        %v265 = vld [vmem:[%s169 + $0x1e0] sm:$0xff]
        %v266 = vld [vmem:[%s169 + $0x1e8] sm:$0xff]
        %v267 = vld [vmem:[%s169 + $0x1f0] sm:$0xff]
        %v268 = vld [vmem:[%s169 + $0x1f8] sm:$0xff]
        %v269 = vld [vmem:[%s169 + $0x200] sm:$0xff]
        %v270 = vld [vmem:[%s169 + $0x208] sm:$0xff]
        %v271 = vld [vmem:[%s169 + $0x210] sm:$0xff]
        %v272 = vld [vmem:[%s169 + $0x218] sm:$0xff]
        %v273 = vld [vmem:[%s169 + $0x220] sm:$0xff]
        %v274 = vld [vmem:[%s169 + $0x228] sm:$0xff]
        %v275 = vld [vmem:[%s169 + $0x230] sm:$0xff]
        %v276 = vld [vmem:[%s169 + $0x238] sm:$0xff]
        %v277 = vld [vmem:[%s169 + $0x240] sm:$0xff]
        %v278 = vld [vmem:[%s169 + $0x248] sm:$0xff]
        %v279 = vld [vmem:[%s169 + $0x250] sm:$0xff]
        %v280 = vld [vmem:[%s169 + $0x258] sm:$0xff]
        %v281 = vld [vmem:[%s169 + $0x260] sm:$0xff]
        %v282 = vld [vmem:[%s169 + $0x268] sm:$0xff]
        %v283 = vld [vmem:[%s169 + $0x270] sm:$0xff]
        %v284 = vld [vmem:[%s169 + $0x278] sm:$0xff]
        %v285 = vld [vmem:[%s169 + $0x280] sm:$0xff]
        %v286 = vld [vmem:[%s169 + $0x288] sm:$0xff]
        %v287 = vld [vmem:[%s169 + $0x290] sm:$0xff]
        %v288 = vld [vmem:[%s169 + $0x298] sm:$0xff]
        %v289 = vld [vmem:[%s169 + $0x2a0] sm:$0xff]
        %v290 = vld [vmem:[%s169 + $0x2a8] sm:$0xff]
        %v291 = vld [vmem:[%s169 + $0x2b0] sm:$0xff]
        %v292 = vld [vmem:[%s169 + $0x2b8] sm:$0xff]
        %v293 = vld [vmem:[%s169 + $0x2c0] sm:$0xff]
        %v294 = vld [vmem:[%s169 + $0x2c8] sm:$0xff]
        %v295 = vld [vmem:[%s169 + $0x2d0] sm:$0xff]
        %v296 = vld [vmem:[%s169 + $0x2d8] sm:$0xff]
        %v297 = vld [vmem:[%s169 + $0x2e0] sm:$0xff]
        %v298 = vld [vmem:[%s169 + $0x2e8] sm:$0xff]
        %v299 = vld [vmem:[%s169 + $0x2f0] sm:$0xff]
        %v300 = vld [vmem:[%s169 + $0x2f8] sm:$0xff]
        %v301 = vld [vmem:[%s169 + $0x300] sm:$0xff]
        %v302 = vld [vmem:[%s169 + $0x308] sm:$0xff]
        %v303 = vld [vmem:[%s169 + $0x310] sm:$0xff]
        %v304 = vld [vmem:[%s169 + $0x318] sm:$0xff]
        %v305 = vld [vmem:[%s169 + $0x320] sm:$0xff]
        %v306 = vld [vmem:[%s169 + $0x328] sm:$0xff]
        %v307 = vld [vmem:[%s169 + $0x330] sm:$0xff]
        %v308 = vld [vmem:[%s169 + $0x338] sm:$0xff]
        %v309 = vld [vmem:[%s169 + $0x340] sm:$0xff]
        %v310 = vld [vmem:[%s169 + $0x348] sm:$0xff]
        %v311 = vld [vmem:[%s169 + $0x350] sm:$0xff]
        %v312 = vld [vmem:[%s169 + $0x358] sm:$0xff]
        %v313 = vld [vmem:[%s169 + $0x360] sm:$0xff]
        %v314 = vld [vmem:[%s169 + $0x368] sm:$0xff]
        %v315 = vld [vmem:[%s169 + $0x370] sm:$0xff]
        %v316 = vld [vmem:[%s169 + $0x378] sm:$0xff]
        %v317 = vld [vmem:[%s169 + $0x380] sm:$0xff]
        %v318 = vld [vmem:[%s169 + $0x388] sm:$0xff]
        %v319 = vld [vmem:[%s169 + $0x390] sm:$0xff]
        %v320 = vld [vmem:[%s169 + $0x398] sm:$0xff]
        %v321 = vld [vmem:[%s169 + $0x3a0] sm:$0xff]
        %v322 = vld [vmem:[%s169 + $0x3a8] sm:$0xff]
        %v323 = vld [vmem:[%s169 + $0x3b0] sm:$0xff]
        %v324 = vld [vmem:[%s169 + $0x3b8] sm:$0xff]
        %v325 = vld [vmem:[%s169 + $0x3c0] sm:$0xff]
        %v326 = vld [vmem:[%s169 + $0x3c8] sm:$0xff]
        %v327 = vld [vmem:[%s169 + $0x3d0] sm:$0xff]
        %v328 = vld [vmem:[%s169 + $0x3d8] sm:$0xff]
        %v329 = vld [vmem:[%s169 + $0x3e0] sm:$0xff]
        %v330 = vld [vmem:[%s169 + $0x3e8] sm:$0xff]
        %v331 = vld [vmem:[%s169 + $0x3f0] sm:$0xff]
        %v332 = vld [vmem:[%s169 + $0x3f8] sm:$0xff]
        %v333 = vld [vmem:[%s178] sm:$0xff]
        %v334 = vld [vmem:[%s178 + $0x8] sm:$0xff]
        %v335 = vld [vmem:[%s178 + $0x10] sm:$0xff]
        %v336 = vld [vmem:[%s178 + $0x18] sm:$0xff]
        %v337 = vld [vmem:[%s178 + $0x20] sm:$0xff]
        %v338 = vld [vmem:[%s178 + $0x28] sm:$0xff]
        %v339 = vld [vmem:[%s178 + $0x30] sm:$0xff]
        %v340 = vld [vmem:[%s178 + $0x38] sm:$0xff]
        %v341 = vld [vmem:[%s178 + $0x40] sm:$0xff]
        %v342 = vld [vmem:[%s178 + $0x48] sm:$0xff]
        %v343 = vld [vmem:[%s178 + $0x50] sm:$0xff]
        %v344 = vld [vmem:[%s178 + $0x58] sm:$0xff]
        %v345 = vld [vmem:[%s178 + $0x60] sm:$0xff]
        %v346 = vld [vmem:[%s178 + $0x68] sm:$0xff]
        %v347 = vld [vmem:[%s178 + $0x70] sm:$0xff]
        %v348 = vld [vmem:[%s178 + $0x78] sm:$0xff]
        %v349 = vld [vmem:[%s178 + $0x80] sm:$0xff]
        %v350 = vld [vmem:[%s178 + $0x88] sm:$0xff]
        %v351 = vld [vmem:[%s178 + $0x90] sm:$0xff]
        %v352 = vld [vmem:[%s178 + $0x98] sm:$0xff]
        %v353 = vld [vmem:[%s178 + $0xa0] sm:$0xff]
        %v354 = vld [vmem:[%s178 + $0xa8] sm:$0xff]
        %v355 = vld [vmem:[%s178 + $0xb0] sm:$0xff]
        %v356 = vld [vmem:[%s178 + $0xb8] sm:$0xff]
        %v357 = vld [vmem:[%s178 + $0xc0] sm:$0xff]
        %v358 = vld [vmem:[%s178 + $0xc8] sm:$0xff]
        %v359 = vld [vmem:[%s178 + $0xd0] sm:$0xff]
        %v360 = vld [vmem:[%s178 + $0xd8] sm:$0xff]
        %v361 = vld [vmem:[%s178 + $0xe0] sm:$0xff]
        %v362 = vld [vmem:[%s178 + $0xe8] sm:$0xff]
        %v363 = vld [vmem:[%s178 + $0xf0] sm:$0xff]
        %v364 = vld [vmem:[%s178 + $0xf8] sm:$0xff]
        %v365 = vld [vmem:[%s178 + $0x100] sm:$0xff]
        %v366 = vld [vmem:[%s178 + $0x108] sm:$0xff]
        %v367 = vld [vmem:[%s178 + $0x110] sm:$0xff]
        %v368 = vld [vmem:[%s178 + $0x118] sm:$0xff]
        %v369 = vld [vmem:[%s178 + $0x120] sm:$0xff]
        %v370 = vld [vmem:[%s178 + $0x128] sm:$0xff]
        %v371 = vld [vmem:[%s178 + $0x130] sm:$0xff]
        %v372 = vld [vmem:[%s178 + $0x138] sm:$0xff]
        %v373 = vld [vmem:[%s178 + $0x140] sm:$0xff]
        %v374 = vld [vmem:[%s178 + $0x148] sm:$0xff]
        %v375 = vld [vmem:[%s178 + $0x150] sm:$0xff]
        %v376 = vld [vmem:[%s178 + $0x158] sm:$0xff]
        %v377 = vld [vmem:[%s178 + $0x160] sm:$0xff]
        %v378 = vld [vmem:[%s178 + $0x168] sm:$0xff]
        %v379 = vld [vmem:[%s178 + $0x170] sm:$0xff]
        %v380 = vld [vmem:[%s178 + $0x178] sm:$0xff]
        %v381 = vld [vmem:[%s178 + $0x180] sm:$0xff]
        %v382 = vld [vmem:[%s178 + $0x188] sm:$0xff]
        %v383 = vld [vmem:[%s178 + $0x190] sm:$0xff]
        %v384 = vld [vmem:[%s178 + $0x198] sm:$0xff]
        %v385 = vld [vmem:[%s178 + $0x1a0] sm:$0xff]
        %v386 = vld [vmem:[%s178 + $0x1a8] sm:$0xff]
        %v387 = vld [vmem:[%s178 + $0x1b0] sm:$0xff]
        %v388 = vld [vmem:[%s178 + $0x1b8] sm:$0xff]
        %v389 = vld [vmem:[%s178 + $0x1c0] sm:$0xff]
        %v390 = vld [vmem:[%s178 + $0x1c8] sm:$0xff]
        %v391 = vld [vmem:[%s178 + $0x1d0] sm:$0xff]
        %v392 = vld [vmem:[%s178 + $0x1d8] sm:$0xff]
        %v393 = vld [vmem:[%s178 + $0x1e0] sm:$0xff]
        %v394 = vld [vmem:[%s178 + $0x1e8] sm:$0xff]
        %v395 = vld [vmem:[%s178 + $0x1f0] sm:$0xff]
        %v396 = vld [vmem:[%s178 + $0x1f8] sm:$0xff]
        %v397 = vld [vmem:[%s178 + $0x200] sm:$0xff]
        %v398 = vld [vmem:[%s178 + $0x208] sm:$0xff]
        %v399 = vld [vmem:[%s178 + $0x210] sm:$0xff]
        %v400 = vld [vmem:[%s178 + $0x218] sm:$0xff]
        %v401 = vld [vmem:[%s178 + $0x220] sm:$0xff]
        %v402 = vld [vmem:[%s178 + $0x228] sm:$0xff]
        %v403 = vld [vmem:[%s178 + $0x230] sm:$0xff]
        %v404 = vld [vmem:[%s178 + $0x238] sm:$0xff]
        %v405 = vld [vmem:[%s178 + $0x240] sm:$0xff]
        %v406 = vld [vmem:[%s178 + $0x248] sm:$0xff]
        %v407 = vld [vmem:[%s178 + $0x250] sm:$0xff]
        %v408 = vld [vmem:[%s178 + $0x258] sm:$0xff]
        %v409 = vld [vmem:[%s178 + $0x260] sm:$0xff]
        %v410 = vld [vmem:[%s178 + $0x268] sm:$0xff]
        %v411 = vld [vmem:[%s178 + $0x270] sm:$0xff]
        %v412 = vld [vmem:[%s178 + $0x278] sm:$0xff]
        %v413 = vld [vmem:[%s178 + $0x280] sm:$0xff]
        %v414 = vld [vmem:[%s178 + $0x288] sm:$0xff]
        %v415 = vld [vmem:[%s178 + $0x290] sm:$0xff]
        %v416 = vld [vmem:[%s178 + $0x298] sm:$0xff]
        %v417 = vld [vmem:[%s178 + $0x2a0] sm:$0xff]
        %v418 = vld [vmem:[%s178 + $0x2a8] sm:$0xff]
        %v419 = vld [vmem:[%s178 + $0x2b0] sm:$0xff]
        %v420 = vld [vmem:[%s178 + $0x2b8] sm:$0xff]
        %v421 = vld [vmem:[%s178 + $0x2c0] sm:$0xff]
        %v422 = vld [vmem:[%s178 + $0x2c8] sm:$0xff]
        %v423 = vld [vmem:[%s178 + $0x2d0] sm:$0xff]
        %v424 = vld [vmem:[%s178 + $0x2d8] sm:$0xff]
        %v425 = vld [vmem:[%s178 + $0x2e0] sm:$0xff]
        %v426 = vld [vmem:[%s178 + $0x2e8] sm:$0xff]
        %v427 = vld [vmem:[%s178 + $0x2f0] sm:$0xff]
        %v428 = vld [vmem:[%s178 + $0x2f8] sm:$0xff]
        %v429 = vld [vmem:[%s178 + $0x300] sm:$0xff]
        %v430 = vld [vmem:[%s178 + $0x308] sm:$0xff]
        %v431 = vld [vmem:[%s178 + $0x310] sm:$0xff]
        %v432 = vld [vmem:[%s178 + $0x318] sm:$0xff]
        %v433 = vld [vmem:[%s178 + $0x320] sm:$0xff]
        %v434 = vld [vmem:[%s178 + $0x328] sm:$0xff]
        %v435 = vld [vmem:[%s178 + $0x330] sm:$0xff]
        %v436 = vld [vmem:[%s178 + $0x338] sm:$0xff]
        %v437 = vld [vmem:[%s178 + $0x340] sm:$0xff]
        %v438 = vld [vmem:[%s178 + $0x348] sm:$0xff]
        %v439 = vld [vmem:[%s178 + $0x350] sm:$0xff]
        %v440 = vld [vmem:[%s178 + $0x358] sm:$0xff]
        %v441 = vld [vmem:[%s178 + $0x360] sm:$0xff]
        %v442 = vld [vmem:[%s178 + $0x368] sm:$0xff]
        %v443 = vld [vmem:[%s178 + $0x370] sm:$0xff]
        %v444 = vld [vmem:[%s178 + $0x378] sm:$0xff]
        %v445 = vld [vmem:[%s178 + $0x380] sm:$0xff]
        %v446 = vld [vmem:[%s178 + $0x388] sm:$0xff]
        %v447 = vld [vmem:[%s178 + $0x390] sm:$0xff]
        %v448 = vld [vmem:[%s178 + $0x398] sm:$0xff]
        %v449 = vld [vmem:[%s178 + $0x3a0] sm:$0xff]
        %v450 = vld [vmem:[%s178 + $0x3a8] sm:$0xff]
        %v451 = vld [vmem:[%s178 + $0x3b0] sm:$0xff]
        %v452 = vld [vmem:[%s178 + $0x3b8] sm:$0xff]
        %v453 = vld [vmem:[%s178 + $0x3c0] sm:$0xff]
        %v454 = vld [vmem:[%s178 + $0x3c8] sm:$0xff]
        %v455 = vld [vmem:[%s178 + $0x3d0] sm:$0xff]
        %v456 = vld [vmem:[%s178 + $0x3d8] sm:$0xff]
        %v457 = vld [vmem:[%s178 + $0x3e0] sm:$0xff]
        %v458 = vld [vmem:[%s178 + $0x3e8] sm:$0xff]
        %v459 = vld [vmem:[%s178 + $0x3f0] sm:$0xff]
        %v460 = vld [vmem:[%s178 + $0x3f8] sm:$0xff]
        %v461 = vmax.f32 %v205, 0.0
        %v462 = vmax.f32 %v206, 0.0
        %v463 = vmax.f32 %v207, 0.0
        %v464 = vmax.f32 %v208, 0.0
        %v465 = vmax.f32 %v209, 0.0
        %v466 = vmax.f32 %v210, 0.0
        %v467 = vmax.f32 %v211, 0.0
        %v468 = vmax.f32 %v212, 0.0
        %v469 = vmax.f32 %v213, 0.0
        %v470 = vmax.f32 %v214, 0.0
        %v471 = vmax.f32 %v215, 0.0
        %v472 = vmax.f32 %v216, 0.0
        %v473 = vmax.f32 %v217, 0.0
        %v474 = vmax.f32 %v218, 0.0
        %v475 = vmax.f32 %v219, 0.0
        %v476 = vmax.f32 %v220, 0.0
        %v477 = vmax.f32 %v221, 0.0
        %v478 = vmax.f32 %v222, 0.0
        %v479 = vmax.f32 %v223, 0.0
        %v480 = vmax.f32 %v224, 0.0
        %v481 = vmax.f32 %v225, 0.0
        %v482 = vmax.f32 %v226, 0.0
        %v483 = vmax.f32 %v227, 0.0
        %v484 = vmax.f32 %v228, 0.0
        %v485 = vmax.f32 %v229, 0.0
        %v486 = vmax.f32 %v230, 0.0
        %v487 = vmax.f32 %v231, 0.0
        %v488 = vmax.f32 %v232, 0.0
        %v489 = vmax.f32 %v233, 0.0
        %v490 = vmax.f32 %v234, 0.0
        %v491 = vmax.f32 %v235, 0.0
        %v492 = vmax.f32 %v236, 0.0
        %v493 = vmax.f32 %v237, 0.0
        %v494 = vmax.f32 %v238, 0.0
        %v495 = vmax.f32 %v239, 0.0
        %v496 = vmax.f32 %v240, 0.0
        %v497 = vmax.f32 %v241, 0.0
        %v498 = vmax.f32 %v242, 0.0
        %v499 = vmax.f32 %v243, 0.0
        %v500 = vmax.f32 %v244, 0.0
        %v501 = vmax.f32 %v245, 0.0
        %v502 = vmax.f32 %v246, 0.0
        %v503 = vmax.f32 %v247, 0.0
        %v504 = vmax.f32 %v248, 0.0
        %v505 = vmax.f32 %v249, 0.0
        %v506 = vmax.f32 %v250, 0.0
        %v507 = vmax.f32 %v251, 0.0
        %v508 = vmax.f32 %v252, 0.0
        %v509 = vmax.f32 %v253, 0.0
        %v510 = vmax.f32 %v254, 0.0
        %v511 = vmax.f32 %v255, 0.0
        %v512 = vmax.f32 %v256, 0.0
        %v513 = vmax.f32 %v257, 0.0
        %v514 = vmax.f32 %v258, 0.0
        %v515 = vmax.f32 %v259, 0.0
        %v516 = vmax.f32 %v260, 0.0
        %v517 = vmax.f32 %v261, 0.0
        %v518 = vmax.f32 %v262, 0.0
        %v519 = vmax.f32 %v263, 0.0
        %v520 = vmax.f32 %v264, 0.0
        %v521 = vmax.f32 %v265, 0.0
        %v522 = vmax.f32 %v266, 0.0
        %v523 = vmax.f32 %v267, 0.0
        %v524 = vmax.f32 %v268, 0.0
        %v525 = vmax.f32 %v269, 0.0
        %v526 = vmax.f32 %v270, 0.0
        %v527 = vmax.f32 %v271, 0.0
        %v528 = vmax.f32 %v272, 0.0
        %v529 = vmax.f32 %v273, 0.0
        %v530 = vmax.f32 %v274, 0.0
        %v531 = vmax.f32 %v275, 0.0
        %v532 = vmax.f32 %v276, 0.0
        %v533 = vmax.f32 %v277, 0.0
        %v534 = vmax.f32 %v278, 0.0
        %v535 = vmax.f32 %v279, 0.0
        %v536 = vmax.f32 %v280, 0.0
        %v537 = vmax.f32 %v281, 0.0
        %v538 = vmax.f32 %v282, 0.0
        %v539 = vmax.f32 %v283, 0.0
        %v540 = vmax.f32 %v284, 0.0
        %v541 = vmax.f32 %v285, 0.0
        %v542 = vmax.f32 %v286, 0.0
        %v543 = vmax.f32 %v287, 0.0
        %v544 = vmax.f32 %v288, 0.0
        %v545 = vmax.f32 %v289, 0.0
        %v546 = vmax.f32 %v290, 0.0
        %v547 = vmax.f32 %v291, 0.0
        %v548 = vmax.f32 %v292, 0.0
        %v549 = vmax.f32 %v293, 0.0
        %v550 = vmax.f32 %v294, 0.0
        %v551 = vmax.f32 %v295, 0.0
        %v552 = vmax.f32 %v296, 0.0
        %v553 = vmax.f32 %v297, 0.0
        %v554 = vmax.f32 %v298, 0.0
        %v555 = vmax.f32 %v299, 0.0
        %v556 = vmax.f32 %v300, 0.0
        %v557 = vmax.f32 %v301, 0.0
        %v558 = vmax.f32 %v302, 0.0
        %v559 = vmax.f32 %v303, 0.0
        %v560 = vmax.f32 %v304, 0.0
        %v561 = vmax.f32 %v305, 0.0
        %v562 = vmax.f32 %v306, 0.0
        %v563 = vmax.f32 %v307, 0.0
        %v564 = vmax.f32 %v308, 0.0
        %v565 = vmax.f32 %v309, 0.0
        %v566 = vmax.f32 %v310, 0.0
        %v567 = vmax.f32 %v311, 0.0
        %v568 = vmax.f32 %v312, 0.0
        %v569 = vmax.f32 %v313, 0.0
        %v570 = vmax.f32 %v314, 0.0
        %v571 = vmax.f32 %v315, 0.0
        %v572 = vmax.f32 %v316, 0.0
        %v573 = vmax.f32 %v317, 0.0
        %v574 = vmax.f32 %v318, 0.0
        %v575 = vmax.f32 %v319, 0.0
        %v576 = vmax.f32 %v320, 0.0
        %v577 = vmax.f32 %v321, 0.0
        %v578 = vmax.f32 %v322, 0.0
        %v579 = vmax.f32 %v323, 0.0
        %v580 = vmax.f32 %v324, 0.0
        %v581 = vmax.f32 %v325, 0.0
        %v582 = vmax.f32 %v326, 0.0
        %v583 = vmax.f32 %v327, 0.0
        %v584 = vmax.f32 %v328, 0.0
        %v585 = vmax.f32 %v329, 0.0
        %v586 = vmax.f32 %v330, 0.0
        %v587 = vmax.f32 %v331, 0.0
        %v588 = vmax.f32 %v332, 0.0
        %v589 = vmul.f32 %v205, %v333
        %v590 = vmul.f32 %v206, %v334
        %v591 = vmul.f32 %v207, %v335
        %v592 = vmul.f32 %v208, %v336
        %v593 = vmul.f32 %v209, %v337
        %v594 = vmul.f32 %v210, %v338
        %v595 = vmul.f32 %v211, %v339
        %v596 = vmul.f32 %v212, %v340
        %v597 = vmul.f32 %v213, %v341
        %v598 = vmul.f32 %v214, %v342
        %v599 = vmul.f32 %v215, %v343
        %v600 = vmul.f32 %v216, %v344
        %v601 = vmul.f32 %v217, %v345
        %v602 = vmul.f32 %v218, %v346
        %v603 = vmul.f32 %v219, %v347
        %v604 = vmul.f32 %v220, %v348
        %v605 = vmul.f32 %v221, %v349
        %v606 = vmul.f32 %v222, %v350
        %v607 = vmul.f32 %v223, %v351
        %v608 = vmul.f32 %v224, %v352
        %v609 = vmul.f32 %v225, %v353
        %v610 = vmul.f32 %v226, %v354
        %v611 = vmul.f32 %v227, %v355
        %v612 = vmul.f32 %v228, %v356
        %v613 = vmul.f32 %v229, %v357
        %v614 = vmul.f32 %v230, %v358
        %v615 = vmul.f32 %v231, %v359
        %v616 = vmul.f32 %v232, %v360
        %v617 = vmul.f32 %v233, %v361
        %v618 = vmul.f32 %v234, %v362
        %v619 = vmul.f32 %v235, %v363
        %v620 = vmul.f32 %v236, %v364
        %v621 = vmul.f32 %v237, %v365
        %v622 = vmul.f32 %v238, %v366
        %v623 = vmul.f32 %v239, %v367
        %v624 = vmul.f32 %v240, %v368
        %v625 = vmul.f32 %v241, %v369
        %v626 = vmul.f32 %v242, %v370
        %v627 = vmul.f32 %v243, %v371
        %v628 = vmul.f32 %v244, %v372
        %v629 = vmul.f32 %v245, %v373
        %v630 = vmul.f32 %v246, %v374
        %v631 = vmul.f32 %v247, %v375
        %v632 = vmul.f32 %v248, %v376
        %v633 = vmul.f32 %v249, %v377
        %v634 = vmul.f32 %v250, %v378
        %v635 = vmul.f32 %v251, %v379
        %v636 = vmul.f32 %v252, %v380
        %v637 = vmul.f32 %v253, %v381
        %v638 = vmul.f32 %v254, %v382
        %v639 = vmul.f32 %v255, %v383
        %v640 = vmul.f32 %v256, %v384
        %v641 = vmul.f32 %v257, %v385
        %v642 = vmul.f32 %v258, %v386
        %v643 = vmul.f32 %v259, %v387
        %v644 = vmul.f32 %v260, %v388
        %v645 = vmul.f32 %v261, %v389
        %v646 = vmul.f32 %v262, %v390
        %v647 = vmul.f32 %v263, %v391
        %v648 = vmul.f32 %v264, %v392
        %v649 = vmul.f32 %v265, %v393
        %v650 = vmul.f32 %v266, %v394
        %v651 = vmul.f32 %v267, %v395
        %v652 = vmul.f32 %v268, %v396
        %v653 = vmul.f32 %v269, %v397
        %v654 = vmul.f32 %v270, %v398
        %v655 = vmul.f32 %v271, %v399
        %v656 = vmul.f32 %v272, %v400
        %v657 = vmul.f32 %v273, %v401
        %v658 = vmul.f32 %v274, %v402
        %v659 = vmul.f32 %v275, %v403
        %v660 = vmul.f32 %v276, %v404
        %v661 = vmul.f32 %v277, %v405
        %v662 = vmul.f32 %v278, %v406
        %v663 = vmul.f32 %v279, %v407
        %v664 = vmul.f32 %v280, %v408
        %v665 = vmul.f32 %v281, %v409
        %v666 = vmul.f32 %v282, %v410
        %v667 = vmul.f32 %v283, %v411
        %v668 = vmul.f32 %v284, %v412
        %v669 = vmul.f32 %v285, %v413
        %v670 = vmul.f32 %v286, %v414
        %v671 = vmul.f32 %v287, %v415
        %v672 = vmul.f32 %v288, %v416
        %v673 = vmul.f32 %v289, %v417
        %v674 = vmul.f32 %v290, %v418
        %v675 = vmul.f32 %v291, %v419
        %v676 = vmul.f32 %v292, %v420
        %v677 = vmul.f32 %v293, %v421
        %v678 = vmul.f32 %v294, %v422
        %v679 = vmul.f32 %v295, %v423
        %v680 = vmul.f32 %v296, %v424
        %v681 = vmul.f32 %v297, %v425
        %v682 = vmul.f32 %v298, %v426
        %v683 = vmul.f32 %v299, %v427
        %v684 = vmul.f32 %v300, %v428
        %v685 = vmul.f32 %v301, %v429
        %v686 = vmul.f32 %v302, %v430
        %v687 = vmul.f32 %v303, %v431
        %v688 = vmul.f32 %v304, %v432
        %v689 = vmul.f32 %v305, %v433
        %v690 = vmul.f32 %v306, %v434
        %v691 = vmul.f32 %v307, %v435
        %v692 = vmul.f32 %v308, %v436
        %v693 = vmul.f32 %v309, %v437
        %v694 = vmul.f32 %v310, %v438
        %v695 = vmul.f32 %v311, %v439
        %v696 = vmul.f32 %v312, %v440
        %v697 = vmul.f32 %v313, %v441
        %v698 = vmul.f32 %v314, %v442
        %v699 = vmul.f32 %v315, %v443
        %v700 = vmul.f32 %v316, %v444
        %v701 = vmul.f32 %v317, %v445
        %v702 = vmul.f32 %v318, %v446
        %v703 = vmul.f32 %v319, %v447
        %v704 = vmul.f32 %v320, %v448
        %v705 = vmul.f32 %v321, %v449
        %v706 = vmul.f32 %v322, %v450
        %v707 = vmul.f32 %v323, %v451
        %v708 = vmul.f32 %v324, %v452
        %v709 = vmul.f32 %v325, %v453
        %v710 = vmul.f32 %v326, %v454
        %v711 = vmul.f32 %v327, %v455
        %v712 = vmul.f32 %v328, %v456
        %v713 = vmul.f32 %v329, %v457
        %v714 = vmul.f32 %v330, %v458
        %v715 = vmul.f32 %v331, %v459
        %v716 = vmul.f32 %v332, %v460
        %v717 = vsub.f32 %v461, %v589
        %v718 = vsub.f32 %v462, %v590
        %v719 = vsub.f32 %v463, %v591
        %v720 = vsub.f32 %v464, %v592
        %v721 = vsub.f32 %v465, %v593
        %v722 = vsub.f32 %v466, %v594
        %v723 = vsub.f32 %v467, %v595
        %v724 = vsub.f32 %v468, %v596
        %v725 = vsub.f32 %v469, %v597
        %v726 = vsub.f32 %v470, %v598
        %v727 = vsub.f32 %v471, %v599
        %v728 = vsub.f32 %v472, %v600
        %v729 = vsub.f32 %v473, %v601
        %v730 = vsub.f32 %v474, %v602
        %v731 = vsub.f32 %v475, %v603
        %v732 = vsub.f32 %v476, %v604
        %v733 = vsub.f32 %v477, %v605
        %v734 = vsub.f32 %v478, %v606
        %v735 = vsub.f32 %v479, %v607
        %v736 = vsub.f32 %v480, %v608
        %v737 = vsub.f32 %v481, %v609
        %v738 = vsub.f32 %v482, %v610
        %v739 = vsub.f32 %v483, %v611
        %v740 = vsub.f32 %v484, %v612
        %v741 = vsub.f32 %v485, %v613
        %v742 = vsub.f32 %v486, %v614
        %v743 = vsub.f32 %v487, %v615
        %v744 = vsub.f32 %v488, %v616
        %v745 = vsub.f32 %v489, %v617
        %v746 = vsub.f32 %v490, %v618
        %v747 = vsub.f32 %v491, %v619
        %v748 = vsub.f32 %v492, %v620
        %v749 = vsub.f32 %v493, %v621
        %v750 = vsub.f32 %v494, %v622
        %v751 = vsub.f32 %v495, %v623
        %v752 = vsub.f32 %v496, %v624
        %v753 = vsub.f32 %v497, %v625
        %v754 = vsub.f32 %v498, %v626
        %v755 = vsub.f32 %v499, %v627
        %v756 = vsub.f32 %v500, %v628
        %v757 = vsub.f32 %v501, %v629
        %v758 = vsub.f32 %v502, %v630
        %v759 = vsub.f32 %v503, %v631
        %v760 = vsub.f32 %v504, %v632
        %v761 = vsub.f32 %v505, %v633
        %v762 = vsub.f32 %v506, %v634
        %v763 = vsub.f32 %v507, %v635
        %v764 = vsub.f32 %v508, %v636
        %v765 = vsub.f32 %v509, %v637
        %v766 = vsub.f32 %v510, %v638
        %v767 = vsub.f32 %v511, %v639
        %v768 = vsub.f32 %v512, %v640
        %v769 = vsub.f32 %v513, %v641
        %v770 = vsub.f32 %v514, %v642
        %v771 = vsub.f32 %v515, %v643
        %v772 = vsub.f32 %v516, %v644
        %v773 = vsub.f32 %v517, %v645
        %v774 = vsub.f32 %v518, %v646
        %v775 = vsub.f32 %v519, %v647
        %v776 = vsub.f32 %v520, %v648
        %v777 = vsub.f32 %v521, %v649
        %v778 = vsub.f32 %v522, %v650
        %v779 = vsub.f32 %v523, %v651
        %v780 = vsub.f32 %v524, %v652
        %v781 = vsub.f32 %v525, %v653
        %v782 = vsub.f32 %v526, %v654
        %v783 = vsub.f32 %v527, %v655
        %v784 = vsub.f32 %v528, %v656
        %v785 = vsub.f32 %v529, %v657
        %v786 = vsub.f32 %v530, %v658
        %v787 = vsub.f32 %v531, %v659
        %v788 = vsub.f32 %v532, %v660
        %v789 = vsub.f32 %v533, %v661
        %v790 = vsub.f32 %v534, %v662
        %v791 = vsub.f32 %v535, %v663
        %v792 = vsub.f32 %v536, %v664
        %v793 = vsub.f32 %v537, %v665
        %v794 = vsub.f32 %v538, %v666
        %v795 = vsub.f32 %v539, %v667
        %v796 = vsub.f32 %v540, %v668
        %v797 = vsub.f32 %v541, %v669
        %v798 = vsub.f32 %v542, %v670
        %v799 = vsub.f32 %v543, %v671
        %v800 = vsub.f32 %v544, %v672
        %v801 = vsub.f32 %v545, %v673
        %v802 = vsub.f32 %v546, %v674
        %v803 = vsub.f32 %v547, %v675
        %v804 = vsub.f32 %v548, %v676
        %v805 = vsub.f32 %v549, %v677
        %v806 = vsub.f32 %v550, %v678
        %v807 = vsub.f32 %v551, %v679
        %v808 = vsub.f32 %v552, %v680
        %v809 = vsub.f32 %v553, %v681
        %v810 = vsub.f32 %v554, %v682
        %v811 = vsub.f32 %v555, %v683
        %v812 = vsub.f32 %v556, %v684
        %v813 = vsub.f32 %v557, %v685
        %v814 = vsub.f32 %v558, %v686
        %v815 = vsub.f32 %v559, %v687
        %v816 = vsub.f32 %v560, %v688
        %v817 = vsub.f32 %v561, %v689
        %v818 = vsub.f32 %v562, %v690
        %v819 = vsub.f32 %v563, %v691
        %v820 = vsub.f32 %v564, %v692
        %v821 = vsub.f32 %v565, %v693
        %v822 = vsub.f32 %v566, %v694
        %v823 = vsub.f32 %v567, %v695
        %v824 = vsub.f32 %v568, %v696
        %v825 = vsub.f32 %v569, %v697
        %v826 = vsub.f32 %v570, %v698
        %v827 = vsub.f32 %v571, %v699
        %v828 = vsub.f32 %v572, %v700
        %v829 = vsub.f32 %v573, %v701
        %v830 = vsub.f32 %v574, %v702
        %v831 = vsub.f32 %v575, %v703
        %v832 = vsub.f32 %v576, %v704
        %v833 = vsub.f32 %v577, %v705
        %v834 = vsub.f32 %v578, %v706
        %v835 = vsub.f32 %v579, %v707
        %v836 = vsub.f32 %v580, %v708
        %v837 = vsub.f32 %v581, %v709
        %v838 = vsub.f32 %v582, %v710
        %v839 = vsub.f32 %v583, %v711
        %v840 = vsub.f32 %v584, %v712
        %v841 = vsub.f32 %v585, %v713
        %v842 = vsub.f32 %v586, %v714
        %v843 = vsub.f32 %v587, %v715
        %v844 = vsub.f32 %v588, %v716
        %v845 = vand.u32 2147483647, %v205
        %v846 = vand.u32 2147483647, %v206
        %v847 = vand.u32 2147483647, %v207
        %v848 = vand.u32 2147483647, %v208
        %v849 = vand.u32 2147483647, %v209
        %v850 = vand.u32 2147483647, %v210
        %v851 = vand.u32 2147483647, %v211
        %v852 = vand.u32 2147483647, %v212
        %v853 = vand.u32 2147483647, %v213
        %v854 = vand.u32 2147483647, %v214
        %v855 = vand.u32 2147483647, %v215
        %v856 = vand.u32 2147483647, %v216
        %v857 = vand.u32 2147483647, %v217
        %v858 = vand.u32 2147483647, %v218
        %v859 = vand.u32 2147483647, %v219
        %v860 = vand.u32 2147483647, %v220
        %v861 = vand.u32 2147483647, %v221
        %v862 = vand.u32 2147483647, %v222
        %v863 = vand.u32 2147483647, %v223
        %v864 = vand.u32 2147483647, %v224
        %v865 = vand.u32 2147483647, %v225
        %v866 = vand.u32 2147483647, %v226
        %v867 = vand.u32 2147483647, %v227
        %v868 = vand.u32 2147483647, %v228
        %v869 = vand.u32 2147483647, %v229
        %v870 = vand.u32 2147483647, %v230
        %v871 = vand.u32 2147483647, %v231
        %v872 = vand.u32 2147483647, %v232
        %v873 = vand.u32 2147483647, %v233
        %v874 = vand.u32 2147483647, %v234
        %v875 = vand.u32 2147483647, %v235
        %v876 = vand.u32 2147483647, %v236
        %v877 = vand.u32 2147483647, %v237
        %v878 = vand.u32 2147483647, %v238
        %v879 = vand.u32 2147483647, %v239
        %v880 = vand.u32 2147483647, %v240
        %v881 = vand.u32 2147483647, %v241
        %v882 = vand.u32 2147483647, %v242
        %v883 = vand.u32 2147483647, %v243
        %v884 = vand.u32 2147483647, %v244
        %v885 = vand.u32 2147483647, %v245
        %v886 = vand.u32 2147483647, %v246
        %v887 = vand.u32 2147483647, %v247
        %v888 = vand.u32 2147483647, %v248
        %v889 = vand.u32 2147483647, %v249
        %v890 = vand.u32 2147483647, %v250
        %v891 = vand.u32 2147483647, %v251
        %v892 = vand.u32 2147483647, %v252
        %v893 = vand.u32 2147483647, %v253
        %v894 = vand.u32 2147483647, %v254
        %v895 = vand.u32 2147483647, %v255
        %v896 = vand.u32 2147483647, %v256
        %v897 = vand.u32 2147483647, %v257
        %v898 = vand.u32 2147483647, %v258
        %v899 = vand.u32 2147483647, %v259
        %v900 = vand.u32 2147483647, %v260
        %v901 = vand.u32 2147483647, %v261
        %v902 = vand.u32 2147483647, %v262
        %v903 = vand.u32 2147483647, %v263
        %v904 = vand.u32 2147483647, %v264
        %v905 = vand.u32 2147483647, %v265
        %v906 = vand.u32 2147483647, %v266
        %v907 = vand.u32 2147483647, %v267
        %v908 = vand.u32 2147483647, %v268
        %v909 = vand.u32 2147483647, %v269
        %v910 = vand.u32 2147483647, %v270
        %v911 = vand.u32 2147483647, %v271
        %v912 = vand.u32 2147483647, %v272
        %v913 = vand.u32 2147483647, %v273
        %v914 = vand.u32 2147483647, %v274
        %v915 = vand.u32 2147483647, %v275
        %v916 = vand.u32 2147483647, %v276
        %v917 = vand.u32 2147483647, %v277
        %v918 = vand.u32 2147483647, %v278
        %v919 = vand.u32 2147483647, %v279
        %v920 = vand.u32 2147483647, %v280
        %v921 = vand.u32 2147483647, %v281
        %v922 = vand.u32 2147483647, %v282
        %v923 = vand.u32 2147483647, %v283
        %v924 = vand.u32 2147483647, %v284
        %v925 = vand.u32 2147483647, %v285
        %v926 = vand.u32 2147483647, %v286
        %v927 = vand.u32 2147483647, %v287
        %v928 = vand.u32 2147483647, %v288
        %v929 = vand.u32 2147483647, %v289
        %v930 = vand.u32 2147483647, %v290
        %v931 = vand.u32 2147483647, %v291
        %v932 = vand.u32 2147483647, %v292
        %v933 = vand.u32 2147483647, %v293
        %v934 = vand.u32 2147483647, %v294
        %v935 = vand.u32 2147483647, %v295
        %v936 = vand.u32 2147483647, %v296
        %v937 = vand.u32 2147483647, %v297
        %v938 = vand.u32 2147483647, %v298
        %v939 = vand.u32 2147483647, %v299
        %v940 = vand.u32 2147483647, %v300
        %v941 = vand.u32 2147483647, %v301
        %v942 = vand.u32 2147483647, %v302
        %v943 = vand.u32 2147483647, %v303
        %v944 = vand.u32 2147483647, %v304
        %v945 = vand.u32 2147483647, %v305
        %v946 = vand.u32 2147483647, %v306
        %v947 = vand.u32 2147483647, %v307
        %v948 = vand.u32 2147483647, %v308
        %v949 = vand.u32 2147483647, %v309
        %v950 = vand.u32 2147483647, %v310
        %v951 = vand.u32 2147483647, %v311
        %v952 = vand.u32 2147483647, %v312
        %v953 = vand.u32 2147483647, %v313
        %v954 = vand.u32 2147483647, %v314
        %v955 = vand.u32 2147483647, %v315
        %v956 = vand.u32 2147483647, %v316
        %v957 = vand.u32 2147483647, %v317
        %v958 = vand.u32 2147483647, %v318
        %v959 = vand.u32 2147483647, %v319
        %v960 = vand.u32 2147483647, %v320
        %v961 = vand.u32 2147483647, %v321
        %v962 = vand.u32 2147483647, %v322
        %v963 = vand.u32 2147483647, %v323
        %v964 = vand.u32 2147483647, %v324
        %v965 = vand.u32 2147483647, %v325
        %v966 = vand.u32 2147483647, %v326
        %v967 = vand.u32 2147483647, %v327
        %v968 = vand.u32 2147483647, %v328
        %v969 = vand.u32 2147483647, %v329
        %v970 = vand.u32 2147483647, %v330
        %v971 = vand.u32 2147483647, %v331
        %v972 = vand.u32 2147483647, %v332
        %v973 = vsub.f32 0.0, %v845
        %v974 = vsub.f32 0.0, %v846
        %v975 = vsub.f32 0.0, %v847
        %v976 = vsub.f32 0.0, %v848
        %v977 = vsub.f32 0.0, %v849
        %v978 = vsub.f32 0.0, %v850
        %v979 = vsub.f32 0.0, %v851
        %v980 = vsub.f32 0.0, %v852
        %v981 = vsub.f32 0.0, %v853
        %v982 = vsub.f32 0.0, %v854
        %v983 = vsub.f32 0.0, %v855
        %v984 = vsub.f32 0.0, %v856
        %v985 = vsub.f32 0.0, %v857
        %v986 = vsub.f32 0.0, %v858
        %v987 = vsub.f32 0.0, %v859
        %v988 = vsub.f32 0.0, %v860
        %v989 = vsub.f32 0.0, %v861
        %v990 = vsub.f32 0.0, %v862
        %v991 = vsub.f32 0.0, %v863
        %v992 = vsub.f32 0.0, %v864
        %v993 = vsub.f32 0.0, %v865
        %v994 = vsub.f32 0.0, %v866
        %v995 = vsub.f32 0.0, %v867
        %v996 = vsub.f32 0.0, %v868
        %v997 = vsub.f32 0.0, %v869
        %v998 = vsub.f32 0.0, %v870
        %v999 = vsub.f32 0.0, %v871
        %v1000 = vsub.f32 0.0, %v872
        %v1001 = vsub.f32 0.0, %v873
        %v1002 = vsub.f32 0.0, %v874
        %v1003 = vsub.f32 0.0, %v875
        %v1004 = vsub.f32 0.0, %v876
        %v1005 = vsub.f32 0.0, %v877
        %v1006 = vsub.f32 0.0, %v878
        %v1007 = vsub.f32 0.0, %v879
        %v1008 = vsub.f32 0.0, %v880
        %v1009 = vsub.f32 0.0, %v881
        %v1010 = vsub.f32 0.0, %v882
        %v1011 = vsub.f32 0.0, %v883
        %v1012 = vsub.f32 0.0, %v884
        %v1013 = vsub.f32 0.0, %v885
        %v1014 = vsub.f32 0.0, %v886
        %v1015 = vsub.f32 0.0, %v887
        %v1016 = vsub.f32 0.0, %v888
        %v1017 = vsub.f32 0.0, %v889
        %v1018 = vsub.f32 0.0, %v890
        %v1019 = vsub.f32 0.0, %v891
        %v1020 = vsub.f32 0.0, %v892
        %v1021 = vsub.f32 0.0, %v893
        %v1022 = vsub.f32 0.0, %v894
        %v1023 = vsub.f32 0.0, %v895
        %v1024 = vsub.f32 0.0, %v896
        %v1025 = vsub.f32 0.0, %v897
        %v1026 = vsub.f32 0.0, %v898
        %v1027 = vsub.f32 0.0, %v899
        %v1028 = vsub.f32 0.0, %v900
        %v1029 = vsub.f32 0.0, %v901
        %v1030 = vsub.f32 0.0, %v902
        %v1031 = vsub.f32 0.0, %v903
        %v1032 = vsub.f32 0.0, %v904
        %v1033 = vsub.f32 0.0, %v905
        %v1034 = vsub.f32 0.0, %v906
        %v1035 = vsub.f32 0.0, %v907
        %v1036 = vsub.f32 0.0, %v908
        %v1037 = vsub.f32 0.0, %v909
        %v1038 = vsub.f32 0.0, %v910
        %v1039 = vsub.f32 0.0, %v911
        %v1040 = vsub.f32 0.0, %v912
        %v1041 = vsub.f32 0.0, %v913
        %v1042 = vsub.f32 0.0, %v914
        %v1043 = vsub.f32 0.0, %v915
        %v1044 = vsub.f32 0.0, %v916
        %v1045 = vsub.f32 0.0, %v917
        %v1046 = vsub.f32 0.0, %v918
        %v1047 = vsub.f32 0.0, %v919
        %v1048 = vsub.f32 0.0, %v920
        %v1049 = vsub.f32 0.0, %v921
        %v1050 = vsub.f32 0.0, %v922
        %v1051 = vsub.f32 0.0, %v923
        %v1052 = vsub.f32 0.0, %v924
        %v1053 = vsub.f32 0.0, %v925
        %v1054 = vsub.f32 0.0, %v926
        %v1055 = vsub.f32 0.0, %v927
        %v1056 = vsub.f32 0.0, %v928
        %v1057 = vsub.f32 0.0, %v929
        %v1058 = vsub.f32 0.0, %v930
        %v1059 = vsub.f32 0.0, %v931
        %v1060 = vsub.f32 0.0, %v932
        %v1061 = vsub.f32 0.0, %v933
        %v1062 = vsub.f32 0.0, %v934
        %v1063 = vsub.f32 0.0, %v935
        %v1064 = vsub.f32 0.0, %v936
        %v1065 = vsub.f32 0.0, %v937
        %v1066 = vsub.f32 0.0, %v938
        %v1067 = vsub.f32 0.0, %v939
        %v1068 = vsub.f32 0.0, %v940
        %v1069 = vsub.f32 0.0, %v941
        %v1070 = vsub.f32 0.0, %v942
        %v1071 = vsub.f32 0.0, %v943
        %v1072 = vsub.f32 0.0, %v944
        %v1073 = vsub.f32 0.0, %v945
        %v1074 = vsub.f32 0.0, %v946
        %v1075 = vsub.f32 0.0, %v947
        %v1076 = vsub.f32 0.0, %v948
        %v1077 = vsub.f32 0.0, %v949
        %v1078 = vsub.f32 0.0, %v950
        %v1079 = vsub.f32 0.0, %v951
        %v1080 = vsub.f32 0.0, %v952
        %v1081 = vsub.f32 0.0, %v953
        %v1082 = vsub.f32 0.0, %v954
        %v1083 = vsub.f32 0.0, %v955
        %v1084 = vsub.f32 0.0, %v956
        %v1085 = vsub.f32 0.0, %v957
        %v1086 = vsub.f32 0.0, %v958
        %v1087 = vsub.f32 0.0, %v959
        %v1088 = vsub.f32 0.0, %v960
        %v1089 = vsub.f32 0.0, %v961
        %v1090 = vsub.f32 0.0, %v962
        %v1091 = vsub.f32 0.0, %v963
        %v1092 = vsub.f32 0.0, %v964
        %v1093 = vsub.f32 0.0, %v965
        %v1094 = vsub.f32 0.0, %v966
        %v1095 = vsub.f32 0.0, %v967
        %v1096 = vsub.f32 0.0, %v968
        %v1097 = vsub.f32 0.0, %v969
        %v1098 = vsub.f32 0.0, %v970
        %v1099 = vsub.f32 0.0, %v971
        %v1100 = vsub.f32 0.0, %v972
        %v1101 = vmul.f32 %v973, 1.442695
        %v1102 = vpow.pop %v1101
        %v1103 = vmul.f32 %v974, 1.442695
        %v1104 = vpow.pop %v1103
        %v1105 = vmul.f32 %v975, 1.442695
        %v1106 = vpow.pop %v1105
        %v1107 = vmul.f32 %v976, 1.442695
        %v1108 = vpow.pop %v1107
        %v1109 = vmul.f32 %v977, 1.442695
        %v1110 = vpow.pop %v1109
        %v1111 = vmul.f32 %v978, 1.442695
        %v1112 = vpow.pop %v1111
        %v1113 = vmul.f32 %v979, 1.442695
        %v1114 = vpow.pop %v1113
        %v1115 = vmul.f32 %v980, 1.442695
        %v1116 = vpow.pop %v1115
        %v1117 = vmul.f32 %v981, 1.442695
        %v1118 = vpow.pop %v1117
        %v1119 = vmul.f32 %v982, 1.442695
        %v1120 = vpow.pop %v1119
        %v1121 = vmul.f32 %v983, 1.442695
        %v1122 = vpow.pop %v1121
        %v1123 = vmul.f32 %v984, 1.442695
        %v1124 = vpow.pop %v1123
        %v1125 = vmul.f32 %v985, 1.442695
        %v1126 = vpow.pop %v1125
        %v1127 = vmul.f32 %v986, 1.442695
        %v1128 = vpow.pop %v1127
        %v1129 = vmul.f32 %v987, 1.442695
        %v1130 = vpow.pop %v1129
        %v1131 = vmul.f32 %v988, 1.442695
        %v1132 = vpow.pop %v1131
        %v1133 = vmul.f32 %v989, 1.442695
        %v1134 = vpow.pop %v1133
        %v1135 = vmul.f32 %v990, 1.442695
        %v1136 = vpow.pop %v1135
        %v1137 = vmul.f32 %v991, 1.442695
        %v1138 = vpow.pop %v1137
        %v1139 = vmul.f32 %v992, 1.442695
        %v1140 = vpow.pop %v1139
        %v1141 = vmul.f32 %v993, 1.442695
        %v1142 = vpow.pop %v1141
        %v1143 = vmul.f32 %v994, 1.442695
        %v1144 = vpow.pop %v1143
        %v1145 = vmul.f32 %v995, 1.442695
        %v1146 = vpow.pop %v1145
        %v1147 = vmul.f32 %v996, 1.442695
        %v1148 = vpow.pop %v1147
        %v1149 = vmul.f32 %v997, 1.442695
        %v1150 = vpow.pop %v1149
        %v1151 = vmul.f32 %v998, 1.442695
        %v1152 = vpow.pop %v1151
        %v1153 = vmul.f32 %v999, 1.442695
        %v1154 = vpow.pop %v1153
        %v1155 = vmul.f32 %v1000, 1.442695
        %v1156 = vpow.pop %v1155
        %v1157 = vmul.f32 %v1001, 1.442695
        %v1158 = vpow.pop %v1157
        %v1159 = vmul.f32 %v1002, 1.442695
        %v1160 = vpow.pop %v1159
        %v1161 = vmul.f32 %v1003, 1.442695
        %v1162 = vpow.pop %v1161
        %v1163 = vmul.f32 %v1004, 1.442695
        %v1164 = vpow.pop %v1163
        %v1165 = vmul.f32 %v1005, 1.442695
        %v1166 = vpow.pop %v1165
        %v1167 = vmul.f32 %v1006, 1.442695
        %v1168 = vpow.pop %v1167
        %v1169 = vmul.f32 %v1007, 1.442695
        %v1170 = vpow.pop %v1169
        %v1171 = vmul.f32 %v1008, 1.442695
        %v1172 = vpow.pop %v1171
        %v1173 = vmul.f32 %v1009, 1.442695
        %v1174 = vpow.pop %v1173
        %v1175 = vmul.f32 %v1010, 1.442695
        %v1176 = vpow.pop %v1175
        %v1177 = vmul.f32 %v1011, 1.442695
        %v1178 = vpow.pop %v1177
        %v1179 = vmul.f32 %v1012, 1.442695
        %v1180 = vpow.pop %v1179
        %v1181 = vmul.f32 %v1013, 1.442695
        %v1182 = vpow.pop %v1181
        %v1183 = vmul.f32 %v1014, 1.442695
        %v1184 = vpow.pop %v1183
        %v1185 = vmul.f32 %v1015, 1.442695
        %v1186 = vpow.pop %v1185
        %v1187 = vmul.f32 %v1016, 1.442695
        %v1188 = vpow.pop %v1187
        %v1189 = vmul.f32 %v1017, 1.442695
        %v1190 = vpow.pop %v1189
        %v1191 = vmul.f32 %v1018, 1.442695
        %v1192 = vpow.pop %v1191
        %v1193 = vmul.f32 %v1019, 1.442695
        %v1194 = vpow.pop %v1193
        %v1195 = vmul.f32 %v1020, 1.442695
        %v1196 = vpow.pop %v1195
        %v1197 = vmul.f32 %v1021, 1.442695
        %v1198 = vpow.pop %v1197
        %v1199 = vmul.f32 %v1022, 1.442695
        %v1200 = vpow.pop %v1199
        %v1201 = vmul.f32 %v1023, 1.442695
        %v1202 = vpow.pop %v1201
        %v1203 = vmul.f32 %v1024, 1.442695
        %v1204 = vpow.pop %v1203
        %v1205 = vmul.f32 %v1025, 1.442695
        %v1206 = vpow.pop %v1205
        %v1207 = vmul.f32 %v1026, 1.442695
        %v1208 = vpow.pop %v1207
        %v1209 = vmul.f32 %v1027, 1.442695
        %v1210 = vpow.pop %v1209
        %v1211 = vmul.f32 %v1028, 1.442695
        %v1212 = vpow.pop %v1211
        %v1213 = vmul.f32 %v1029, 1.442695
        %v1214 = vpow.pop %v1213
        %v1215 = vmul.f32 %v1030, 1.442695
        %v1216 = vpow.pop %v1215
        %v1217 = vmul.f32 %v1031, 1.442695
        %v1218 = vpow.pop %v1217
        %v1219 = vmul.f32 %v1032, 1.442695
        %v1220 = vpow.pop %v1219
        %v1221 = vmul.f32 %v1033, 1.442695
        %v1222 = vpow.pop %v1221
        %v1223 = vmul.f32 %v1034, 1.442695
        %v1224 = vpow.pop %v1223
        %v1225 = vmul.f32 %v1035, 1.442695
        %v1226 = vpow.pop %v1225
        %v1227 = vmul.f32 %v1036, 1.442695
        %v1228 = vpow.pop %v1227
        %v1229 = vmul.f32 %v1037, 1.442695
        %v1230 = vpow.pop %v1229
        %v1231 = vmul.f32 %v1038, 1.442695
        %v1232 = vpow.pop %v1231
        %v1233 = vmul.f32 %v1039, 1.442695
        %v1234 = vpow.pop %v1233
        %v1235 = vmul.f32 %v1040, 1.442695
        %v1236 = vpow.pop %v1235
        %v1237 = vmul.f32 %v1041, 1.442695
        %v1238 = vpow.pop %v1237
        %v1239 = vmul.f32 %v1042, 1.442695
        %v1240 = vpow.pop %v1239
        %v1241 = vmul.f32 %v1043, 1.442695
        %v1242 = vpow.pop %v1241
        %v1243 = vmul.f32 %v1044, 1.442695
        %v1244 = vpow.pop %v1243
        %v1245 = vmul.f32 %v1045, 1.442695
        %v1246 = vpow.pop %v1245
        %v1247 = vmul.f32 %v1046, 1.442695
        %v1248 = vpow.pop %v1247
        %v1249 = vmul.f32 %v1047, 1.442695
        %v1250 = vpow.pop %v1249
        %v1251 = vmul.f32 %v1048, 1.442695
        %v1252 = vpow.pop %v1251
        %v1253 = vmul.f32 %v1049, 1.442695
        %v1254 = vpow.pop %v1253
        %v1255 = vmul.f32 %v1050, 1.442695
        %v1256 = vpow.pop %v1255
        %v1257 = vmul.f32 %v1051, 1.442695
        %v1258 = vpow.pop %v1257
        %v1259 = vmul.f32 %v1052, 1.442695
        %v1260 = vpow.pop %v1259
        %v1261 = vmul.f32 %v1053, 1.442695
        %v1262 = vpow.pop %v1261
        %v1263 = vmul.f32 %v1054, 1.442695
        %v1264 = vpow.pop %v1263
        %v1265 = vmul.f32 %v1055, 1.442695
        %v1266 = vpow.pop %v1265
        %v1267 = vmul.f32 %v1056, 1.442695
        %v1268 = vpow.pop %v1267
        %v1269 = vmul.f32 %v1057, 1.442695
        %v1270 = vpow.pop %v1269
        %v1271 = vmul.f32 %v1058, 1.442695
        %v1272 = vpow.pop %v1271
        %v1273 = vmul.f32 %v1059, 1.442695
        %v1274 = vpow.pop %v1273
        %v1275 = vmul.f32 %v1060, 1.442695
        %v1276 = vpow.pop %v1275
        %v1277 = vmul.f32 %v1061, 1.442695
        %v1278 = vpow.pop %v1277
        %v1279 = vmul.f32 %v1062, 1.442695
        %v1280 = vpow.pop %v1279
        %v1281 = vmul.f32 %v1063, 1.442695
        %v1282 = vpow.pop %v1281
        %v1283 = vmul.f32 %v1064, 1.442695
        %v1284 = vpow.pop %v1283
        %v1285 = vmul.f32 %v1065, 1.442695
        %v1286 = vpow.pop %v1285
        %v1287 = vmul.f32 %v1066, 1.442695
        %v1288 = vpow.pop %v1287
        %v1289 = vmul.f32 %v1067, 1.442695
        %v1290 = vpow.pop %v1289
        %v1291 = vmul.f32 %v1068, 1.442695
        %v1292 = vpow.pop %v1291
        %v1293 = vmul.f32 %v1069, 1.442695
        %v1294 = vpow.pop %v1293
        %v1295 = vmul.f32 %v1070, 1.442695
        %v1296 = vpow.pop %v1295
        %v1297 = vmul.f32 %v1071, 1.442695
        %v1298 = vpow.pop %v1297
        %v1299 = vmul.f32 %v1072, 1.442695
        %v1300 = vpow.pop %v1299
        %v1301 = vmul.f32 %v1073, 1.442695
        %v1302 = vpow.pop %v1301
        %v1303 = vmul.f32 %v1074, 1.442695
        %v1304 = vpow.pop %v1303
        %v1305 = vmul.f32 %v1075, 1.442695
        %v1306 = vpow.pop %v1305
        %v1307 = vmul.f32 %v1076, 1.442695
        %v1308 = vpow.pop %v1307
        %v1309 = vmul.f32 %v1077, 1.442695
        %v1310 = vpow.pop %v1309
        %v1311 = vmul.f32 %v1078, 1.442695
        %v1312 = vpow.pop %v1311
        %v1313 = vmul.f32 %v1079, 1.442695
        %v1314 = vpow.pop %v1313
        %v1315 = vmul.f32 %v1080, 1.442695
        %v1316 = vpow.pop %v1315
        %v1317 = vmul.f32 %v1081, 1.442695
        %v1318 = vpow.pop %v1317
        %v1319 = vmul.f32 %v1082, 1.442695
        %v1320 = vpow.pop %v1319
        %v1321 = vmul.f32 %v1083, 1.442695
        %v1322 = vpow.pop %v1321
        %v1323 = vmul.f32 %v1084, 1.442695
        %v1324 = vpow.pop %v1323
        %v1325 = vmul.f32 %v1085, 1.442695
        %v1326 = vpow.pop %v1325
        %v1327 = vmul.f32 %v1086, 1.442695
        %v1328 = vpow.pop %v1327
        %v1329 = vmul.f32 %v1087, 1.442695
        %v1330 = vpow.pop %v1329
        %v1331 = vmul.f32 %v1088, 1.442695
        %v1332 = vpow.pop %v1331
        %v1333 = vmul.f32 %v1089, 1.442695
        %v1334 = vpow.pop %v1333
        %v1335 = vmul.f32 %v1090, 1.442695
        %v1336 = vpow.pop %v1335
        %v1337 = vmul.f32 %v1091, 1.442695
        %v1338 = vpow.pop %v1337
        %v1339 = vmul.f32 %v1092, 1.442695
        %v1340 = vpow.pop %v1339
        %v1341 = vmul.f32 %v1093, 1.442695
        %v1342 = vpow.pop %v1341
        %v1343 = vmul.f32 %v1094, 1.442695
        %v1344 = vpow.pop %v1343
        %v1345 = vmul.f32 %v1095, 1.442695
        %v1346 = vpow.pop %v1345
        %v1347 = vmul.f32 %v1096, 1.442695
        %v1348 = vpow.pop %v1347
        %v1349 = vmul.f32 %v1097, 1.442695
        %v1350 = vpow.pop %v1349
        %v1351 = vmul.f32 %v1098, 1.442695
        %v1352 = vpow.pop %v1351
        %v1353 = vmul.f32 %v1099, 1.442695
        %v1354 = vpow.pop %v1353
        %v1355 = vmul.f32 %v1100, 1.442695
        %v1356 = vpow.pop %v1355
        %v1357 = vadd.f32 %v1102, 1.0
        %v1358 = vlog2.pop %v1357
        %v1359 = vmul.f32 %v1358, 0.6931472
        %v1360 = vmul.f32 -0.5, %v1102
        %v1361 = vadd.f32 %v1360, 1.0
        %v1362 = vmul.f32 %v1361, %v1102
        %v1363 = vand.u32 2147483647, %v1102
        %vm1364 = vcmp.lt.f32.partialorder %v1363, 0.0004427343
        %v1365 = vsel %vm1364, %v1362, %v1359
        %v1366 = vadd.f32 %v1104, 1.0
        %v1367 = vlog2.pop %v1366
        %v1368 = vmul.f32 %v1367, 0.6931472
        %v1369 = vmul.f32 -0.5, %v1104
        %v1370 = vadd.f32 %v1369, 1.0
        %v1371 = vmul.f32 %v1370, %v1104
        %v1372 = vand.u32 2147483647, %v1104
        %vm1373 = vcmp.lt.f32.partialorder %v1372, 0.0004427343
        %v1374 = vsel %vm1373, %v1371, %v1368
        %v1375 = vadd.f32 %v1106, 1.0
        %v1376 = vlog2.pop %v1375
        %v1377 = vmul.f32 %v1376, 0.6931472
        %v1378 = vmul.f32 -0.5, %v1106
        %v1379 = vadd.f32 %v1378, 1.0
        %v1380 = vmul.f32 %v1379, %v1106
        %v1381 = vand.u32 2147483647, %v1106
        %vm1382 = vcmp.lt.f32.partialorder %v1381, 0.0004427343
        %v1383 = vsel %vm1382, %v1380, %v1377
        %v1384 = vadd.f32 %v1108, 1.0
        %v1385 = vlog2.pop %v1384
        %v1386 = vmul.f32 %v1385, 0.6931472
        %v1387 = vmul.f32 -0.5, %v1108
        %v1388 = vadd.f32 %v1387, 1.0
        %v1389 = vmul.f32 %v1388, %v1108
        %v1390 = vand.u32 2147483647, %v1108
        %vm1391 = vcmp.lt.f32.partialorder %v1390, 0.0004427343
        %v1392 = vsel %vm1391, %v1389, %v1386
        %v1393 = vadd.f32 %v1110, 1.0
        %v1394 = vlog2.pop %v1393
        %v1395 = vmul.f32 %v1394, 0.6931472
        %v1396 = vmul.f32 -0.5, %v1110
        %v1397 = vadd.f32 %v1396, 1.0
        %v1398 = vmul.f32 %v1397, %v1110
        %v1399 = vand.u32 2147483647, %v1110
        %vm1400 = vcmp.lt.f32.partialorder %v1399, 0.0004427343
        %v1401 = vsel %vm1400, %v1398, %v1395
        %v1402 = vadd.f32 %v1112, 1.0
        %v1403 = vlog2.pop %v1402
        %v1404 = vmul.f32 %v1403, 0.6931472
        %v1405 = vmul.f32 -0.5, %v1112
        %v1406 = vadd.f32 %v1405, 1.0
        %v1407 = vmul.f32 %v1406, %v1112
        %v1408 = vand.u32 2147483647, %v1112
        %vm1409 = vcmp.lt.f32.partialorder %v1408, 0.0004427343
        %v1410 = vsel %vm1409, %v1407, %v1404
        %v1411 = vadd.f32 %v1114, 1.0
        %v1412 = vlog2.pop %v1411
        %v1413 = vmul.f32 %v1412, 0.6931472
        %v1414 = vmul.f32 -0.5, %v1114
        %v1415 = vadd.f32 %v1414, 1.0
        %v1416 = vmul.f32 %v1415, %v1114
        %v1417 = vand.u32 2147483647, %v1114
        %vm1418 = vcmp.lt.f32.partialorder %v1417, 0.0004427343
        %v1419 = vsel %vm1418, %v1416, %v1413
        %v1420 = vadd.f32 %v1116, 1.0
        %v1421 = vlog2.pop %v1420
        %v1422 = vmul.f32 %v1421, 0.6931472
        %v1423 = vmul.f32 -0.5, %v1116
        %v1424 = vadd.f32 %v1423, 1.0
        %v1425 = vmul.f32 %v1424, %v1116
        %v1426 = vand.u32 2147483647, %v1116
        %vm1427 = vcmp.lt.f32.partialorder %v1426, 0.0004427343
        %v1428 = vsel %vm1427, %v1425, %v1422
        %v1429 = vadd.f32 %v1118, 1.0
        %v1430 = vlog2.pop %v1429
        %v1431 = vmul.f32 %v1430, 0.6931472
        %v1432 = vmul.f32 -0.5, %v1118
        %v1433 = vadd.f32 %v1432, 1.0
        %v1434 = vmul.f32 %v1433, %v1118
        %v1435 = vand.u32 2147483647, %v1118
        %vm1436 = vcmp.lt.f32.partialorder %v1435, 0.0004427343
        %v1437 = vsel %vm1436, %v1434, %v1431
        %v1438 = vadd.f32 %v1120, 1.0
        %v1439 = vlog2.pop %v1438
        %v1440 = vmul.f32 %v1439, 0.6931472
        %v1441 = vmul.f32 -0.5, %v1120
        %v1442 = vadd.f32 %v1441, 1.0
        %v1443 = vmul.f32 %v1442, %v1120
        %v1444 = vand.u32 2147483647, %v1120
        %vm1445 = vcmp.lt.f32.partialorder %v1444, 0.0004427343
        %v1446 = vsel %vm1445, %v1443, %v1440
        %v1447 = vadd.f32 %v1122, 1.0
        %v1448 = vlog2.pop %v1447
        %v1449 = vmul.f32 %v1448, 0.6931472
        %v1450 = vmul.f32 -0.5, %v1122
        %v1451 = vadd.f32 %v1450, 1.0
        %v1452 = vmul.f32 %v1451, %v1122
        %v1453 = vand.u32 2147483647, %v1122
        %vm1454 = vcmp.lt.f32.partialorder %v1453, 0.0004427343
        %v1455 = vsel %vm1454, %v1452, %v1449
        %v1456 = vadd.f32 %v1124, 1.0
        %v1457 = vlog2.pop %v1456
        %v1458 = vmul.f32 %v1457, 0.6931472
        %v1459 = vmul.f32 -0.5, %v1124
        %v1460 = vadd.f32 %v1459, 1.0
        %v1461 = vmul.f32 %v1460, %v1124
        %v1462 = vand.u32 2147483647, %v1124
        %vm1463 = vcmp.lt.f32.partialorder %v1462, 0.0004427343
        %v1464 = vsel %vm1463, %v1461, %v1458
        %v1465 = vadd.f32 %v1126, 1.0
        %v1466 = vlog2.pop %v1465
        %v1467 = vmul.f32 %v1466, 0.6931472
        %v1468 = vmul.f32 -0.5, %v1126
        %v1469 = vadd.f32 %v1468, 1.0
        %v1470 = vmul.f32 %v1469, %v1126
        %v1471 = vand.u32 2147483647, %v1126
        %vm1472 = vcmp.lt.f32.partialorder %v1471, 0.0004427343
        %v1473 = vsel %vm1472, %v1470, %v1467
        %v1474 = vadd.f32 %v1128, 1.0
        %v1475 = vlog2.pop %v1474
        %v1476 = vmul.f32 %v1475, 0.6931472
        %v1477 = vmul.f32 -0.5, %v1128
        %v1478 = vadd.f32 %v1477, 1.0
        %v1479 = vmul.f32 %v1478, %v1128
        %v1480 = vand.u32 2147483647, %v1128
        %vm1481 = vcmp.lt.f32.partialorder %v1480, 0.0004427343
        %v1482 = vsel %vm1481, %v1479, %v1476
        %v1483 = vadd.f32 %v1130, 1.0
        %v1484 = vlog2.pop %v1483
        %v1485 = vmul.f32 %v1484, 0.6931472
        %v1486 = vmul.f32 -0.5, %v1130
        %v1487 = vadd.f32 %v1486, 1.0
        %v1488 = vmul.f32 %v1487, %v1130
        %v1489 = vand.u32 2147483647, %v1130
        %vm1490 = vcmp.lt.f32.partialorder %v1489, 0.0004427343
        %v1491 = vsel %vm1490, %v1488, %v1485
        %v1492 = vadd.f32 %v1132, 1.0
        %v1493 = vlog2.pop %v1492
        %v1494 = vmul.f32 %v1493, 0.6931472
        %v1495 = vmul.f32 -0.5, %v1132
        %v1496 = vadd.f32 %v1495, 1.0
        %v1497 = vmul.f32 %v1496, %v1132
        %v1498 = vand.u32 2147483647, %v1132
        %vm1499 = vcmp.lt.f32.partialorder %v1498, 0.0004427343
        %v1500 = vsel %vm1499, %v1497, %v1494
        %v1501 = vadd.f32 %v1134, 1.0
        %v1502 = vlog2.pop %v1501
        %v1503 = vmul.f32 %v1502, 0.6931472
        %v1504 = vmul.f32 -0.5, %v1134
        %v1505 = vadd.f32 %v1504, 1.0
        %v1506 = vmul.f32 %v1505, %v1134
        %v1507 = vand.u32 2147483647, %v1134
        %vm1508 = vcmp.lt.f32.partialorder %v1507, 0.0004427343
        %v1509 = vsel %vm1508, %v1506, %v1503
        %v1510 = vadd.f32 %v1136, 1.0
        %v1511 = vlog2.pop %v1510
        %v1512 = vmul.f32 %v1511, 0.6931472
        %v1513 = vmul.f32 -0.5, %v1136
        %v1514 = vadd.f32 %v1513, 1.0
        %v1515 = vmul.f32 %v1514, %v1136
        %v1516 = vand.u32 2147483647, %v1136
        %vm1517 = vcmp.lt.f32.partialorder %v1516, 0.0004427343
        %v1518 = vsel %vm1517, %v1515, %v1512
        %v1519 = vadd.f32 %v1138, 1.0
        %v1520 = vlog2.pop %v1519
        %v1521 = vmul.f32 %v1520, 0.6931472
        %v1522 = vmul.f32 -0.5, %v1138
        %v1523 = vadd.f32 %v1522, 1.0
        %v1524 = vmul.f32 %v1523, %v1138
        %v1525 = vand.u32 2147483647, %v1138
        %vm1526 = vcmp.lt.f32.partialorder %v1525, 0.0004427343
        %v1527 = vsel %vm1526, %v1524, %v1521
        %v1528 = vadd.f32 %v1140, 1.0
        %v1529 = vlog2.pop %v1528
        %v1530 = vmul.f32 %v1529, 0.6931472
        %v1531 = vmul.f32 -0.5, %v1140
        %v1532 = vadd.f32 %v1531, 1.0
        %v1533 = vmul.f32 %v1532, %v1140
        %v1534 = vand.u32 2147483647, %v1140
        %vm1535 = vcmp.lt.f32.partialorder %v1534, 0.0004427343
        %v1536 = vsel %vm1535, %v1533, %v1530
        %v1537 = vadd.f32 %v1142, 1.0
        %v1538 = vlog2.pop %v1537
        %v1539 = vmul.f32 %v1538, 0.6931472
        %v1540 = vmul.f32 -0.5, %v1142
        %v1541 = vadd.f32 %v1540, 1.0
        %v1542 = vmul.f32 %v1541, %v1142
        %v1543 = vand.u32 2147483647, %v1142
        %vm1544 = vcmp.lt.f32.partialorder %v1543, 0.0004427343
        %v1545 = vsel %vm1544, %v1542, %v1539
        %v1546 = vadd.f32 %v1144, 1.0
        %v1547 = vlog2.pop %v1546
        %v1548 = vmul.f32 %v1547, 0.6931472
        %v1549 = vmul.f32 -0.5, %v1144
        %v1550 = vadd.f32 %v1549, 1.0
        %v1551 = vmul.f32 %v1550, %v1144
        %v1552 = vand.u32 2147483647, %v1144
        %vm1553 = vcmp.lt.f32.partialorder %v1552, 0.0004427343
        %v1554 = vsel %vm1553, %v1551, %v1548
        %v1555 = vadd.f32 %v1146, 1.0
        %v1556 = vlog2.pop %v1555
        %v1557 = vmul.f32 %v1556, 0.6931472
        %v1558 = vmul.f32 -0.5, %v1146
        %v1559 = vadd.f32 %v1558, 1.0
        %v1560 = vmul.f32 %v1559, %v1146
        %v1561 = vand.u32 2147483647, %v1146
        %vm1562 = vcmp.lt.f32.partialorder %v1561, 0.0004427343
        %v1563 = vsel %vm1562, %v1560, %v1557
        %v1564 = vadd.f32 %v1148, 1.0
        %v1565 = vlog2.pop %v1564
        %v1566 = vmul.f32 %v1565, 0.6931472
        %v1567 = vmul.f32 -0.5, %v1148
        %v1568 = vadd.f32 %v1567, 1.0
        %v1569 = vmul.f32 %v1568, %v1148
        %v1570 = vand.u32 2147483647, %v1148
        %vm1571 = vcmp.lt.f32.partialorder %v1570, 0.0004427343
        %v1572 = vsel %vm1571, %v1569, %v1566
        %v1573 = vadd.f32 %v1150, 1.0
        %v1574 = vlog2.pop %v1573
        %v1575 = vmul.f32 %v1574, 0.6931472
        %v1576 = vmul.f32 -0.5, %v1150
        %v1577 = vadd.f32 %v1576, 1.0
        %v1578 = vmul.f32 %v1577, %v1150
        %v1579 = vand.u32 2147483647, %v1150
        %vm1580 = vcmp.lt.f32.partialorder %v1579, 0.0004427343
        %v1581 = vsel %vm1580, %v1578, %v1575
        %v1582 = vadd.f32 %v1152, 1.0
        %v1583 = vlog2.pop %v1582
        %v1584 = vmul.f32 %v1583, 0.6931472
        %v1585 = vmul.f32 -0.5, %v1152
        %v1586 = vadd.f32 %v1585, 1.0
        %v1587 = vmul.f32 %v1586, %v1152
        %v1588 = vand.u32 2147483647, %v1152
        %vm1589 = vcmp.lt.f32.partialorder %v1588, 0.0004427343
        %v1590 = vsel %vm1589, %v1587, %v1584
        %v1591 = vadd.f32 %v1154, 1.0
        %v1592 = vlog2.pop %v1591
        %v1593 = vmul.f32 %v1592, 0.6931472
        %v1594 = vmul.f32 -0.5, %v1154
        %v1595 = vadd.f32 %v1594, 1.0
        %v1596 = vmul.f32 %v1595, %v1154
        %v1597 = vand.u32 2147483647, %v1154
        %vm1598 = vcmp.lt.f32.partialorder %v1597, 0.0004427343
        %v1599 = vsel %vm1598, %v1596, %v1593
        %v1600 = vadd.f32 %v1156, 1.0
        %v1601 = vlog2.pop %v1600
        %v1602 = vmul.f32 %v1601, 0.6931472
        %v1603 = vmul.f32 -0.5, %v1156
        %v1604 = vadd.f32 %v1603, 1.0
        %v1605 = vmul.f32 %v1604, %v1156
        %v1606 = vand.u32 2147483647, %v1156
        %vm1607 = vcmp.lt.f32.partialorder %v1606, 0.0004427343
        %v1608 = vsel %vm1607, %v1605, %v1602
        %v1609 = vadd.f32 %v1158, 1.0
        %v1610 = vlog2.pop %v1609
        %v1611 = vmul.f32 %v1610, 0.6931472
        %v1612 = vmul.f32 -0.5, %v1158
        %v1613 = vadd.f32 %v1612, 1.0
        %v1614 = vmul.f32 %v1613, %v1158
        %v1615 = vand.u32 2147483647, %v1158
        %vm1616 = vcmp.lt.f32.partialorder %v1615, 0.0004427343
        %v1617 = vsel %vm1616, %v1614, %v1611
        %v1618 = vadd.f32 %v1160, 1.0
        %v1619 = vlog2.pop %v1618
        %v1620 = vmul.f32 %v1619, 0.6931472
        %v1621 = vmul.f32 -0.5, %v1160
        %v1622 = vadd.f32 %v1621, 1.0
        %v1623 = vmul.f32 %v1622, %v1160
        %v1624 = vand.u32 2147483647, %v1160
        %vm1625 = vcmp.lt.f32.partialorder %v1624, 0.0004427343
        %v1626 = vsel %vm1625, %v1623, %v1620
        %v1627 = vadd.f32 %v1162, 1.0
        %v1628 = vlog2.pop %v1627
        %v1629 = vmul.f32 %v1628, 0.6931472
        %v1630 = vmul.f32 -0.5, %v1162
        %v1631 = vadd.f32 %v1630, 1.0
        %v1632 = vmul.f32 %v1631, %v1162
        %v1633 = vand.u32 2147483647, %v1162
        %vm1634 = vcmp.lt.f32.partialorder %v1633, 0.0004427343
        %v1635 = vsel %vm1634, %v1632, %v1629
        %v1636 = vadd.f32 %v1164, 1.0
        %v1637 = vlog2.pop %v1636
        %v1638 = vmul.f32 %v1637, 0.6931472
        %v1639 = vmul.f32 -0.5, %v1164
        %v1640 = vadd.f32 %v1639, 1.0
        %v1641 = vmul.f32 %v1640, %v1164
        %v1642 = vand.u32 2147483647, %v1164
        %vm1643 = vcmp.lt.f32.partialorder %v1642, 0.0004427343
        %v1644 = vsel %vm1643, %v1641, %v1638
        %v1645 = vadd.f32 %v1166, 1.0
        %v1646 = vlog2.pop %v1645
        %v1647 = vmul.f32 %v1646, 0.6931472
        %v1648 = vmul.f32 -0.5, %v1166
        %v1649 = vadd.f32 %v1648, 1.0
        %v1650 = vmul.f32 %v1649, %v1166
        %v1651 = vand.u32 2147483647, %v1166
        %vm1652 = vcmp.lt.f32.partialorder %v1651, 0.0004427343
        %v1653 = vsel %vm1652, %v1650, %v1647
        %v1654 = vadd.f32 %v1168, 1.0
        %v1655 = vlog2.pop %v1654
        %v1656 = vmul.f32 %v1655, 0.6931472
        %v1657 = vmul.f32 -0.5, %v1168
        %v1658 = vadd.f32 %v1657, 1.0
        %v1659 = vmul.f32 %v1658, %v1168
        %v1660 = vand.u32 2147483647, %v1168
        %vm1661 = vcmp.lt.f32.partialorder %v1660, 0.0004427343
        %v1662 = vsel %vm1661, %v1659, %v1656
        %v1663 = vadd.f32 %v1170, 1.0
        %v1664 = vlog2.pop %v1663
        %v1665 = vmul.f32 %v1664, 0.6931472
        %v1666 = vmul.f32 -0.5, %v1170
        %v1667 = vadd.f32 %v1666, 1.0
        %v1668 = vmul.f32 %v1667, %v1170
        %v1669 = vand.u32 2147483647, %v1170
        %vm1670 = vcmp.lt.f32.partialorder %v1669, 0.0004427343
        %v1671 = vsel %vm1670, %v1668, %v1665
        %v1672 = vadd.f32 %v1172, 1.0
        %v1673 = vlog2.pop %v1672
        %v1674 = vmul.f32 %v1673, 0.6931472
        %v1675 = vmul.f32 -0.5, %v1172
        %v1676 = vadd.f32 %v1675, 1.0
        %v1677 = vmul.f32 %v1676, %v1172
        %v1678 = vand.u32 2147483647, %v1172
        %vm1679 = vcmp.lt.f32.partialorder %v1678, 0.0004427343
        %v1680 = vsel %vm1679, %v1677, %v1674
        %v1681 = vadd.f32 %v1174, 1.0
        %v1682 = vlog2.pop %v1681
        %v1683 = vmul.f32 %v1682, 0.6931472
        %v1684 = vmul.f32 -0.5, %v1174
        %v1685 = vadd.f32 %v1684, 1.0
        %v1686 = vmul.f32 %v1685, %v1174
        %v1687 = vand.u32 2147483647, %v1174
        %vm1688 = vcmp.lt.f32.partialorder %v1687, 0.0004427343
        %v1689 = vsel %vm1688, %v1686, %v1683
        %v1690 = vadd.f32 %v1176, 1.0
        %v1691 = vlog2.pop %v1690
        %v1692 = vmul.f32 %v1691, 0.6931472
        %v1693 = vmul.f32 -0.5, %v1176
        %v1694 = vadd.f32 %v1693, 1.0
        %v1695 = vmul.f32 %v1694, %v1176
        %v1696 = vand.u32 2147483647, %v1176
        %vm1697 = vcmp.lt.f32.partialorder %v1696, 0.0004427343
        %v1698 = vsel %vm1697, %v1695, %v1692
        %v1699 = vadd.f32 %v1178, 1.0
        %v1700 = vlog2.pop %v1699
        %v1701 = vmul.f32 %v1700, 0.6931472
        %v1702 = vmul.f32 -0.5, %v1178
        %v1703 = vadd.f32 %v1702, 1.0
        %v1704 = vmul.f32 %v1703, %v1178
        %v1705 = vand.u32 2147483647, %v1178
        %vm1706 = vcmp.lt.f32.partialorder %v1705, 0.0004427343
        %v1707 = vsel %vm1706, %v1704, %v1701
        %v1708 = vadd.f32 %v1180, 1.0
        %v1709 = vlog2.pop %v1708
        %v1710 = vmul.f32 %v1709, 0.6931472
        %v1711 = vmul.f32 -0.5, %v1180
        %v1712 = vadd.f32 %v1711, 1.0
        %v1713 = vmul.f32 %v1712, %v1180
        %v1714 = vand.u32 2147483647, %v1180
        %vm1715 = vcmp.lt.f32.partialorder %v1714, 0.0004427343
        %v1716 = vsel %vm1715, %v1713, %v1710
        %v1717 = vadd.f32 %v1182, 1.0
        %v1718 = vlog2.pop %v1717
        %v1719 = vmul.f32 %v1718, 0.6931472
        %v1720 = vmul.f32 -0.5, %v1182
        %v1721 = vadd.f32 %v1720, 1.0
        %v1722 = vmul.f32 %v1721, %v1182
        %v1723 = vand.u32 2147483647, %v1182
        %vm1724 = vcmp.lt.f32.partialorder %v1723, 0.0004427343
        %v1725 = vsel %vm1724, %v1722, %v1719
        %v1726 = vadd.f32 %v1184, 1.0
        %v1727 = vlog2.pop %v1726
        %v1728 = vmul.f32 %v1727, 0.6931472
        %v1729 = vmul.f32 -0.5, %v1184
        %v1730 = vadd.f32 %v1729, 1.0
        %v1731 = vmul.f32 %v1730, %v1184
        %v1732 = vand.u32 2147483647, %v1184
        %vm1733 = vcmp.lt.f32.partialorder %v1732, 0.0004427343
        %v1734 = vsel %vm1733, %v1731, %v1728
        %v1735 = vadd.f32 %v1186, 1.0
        %v1736 = vlog2.pop %v1735
        %v1737 = vmul.f32 %v1736, 0.6931472
        %v1738 = vmul.f32 -0.5, %v1186
        %v1739 = vadd.f32 %v1738, 1.0
        %v1740 = vmul.f32 %v1739, %v1186
        %v1741 = vand.u32 2147483647, %v1186
        %vm1742 = vcmp.lt.f32.partialorder %v1741, 0.0004427343
        %v1743 = vsel %vm1742, %v1740, %v1737
        %v1744 = vadd.f32 %v1188, 1.0
        %v1745 = vlog2.pop %v1744
        %v1746 = vmul.f32 %v1745, 0.6931472
        %v1747 = vmul.f32 -0.5, %v1188
        %v1748 = vadd.f32 %v1747, 1.0
        %v1749 = vmul.f32 %v1748, %v1188
        %v1750 = vand.u32 2147483647, %v1188
        %vm1751 = vcmp.lt.f32.partialorder %v1750, 0.0004427343
        %v1752 = vsel %vm1751, %v1749, %v1746
        %v1753 = vadd.f32 %v1190, 1.0
        %v1754 = vlog2.pop %v1753
        %v1755 = vmul.f32 %v1754, 0.6931472
        %v1756 = vmul.f32 -0.5, %v1190
        %v1757 = vadd.f32 %v1756, 1.0
        %v1758 = vmul.f32 %v1757, %v1190
        %v1759 = vand.u32 2147483647, %v1190
        %vm1760 = vcmp.lt.f32.partialorder %v1759, 0.0004427343
        %v1761 = vsel %vm1760, %v1758, %v1755
        %v1762 = vadd.f32 %v1192, 1.0
        %v1763 = vlog2.pop %v1762
        %v1764 = vmul.f32 %v1763, 0.6931472
        %v1765 = vmul.f32 -0.5, %v1192
        %v1766 = vadd.f32 %v1765, 1.0
        %v1767 = vmul.f32 %v1766, %v1192
        %v1768 = vand.u32 2147483647, %v1192
        %vm1769 = vcmp.lt.f32.partialorder %v1768, 0.0004427343
        %v1770 = vsel %vm1769, %v1767, %v1764
        %v1771 = vadd.f32 %v1194, 1.0
        %v1772 = vlog2.pop %v1771
        %v1773 = vmul.f32 %v1772, 0.6931472
        %v1774 = vmul.f32 -0.5, %v1194
        %v1775 = vadd.f32 %v1774, 1.0
        %v1776 = vmul.f32 %v1775, %v1194
        %v1777 = vand.u32 2147483647, %v1194
        %vm1778 = vcmp.lt.f32.partialorder %v1777, 0.0004427343
        %v1779 = vsel %vm1778, %v1776, %v1773
        %v1780 = vadd.f32 %v1196, 1.0
        %v1781 = vlog2.pop %v1780
        %v1782 = vmul.f32 %v1781, 0.6931472
        %v1783 = vmul.f32 -0.5, %v1196
        %v1784 = vadd.f32 %v1783, 1.0
        %v1785 = vmul.f32 %v1784, %v1196
        %v1786 = vand.u32 2147483647, %v1196
        %vm1787 = vcmp.lt.f32.partialorder %v1786, 0.0004427343
        %v1788 = vsel %vm1787, %v1785, %v1782
        %v1789 = vadd.f32 %v1198, 1.0
        %v1790 = vlog2.pop %v1789
        %v1791 = vmul.f32 %v1790, 0.6931472
        %v1792 = vmul.f32 -0.5, %v1198
        %v1793 = vadd.f32 %v1792, 1.0
        %v1794 = vmul.f32 %v1793, %v1198
        %v1795 = vand.u32 2147483647, %v1198
        %vm1796 = vcmp.lt.f32.partialorder %v1795, 0.0004427343
        %v1797 = vsel %vm1796, %v1794, %v1791
        %v1798 = vadd.f32 %v1200, 1.0
        %v1799 = vlog2.pop %v1798
        %v1800 = vmul.f32 %v1799, 0.6931472
        %v1801 = vmul.f32 -0.5, %v1200
        %v1802 = vadd.f32 %v1801, 1.0
        %v1803 = vmul.f32 %v1802, %v1200
        %v1804 = vand.u32 2147483647, %v1200
        %vm1805 = vcmp.lt.f32.partialorder %v1804, 0.0004427343
        %v1806 = vsel %vm1805, %v1803, %v1800
        %v1807 = vadd.f32 %v1202, 1.0
        %v1808 = vlog2.pop %v1807
        %v1809 = vmul.f32 %v1808, 0.6931472
        %v1810 = vmul.f32 -0.5, %v1202
        %v1811 = vadd.f32 %v1810, 1.0
        %v1812 = vmul.f32 %v1811, %v1202
        %v1813 = vand.u32 2147483647, %v1202
        %vm1814 = vcmp.lt.f32.partialorder %v1813, 0.0004427343
        %v1815 = vsel %vm1814, %v1812, %v1809
        %v1816 = vadd.f32 %v1204, 1.0
        %v1817 = vlog2.pop %v1816
        %v1818 = vmul.f32 %v1817, 0.6931472
        %v1819 = vmul.f32 -0.5, %v1204
        %v1820 = vadd.f32 %v1819, 1.0
        %v1821 = vmul.f32 %v1820, %v1204
        %v1822 = vand.u32 2147483647, %v1204
        %vm1823 = vcmp.lt.f32.partialorder %v1822, 0.0004427343
        %v1824 = vsel %vm1823, %v1821, %v1818
        %v1825 = vadd.f32 %v1206, 1.0
        %v1826 = vlog2.pop %v1825
        %v1827 = vmul.f32 %v1826, 0.6931472
        %v1828 = vmul.f32 -0.5, %v1206
        %v1829 = vadd.f32 %v1828, 1.0
        %v1830 = vmul.f32 %v1829, %v1206
        %v1831 = vand.u32 2147483647, %v1206
        %vm1832 = vcmp.lt.f32.partialorder %v1831, 0.0004427343
        %v1833 = vsel %vm1832, %v1830, %v1827
        %v1834 = vadd.f32 %v1208, 1.0
        %v1835 = vlog2.pop %v1834
        %v1836 = vmul.f32 %v1835, 0.6931472
        %v1837 = vmul.f32 -0.5, %v1208
        %v1838 = vadd.f32 %v1837, 1.0
        %v1839 = vmul.f32 %v1838, %v1208
        %v1840 = vand.u32 2147483647, %v1208
        %vm1841 = vcmp.lt.f32.partialorder %v1840, 0.0004427343
        %v1842 = vsel %vm1841, %v1839, %v1836
        %v1843 = vadd.f32 %v1210, 1.0
        %v1844 = vlog2.pop %v1843
        %v1845 = vmul.f32 %v1844, 0.6931472
        %v1846 = vmul.f32 -0.5, %v1210
        %v1847 = vadd.f32 %v1846, 1.0
        %v1848 = vmul.f32 %v1847, %v1210
        %v1849 = vand.u32 2147483647, %v1210
        %vm1850 = vcmp.lt.f32.partialorder %v1849, 0.0004427343
        %v1851 = vsel %vm1850, %v1848, %v1845
        %v1852 = vadd.f32 %v1212, 1.0
        %v1853 = vlog2.pop %v1852
        %v1854 = vmul.f32 %v1853, 0.6931472
        %v1855 = vmul.f32 -0.5, %v1212
        %v1856 = vadd.f32 %v1855, 1.0
        %v1857 = vmul.f32 %v1856, %v1212
        %v1858 = vand.u32 2147483647, %v1212
        %vm1859 = vcmp.lt.f32.partialorder %v1858, 0.0004427343
        %v1860 = vsel %vm1859, %v1857, %v1854
        %v1861 = vadd.f32 %v1214, 1.0
        %v1862 = vlog2.pop %v1861
        %v1863 = vmul.f32 %v1862, 0.6931472
        %v1864 = vmul.f32 -0.5, %v1214
        %v1865 = vadd.f32 %v1864, 1.0
        %v1866 = vmul.f32 %v1865, %v1214
        %v1867 = vand.u32 2147483647, %v1214
        %vm1868 = vcmp.lt.f32.partialorder %v1867, 0.0004427343
        %v1869 = vsel %vm1868, %v1866, %v1863
        %v1870 = vadd.f32 %v1216, 1.0
        %v1871 = vlog2.pop %v1870
        %v1872 = vmul.f32 %v1871, 0.6931472
        %v1873 = vmul.f32 -0.5, %v1216
        %v1874 = vadd.f32 %v1873, 1.0
        %v1875 = vmul.f32 %v1874, %v1216
        %v1876 = vand.u32 2147483647, %v1216
        %vm1877 = vcmp.lt.f32.partialorder %v1876, 0.0004427343
        %v1878 = vsel %vm1877, %v1875, %v1872
        %v1879 = vadd.f32 %v1218, 1.0
        %v1880 = vlog2.pop %v1879
        %v1881 = vmul.f32 %v1880, 0.6931472
        %v1882 = vmul.f32 -0.5, %v1218
        %v1883 = vadd.f32 %v1882, 1.0
        %v1884 = vmul.f32 %v1883, %v1218
        %v1885 = vand.u32 2147483647, %v1218
        %vm1886 = vcmp.lt.f32.partialorder %v1885, 0.0004427343
        %v1887 = vsel %vm1886, %v1884, %v1881
        %v1888 = vadd.f32 %v1220, 1.0
        %v1889 = vlog2.pop %v1888
        %v1890 = vmul.f32 %v1889, 0.6931472
        %v1891 = vmul.f32 -0.5, %v1220
        %v1892 = vadd.f32 %v1891, 1.0
        %v1893 = vmul.f32 %v1892, %v1220
        %v1894 = vand.u32 2147483647, %v1220
        %vm1895 = vcmp.lt.f32.partialorder %v1894, 0.0004427343
        %v1896 = vsel %vm1895, %v1893, %v1890
        %v1897 = vadd.f32 %v1222, 1.0
        %v1898 = vlog2.pop %v1897
        %v1899 = vmul.f32 %v1898, 0.6931472
        %v1900 = vmul.f32 -0.5, %v1222
        %v1901 = vadd.f32 %v1900, 1.0
        %v1902 = vmul.f32 %v1901, %v1222
        %v1903 = vand.u32 2147483647, %v1222
        %vm1904 = vcmp.lt.f32.partialorder %v1903, 0.0004427343
        %v1905 = vsel %vm1904, %v1902, %v1899
        %v1906 = vadd.f32 %v1224, 1.0
        %v1907 = vlog2.pop %v1906
        %v1908 = vmul.f32 %v1907, 0.6931472
        %v1909 = vmul.f32 -0.5, %v1224
        %v1910 = vadd.f32 %v1909, 1.0
        %v1911 = vmul.f32 %v1910, %v1224
        %v1912 = vand.u32 2147483647, %v1224
        %vm1913 = vcmp.lt.f32.partialorder %v1912, 0.0004427343
        %v1914 = vsel %vm1913, %v1911, %v1908
        %v1915 = vadd.f32 %v1226, 1.0
        %v1916 = vlog2.pop %v1915
        %v1917 = vmul.f32 %v1916, 0.6931472
        %v1918 = vmul.f32 -0.5, %v1226
        %v1919 = vadd.f32 %v1918, 1.0
        %v1920 = vmul.f32 %v1919, %v1226
        %v1921 = vand.u32 2147483647, %v1226
        %vm1922 = vcmp.lt.f32.partialorder %v1921, 0.0004427343
        %v1923 = vsel %vm1922, %v1920, %v1917
        %v1924 = vadd.f32 %v1228, 1.0
        %v1925 = vlog2.pop %v1924
        %v1926 = vmul.f32 %v1925, 0.6931472
        %v1927 = vmul.f32 -0.5, %v1228
        %v1928 = vadd.f32 %v1927, 1.0
        %v1929 = vmul.f32 %v1928, %v1228
        %v1930 = vand.u32 2147483647, %v1228
        %vm1931 = vcmp.lt.f32.partialorder %v1930, 0.0004427343
        %v1932 = vsel %vm1931, %v1929, %v1926
        %v1933 = vadd.f32 %v1230, 1.0
        %v1934 = vlog2.pop %v1933
        %v1935 = vmul.f32 %v1934, 0.6931472
        %v1936 = vmul.f32 -0.5, %v1230
        %v1937 = vadd.f32 %v1936, 1.0
        %v1938 = vmul.f32 %v1937, %v1230
        %v1939 = vand.u32 2147483647, %v1230
        %vm1940 = vcmp.lt.f32.partialorder %v1939, 0.0004427343
        %v1941 = vsel %vm1940, %v1938, %v1935
        %v1942 = vadd.f32 %v1232, 1.0
        %v1943 = vlog2.pop %v1942
        %v1944 = vmul.f32 %v1943, 0.6931472
        %v1945 = vmul.f32 -0.5, %v1232
        %v1946 = vadd.f32 %v1945, 1.0
        %v1947 = vmul.f32 %v1946, %v1232
        %v1948 = vand.u32 2147483647, %v1232
        %vm1949 = vcmp.lt.f32.partialorder %v1948, 0.0004427343
        %v1950 = vsel %vm1949, %v1947, %v1944
        %v1951 = vadd.f32 %v1234, 1.0
        %v1952 = vlog2.pop %v1951
        %v1953 = vmul.f32 %v1952, 0.6931472
        %v1954 = vmul.f32 -0.5, %v1234
        %v1955 = vadd.f32 %v1954, 1.0
        %v1956 = vmul.f32 %v1955, %v1234
        %v1957 = vand.u32 2147483647, %v1234
        %vm1958 = vcmp.lt.f32.partialorder %v1957, 0.0004427343
        %v1959 = vsel %vm1958, %v1956, %v1953
        %v1960 = vadd.f32 %v1236, 1.0
        %v1961 = vlog2.pop %v1960
        %v1962 = vmul.f32 %v1961, 0.6931472
        %v1963 = vmul.f32 -0.5, %v1236
        %v1964 = vadd.f32 %v1963, 1.0
        %v1965 = vmul.f32 %v1964, %v1236
        %v1966 = vand.u32 2147483647, %v1236
        %vm1967 = vcmp.lt.f32.partialorder %v1966, 0.0004427343
        %v1968 = vsel %vm1967, %v1965, %v1962
        %v1969 = vadd.f32 %v1238, 1.0
        %v1970 = vlog2.pop %v1969
        %v1971 = vmul.f32 %v1970, 0.6931472
        %v1972 = vmul.f32 -0.5, %v1238
        %v1973 = vadd.f32 %v1972, 1.0
        %v1974 = vmul.f32 %v1973, %v1238
        %v1975 = vand.u32 2147483647, %v1238
        %vm1976 = vcmp.lt.f32.partialorder %v1975, 0.0004427343
        %v1977 = vsel %vm1976, %v1974, %v1971
        %v1978 = vadd.f32 %v1240, 1.0
        %v1979 = vlog2.pop %v1978
        %v1980 = vmul.f32 %v1979, 0.6931472
        %v1981 = vmul.f32 -0.5, %v1240
        %v1982 = vadd.f32 %v1981, 1.0
        %v1983 = vmul.f32 %v1982, %v1240
        %v1984 = vand.u32 2147483647, %v1240
        %vm1985 = vcmp.lt.f32.partialorder %v1984, 0.0004427343
        %v1986 = vsel %vm1985, %v1983, %v1980
        %v1987 = vadd.f32 %v1242, 1.0
        %v1988 = vlog2.pop %v1987
        %v1989 = vmul.f32 %v1988, 0.6931472
        %v1990 = vmul.f32 -0.5, %v1242
        %v1991 = vadd.f32 %v1990, 1.0
        %v1992 = vmul.f32 %v1991, %v1242
        %v1993 = vand.u32 2147483647, %v1242
        %vm1994 = vcmp.lt.f32.partialorder %v1993, 0.0004427343
        %v1995 = vsel %vm1994, %v1992, %v1989
        %v1996 = vadd.f32 %v1244, 1.0
        %v1997 = vlog2.pop %v1996
        %v1998 = vmul.f32 %v1997, 0.6931472
        %v1999 = vmul.f32 -0.5, %v1244
        %v2000 = vadd.f32 %v1999, 1.0
        %v2001 = vmul.f32 %v2000, %v1244
        %v2002 = vand.u32 2147483647, %v1244
        %vm2003 = vcmp.lt.f32.partialorder %v2002, 0.0004427343
        %v2004 = vsel %vm2003, %v2001, %v1998
        %v2005 = vadd.f32 %v1246, 1.0
        %v2006 = vlog2.pop %v2005
        %v2007 = vmul.f32 %v2006, 0.6931472
        %v2008 = vmul.f32 -0.5, %v1246
        %v2009 = vadd.f32 %v2008, 1.0
        %v2010 = vmul.f32 %v2009, %v1246
        %v2011 = vand.u32 2147483647, %v1246
        %vm2012 = vcmp.lt.f32.partialorder %v2011, 0.0004427343
        %v2013 = vsel %vm2012, %v2010, %v2007
        %v2014 = vadd.f32 %v1248, 1.0
        %v2015 = vlog2.pop %v2014
        %v2016 = vmul.f32 %v2015, 0.6931472
        %v2017 = vmul.f32 -0.5, %v1248
        %v2018 = vadd.f32 %v2017, 1.0
        %v2019 = vmul.f32 %v2018, %v1248
        %v2020 = vand.u32 2147483647, %v1248
        %vm2021 = vcmp.lt.f32.partialorder %v2020, 0.0004427343
        %v2022 = vsel %vm2021, %v2019, %v2016
        %v2023 = vadd.f32 %v1250, 1.0
        %v2024 = vlog2.pop %v2023
        %v2025 = vmul.f32 %v2024, 0.6931472
        %v2026 = vmul.f32 -0.5, %v1250
        %v2027 = vadd.f32 %v2026, 1.0
        %v2028 = vmul.f32 %v2027, %v1250
        %v2029 = vand.u32 2147483647, %v1250
        %vm2030 = vcmp.lt.f32.partialorder %v2029, 0.0004427343
        %v2031 = vsel %vm2030, %v2028, %v2025
        %v2032 = vadd.f32 %v1252, 1.0
        %v2033 = vlog2.pop %v2032
        %v2034 = vmul.f32 %v2033, 0.6931472
        %v2035 = vmul.f32 -0.5, %v1252
        %v2036 = vadd.f32 %v2035, 1.0
        %v2037 = vmul.f32 %v2036, %v1252
        %v2038 = vand.u32 2147483647, %v1252
        %vm2039 = vcmp.lt.f32.partialorder %v2038, 0.0004427343
        %v2040 = vsel %vm2039, %v2037, %v2034
        %v2041 = vadd.f32 %v1254, 1.0
        %v2042 = vlog2.pop %v2041
        %v2043 = vmul.f32 %v2042, 0.6931472
        %v2044 = vmul.f32 -0.5, %v1254
        %v2045 = vadd.f32 %v2044, 1.0
        %v2046 = vmul.f32 %v2045, %v1254
        %v2047 = vand.u32 2147483647, %v1254
        %vm2048 = vcmp.lt.f32.partialorder %v2047, 0.0004427343
        %v2049 = vsel %vm2048, %v2046, %v2043
        %v2050 = vadd.f32 %v1256, 1.0
        %v2051 = vlog2.pop %v2050
        %v2052 = vmul.f32 %v2051, 0.6931472
        %v2053 = vmul.f32 -0.5, %v1256
        %v2054 = vadd.f32 %v2053, 1.0
        %v2055 = vmul.f32 %v2054, %v1256
        %v2056 = vand.u32 2147483647, %v1256
        %vm2057 = vcmp.lt.f32.partialorder %v2056, 0.0004427343
        %v2058 = vsel %vm2057, %v2055, %v2052
        %v2059 = vadd.f32 %v1258, 1.0
        %v2060 = vlog2.pop %v2059
        %v2061 = vmul.f32 %v2060, 0.6931472
        %v2062 = vmul.f32 -0.5, %v1258
        %v2063 = vadd.f32 %v2062, 1.0
        %v2064 = vmul.f32 %v2063, %v1258
        %v2065 = vand.u32 2147483647, %v1258
        %vm2066 = vcmp.lt.f32.partialorder %v2065, 0.0004427343
        %v2067 = vsel %vm2066, %v2064, %v2061
        %v2068 = vadd.f32 %v1260, 1.0
        %v2069 = vlog2.pop %v2068
        %v2070 = vmul.f32 %v2069, 0.6931472
        %v2071 = vmul.f32 -0.5, %v1260
        %v2072 = vadd.f32 %v2071, 1.0
        %v2073 = vmul.f32 %v2072, %v1260
        %v2074 = vand.u32 2147483647, %v1260
        %vm2075 = vcmp.lt.f32.partialorder %v2074, 0.0004427343
        %v2076 = vsel %vm2075, %v2073, %v2070
        %v2077 = vadd.f32 %v1262, 1.0
        %v2078 = vlog2.pop %v2077
        %v2079 = vmul.f32 %v2078, 0.6931472
        %v2080 = vmul.f32 -0.5, %v1262
        %v2081 = vadd.f32 %v2080, 1.0
        %v2082 = vmul.f32 %v2081, %v1262
        %v2083 = vand.u32 2147483647, %v1262
        %vm2084 = vcmp.lt.f32.partialorder %v2083, 0.0004427343
        %v2085 = vsel %vm2084, %v2082, %v2079
        %v2086 = vadd.f32 %v1264, 1.0
        %v2087 = vlog2.pop %v2086
        %v2088 = vmul.f32 %v2087, 0.6931472
        %v2089 = vmul.f32 -0.5, %v1264
        %v2090 = vadd.f32 %v2089, 1.0
        %v2091 = vmul.f32 %v2090, %v1264
        %v2092 = vand.u32 2147483647, %v1264
        %vm2093 = vcmp.lt.f32.partialorder %v2092, 0.0004427343
        %v2094 = vsel %vm2093, %v2091, %v2088
        %v2095 = vadd.f32 %v1266, 1.0
        %v2096 = vlog2.pop %v2095
        %v2097 = vmul.f32 %v2096, 0.6931472
        %v2098 = vmul.f32 -0.5, %v1266
        %v2099 = vadd.f32 %v2098, 1.0
        %v2100 = vmul.f32 %v2099, %v1266
        %v2101 = vand.u32 2147483647, %v1266
        %vm2102 = vcmp.lt.f32.partialorder %v2101, 0.0004427343
        %v2103 = vsel %vm2102, %v2100, %v2097
        %v2104 = vadd.f32 %v1268, 1.0
        %v2105 = vlog2.pop %v2104
        %v2106 = vmul.f32 %v2105, 0.6931472
        %v2107 = vmul.f32 -0.5, %v1268
        %v2108 = vadd.f32 %v2107, 1.0
        %v2109 = vmul.f32 %v2108, %v1268
        %v2110 = vand.u32 2147483647, %v1268
        %vm2111 = vcmp.lt.f32.partialorder %v2110, 0.0004427343
        %v2112 = vsel %vm2111, %v2109, %v2106
        %v2113 = vadd.f32 %v1270, 1.0
        %v2114 = vlog2.pop %v2113
        %v2115 = vmul.f32 %v2114, 0.6931472
        %v2116 = vmul.f32 -0.5, %v1270
        %v2117 = vadd.f32 %v2116, 1.0
        %v2118 = vmul.f32 %v2117, %v1270
        %v2119 = vand.u32 2147483647, %v1270
        %vm2120 = vcmp.lt.f32.partialorder %v2119, 0.0004427343
        %v2121 = vsel %vm2120, %v2118, %v2115
        %v2122 = vadd.f32 %v1272, 1.0
        %v2123 = vlog2.pop %v2122
        %v2124 = vmul.f32 %v2123, 0.6931472
        %v2125 = vmul.f32 -0.5, %v1272
        %v2126 = vadd.f32 %v2125, 1.0
        %v2127 = vmul.f32 %v2126, %v1272
        %v2128 = vand.u32 2147483647, %v1272
        %vm2129 = vcmp.lt.f32.partialorder %v2128, 0.0004427343
        %v2130 = vsel %vm2129, %v2127, %v2124
        %v2131 = vadd.f32 %v1274, 1.0
        %v2132 = vlog2.pop %v2131
        %v2133 = vmul.f32 %v2132, 0.6931472
        %v2134 = vmul.f32 -0.5, %v1274
        %v2135 = vadd.f32 %v2134, 1.0
        %v2136 = vmul.f32 %v2135, %v1274
        %v2137 = vand.u32 2147483647, %v1274
        %vm2138 = vcmp.lt.f32.partialorder %v2137, 0.0004427343
        %v2139 = vsel %vm2138, %v2136, %v2133
        %v2140 = vadd.f32 %v1276, 1.0
        %v2141 = vlog2.pop %v2140
        %v2142 = vmul.f32 %v2141, 0.6931472
        %v2143 = vmul.f32 -0.5, %v1276
        %v2144 = vadd.f32 %v2143, 1.0
        %v2145 = vmul.f32 %v2144, %v1276
        %v2146 = vand.u32 2147483647, %v1276
        %vm2147 = vcmp.lt.f32.partialorder %v2146, 0.0004427343
        %v2148 = vsel %vm2147, %v2145, %v2142
        %v2149 = vadd.f32 %v1278, 1.0
        %v2150 = vlog2.pop %v2149
        %v2151 = vmul.f32 %v2150, 0.6931472
        %v2152 = vmul.f32 -0.5, %v1278
        %v2153 = vadd.f32 %v2152, 1.0
        %v2154 = vmul.f32 %v2153, %v1278
        %v2155 = vand.u32 2147483647, %v1278
        %vm2156 = vcmp.lt.f32.partialorder %v2155, 0.0004427343
        %v2157 = vsel %vm2156, %v2154, %v2151
        %v2158 = vadd.f32 %v1280, 1.0
        %v2159 = vlog2.pop %v2158
        %v2160 = vmul.f32 %v2159, 0.6931472
        %v2161 = vmul.f32 -0.5, %v1280
        %v2162 = vadd.f32 %v2161, 1.0
        %v2163 = vmul.f32 %v2162, %v1280
        %v2164 = vand.u32 2147483647, %v1280
        %vm2165 = vcmp.lt.f32.partialorder %v2164, 0.0004427343
        %v2166 = vsel %vm2165, %v2163, %v2160
        %v2167 = vadd.f32 %v1282, 1.0
        %v2168 = vlog2.pop %v2167
        %v2169 = vmul.f32 %v2168, 0.6931472
        %v2170 = vmul.f32 -0.5, %v1282
        %v2171 = vadd.f32 %v2170, 1.0
        %v2172 = vmul.f32 %v2171, %v1282
        %v2173 = vand.u32 2147483647, %v1282
        %vm2174 = vcmp.lt.f32.partialorder %v2173, 0.0004427343
        %v2175 = vsel %vm2174, %v2172, %v2169
        %v2176 = vadd.f32 %v1284, 1.0
        %v2177 = vlog2.pop %v2176
        %v2178 = vmul.f32 %v2177, 0.6931472
        %v2179 = vmul.f32 -0.5, %v1284
        %v2180 = vadd.f32 %v2179, 1.0
        %v2181 = vmul.f32 %v2180, %v1284
        %v2182 = vand.u32 2147483647, %v1284
        %vm2183 = vcmp.lt.f32.partialorder %v2182, 0.0004427343
        %v2184 = vsel %vm2183, %v2181, %v2178
        %v2185 = vadd.f32 %v1286, 1.0
        %v2186 = vlog2.pop %v2185
        %v2187 = vmul.f32 %v2186, 0.6931472
        %v2188 = vmul.f32 -0.5, %v1286
        %v2189 = vadd.f32 %v2188, 1.0
        %v2190 = vmul.f32 %v2189, %v1286
        %v2191 = vand.u32 2147483647, %v1286
        %vm2192 = vcmp.lt.f32.partialorder %v2191, 0.0004427343
        %v2193 = vsel %vm2192, %v2190, %v2187
        %v2194 = vadd.f32 %v1288, 1.0
        %v2195 = vlog2.pop %v2194
        %v2196 = vmul.f32 %v2195, 0.6931472
        %v2197 = vmul.f32 -0.5, %v1288
        %v2198 = vadd.f32 %v2197, 1.0
        %v2199 = vmul.f32 %v2198, %v1288
        %v2200 = vand.u32 2147483647, %v1288
        %vm2201 = vcmp.lt.f32.partialorder %v2200, 0.0004427343
        %v2202 = vsel %vm2201, %v2199, %v2196
        %v2203 = vadd.f32 %v1290, 1.0
        %v2204 = vlog2.pop %v2203
        %v2205 = vmul.f32 %v2204, 0.6931472
        %v2206 = vmul.f32 -0.5, %v1290
        %v2207 = vadd.f32 %v2206, 1.0
        %v2208 = vmul.f32 %v2207, %v1290
        %v2209 = vand.u32 2147483647, %v1290
        %vm2210 = vcmp.lt.f32.partialorder %v2209, 0.0004427343
        %v2211 = vsel %vm2210, %v2208, %v2205
        %v2212 = vadd.f32 %v1292, 1.0
        %v2213 = vlog2.pop %v2212
        %v2214 = vmul.f32 %v2213, 0.6931472
        %v2215 = vmul.f32 -0.5, %v1292
        %v2216 = vadd.f32 %v2215, 1.0
        %v2217 = vmul.f32 %v2216, %v1292
        %v2218 = vand.u32 2147483647, %v1292
        %vm2219 = vcmp.lt.f32.partialorder %v2218, 0.0004427343
        %v2220 = vsel %vm2219, %v2217, %v2214
        %v2221 = vadd.f32 %v1294, 1.0
        %v2222 = vlog2.pop %v2221
        %v2223 = vmul.f32 %v2222, 0.6931472
        %v2224 = vmul.f32 -0.5, %v1294
        %v2225 = vadd.f32 %v2224, 1.0
        %v2226 = vmul.f32 %v2225, %v1294
        %v2227 = vand.u32 2147483647, %v1294
        %vm2228 = vcmp.lt.f32.partialorder %v2227, 0.0004427343
        %v2229 = vsel %vm2228, %v2226, %v2223
        %v2230 = vadd.f32 %v1296, 1.0
        %v2231 = vlog2.pop %v2230
        %v2232 = vmul.f32 %v2231, 0.6931472
        %v2233 = vmul.f32 -0.5, %v1296
        %v2234 = vadd.f32 %v2233, 1.0
        %v2235 = vmul.f32 %v2234, %v1296
        %v2236 = vand.u32 2147483647, %v1296
        %vm2237 = vcmp.lt.f32.partialorder %v2236, 0.0004427343
        %v2238 = vsel %vm2237, %v2235, %v2232
        %v2239 = vadd.f32 %v1298, 1.0
        %v2240 = vlog2.pop %v2239
        %v2241 = vmul.f32 %v2240, 0.6931472
        %v2242 = vmul.f32 -0.5, %v1298
        %v2243 = vadd.f32 %v2242, 1.0
        %v2244 = vmul.f32 %v2243, %v1298
        %v2245 = vand.u32 2147483647, %v1298
        %vm2246 = vcmp.lt.f32.partialorder %v2245, 0.0004427343
        %v2247 = vsel %vm2246, %v2244, %v2241
        %v2248 = vadd.f32 %v1300, 1.0
        %v2249 = vlog2.pop %v2248
        %v2250 = vmul.f32 %v2249, 0.6931472
        %v2251 = vmul.f32 -0.5, %v1300
        %v2252 = vadd.f32 %v2251, 1.0
        %v2253 = vmul.f32 %v2252, %v1300
        %v2254 = vand.u32 2147483647, %v1300
        %vm2255 = vcmp.lt.f32.partialorder %v2254, 0.0004427343
        %v2256 = vsel %vm2255, %v2253, %v2250
        %v2257 = vadd.f32 %v1302, 1.0
        %v2258 = vlog2.pop %v2257
        %v2259 = vmul.f32 %v2258, 0.6931472
        %v2260 = vmul.f32 -0.5, %v1302
        %v2261 = vadd.f32 %v2260, 1.0
        %v2262 = vmul.f32 %v2261, %v1302
        %v2263 = vand.u32 2147483647, %v1302
        %vm2264 = vcmp.lt.f32.partialorder %v2263, 0.0004427343
        %v2265 = vsel %vm2264, %v2262, %v2259
        %v2266 = vadd.f32 %v1304, 1.0
        %v2267 = vlog2.pop %v2266
        %v2268 = vmul.f32 %v2267, 0.6931472
        %v2269 = vmul.f32 -0.5, %v1304
        %v2270 = vadd.f32 %v2269, 1.0
        %v2271 = vmul.f32 %v2270, %v1304
        %v2272 = vand.u32 2147483647, %v1304
        %vm2273 = vcmp.lt.f32.partialorder %v2272, 0.0004427343
        %v2274 = vsel %vm2273, %v2271, %v2268
        %v2275 = vadd.f32 %v1306, 1.0
        %v2276 = vlog2.pop %v2275
        %v2277 = vmul.f32 %v2276, 0.6931472
        %v2278 = vmul.f32 -0.5, %v1306
        %v2279 = vadd.f32 %v2278, 1.0
        %v2280 = vmul.f32 %v2279, %v1306
        %v2281 = vand.u32 2147483647, %v1306
        %vm2282 = vcmp.lt.f32.partialorder %v2281, 0.0004427343
        %v2283 = vsel %vm2282, %v2280, %v2277
        %v2284 = vadd.f32 %v1308, 1.0
        %v2285 = vlog2.pop %v2284
        %v2286 = vmul.f32 %v2285, 0.6931472
        %v2287 = vmul.f32 -0.5, %v1308
        %v2288 = vadd.f32 %v2287, 1.0
        %v2289 = vmul.f32 %v2288, %v1308
        %v2290 = vand.u32 2147483647, %v1308
        %vm2291 = vcmp.lt.f32.partialorder %v2290, 0.0004427343
        %v2292 = vsel %vm2291, %v2289, %v2286
        %v2293 = vadd.f32 %v1310, 1.0
        %v2294 = vlog2.pop %v2293
        %v2295 = vmul.f32 %v2294, 0.6931472
        %v2296 = vmul.f32 -0.5, %v1310
        %v2297 = vadd.f32 %v2296, 1.0
        %v2298 = vmul.f32 %v2297, %v1310
        %v2299 = vand.u32 2147483647, %v1310
        %vm2300 = vcmp.lt.f32.partialorder %v2299, 0.0004427343
        %v2301 = vsel %vm2300, %v2298, %v2295
        %v2302 = vadd.f32 %v1312, 1.0
        %v2303 = vlog2.pop %v2302
        %v2304 = vmul.f32 %v2303, 0.6931472
        %v2305 = vmul.f32 -0.5, %v1312
        %v2306 = vadd.f32 %v2305, 1.0
        %v2307 = vmul.f32 %v2306, %v1312
        %v2308 = vand.u32 2147483647, %v1312
        %vm2309 = vcmp.lt.f32.partialorder %v2308, 0.0004427343
        %v2310 = vsel %vm2309, %v2307, %v2304
        %v2311 = vadd.f32 %v1314, 1.0
        %v2312 = vlog2.pop %v2311
        %v2313 = vmul.f32 %v2312, 0.6931472
        %v2314 = vmul.f32 -0.5, %v1314
        %v2315 = vadd.f32 %v2314, 1.0
        %v2316 = vmul.f32 %v2315, %v1314
        %v2317 = vand.u32 2147483647, %v1314
        %vm2318 = vcmp.lt.f32.partialorder %v2317, 0.0004427343
        %v2319 = vsel %vm2318, %v2316, %v2313
        %v2320 = vadd.f32 %v1316, 1.0
        %v2321 = vlog2.pop %v2320
        %v2322 = vmul.f32 %v2321, 0.6931472
        %v2323 = vmul.f32 -0.5, %v1316
        %v2324 = vadd.f32 %v2323, 1.0
        %v2325 = vmul.f32 %v2324, %v1316
        %v2326 = vand.u32 2147483647, %v1316
        %vm2327 = vcmp.lt.f32.partialorder %v2326, 0.0004427343
        %v2328 = vsel %vm2327, %v2325, %v2322
        %v2329 = vadd.f32 %v1318, 1.0
        %v2330 = vlog2.pop %v2329
        %v2331 = vmul.f32 %v2330, 0.6931472
        %v2332 = vmul.f32 -0.5, %v1318
        %v2333 = vadd.f32 %v2332, 1.0
        %v2334 = vmul.f32 %v2333, %v1318
        %v2335 = vand.u32 2147483647, %v1318
        %vm2336 = vcmp.lt.f32.partialorder %v2335, 0.0004427343
        %v2337 = vsel %vm2336, %v2334, %v2331
        %v2338 = vadd.f32 %v1320, 1.0
        %v2339 = vlog2.pop %v2338
        %v2340 = vmul.f32 %v2339, 0.6931472
        %v2341 = vmul.f32 -0.5, %v1320
        %v2342 = vadd.f32 %v2341, 1.0
        %v2343 = vmul.f32 %v2342, %v1320
        %v2344 = vand.u32 2147483647, %v1320
        %vm2345 = vcmp.lt.f32.partialorder %v2344, 0.0004427343
        %v2346 = vsel %vm2345, %v2343, %v2340
        %v2347 = vadd.f32 %v1322, 1.0
        %v2348 = vlog2.pop %v2347
        %v2349 = vmul.f32 %v2348, 0.6931472
        %v2350 = vmul.f32 -0.5, %v1322
        %v2351 = vadd.f32 %v2350, 1.0
        %v2352 = vmul.f32 %v2351, %v1322
        %v2353 = vand.u32 2147483647, %v1322
        %vm2354 = vcmp.lt.f32.partialorder %v2353, 0.0004427343
        %v2355 = vsel %vm2354, %v2352, %v2349
        %v2356 = vadd.f32 %v1324, 1.0
        %v2357 = vlog2.pop %v2356
        %v2358 = vmul.f32 %v2357, 0.6931472
        %v2359 = vmul.f32 -0.5, %v1324
        %v2360 = vadd.f32 %v2359, 1.0
        %v2361 = vmul.f32 %v2360, %v1324
        %v2362 = vand.u32 2147483647, %v1324
        %vm2363 = vcmp.lt.f32.partialorder %v2362, 0.0004427343
        %v2364 = vsel %vm2363, %v2361, %v2358
        %v2365 = vadd.f32 %v1326, 1.0
        %v2366 = vlog2.pop %v2365
        %v2367 = vmul.f32 %v2366, 0.6931472
        %v2368 = vmul.f32 -0.5, %v1326
        %v2369 = vadd.f32 %v2368, 1.0
        %v2370 = vmul.f32 %v2369, %v1326
        %v2371 = vand.u32 2147483647, %v1326
        %vm2372 = vcmp.lt.f32.partialorder %v2371, 0.0004427343
        %v2373 = vsel %vm2372, %v2370, %v2367
        %v2374 = vadd.f32 %v1328, 1.0
        %v2375 = vlog2.pop %v2374
        %v2376 = vmul.f32 %v2375, 0.6931472
        %v2377 = vmul.f32 -0.5, %v1328
        %v2378 = vadd.f32 %v2377, 1.0
        %v2379 = vmul.f32 %v2378, %v1328
        %v2380 = vand.u32 2147483647, %v1328
        %vm2381 = vcmp.lt.f32.partialorder %v2380, 0.0004427343
        %v2382 = vsel %vm2381, %v2379, %v2376
        %v2383 = vadd.f32 %v1330, 1.0
        %v2384 = vlog2.pop %v2383
        %v2385 = vmul.f32 %v2384, 0.6931472
        %v2386 = vmul.f32 -0.5, %v1330
        %v2387 = vadd.f32 %v2386, 1.0
        %v2388 = vmul.f32 %v2387, %v1330
        %v2389 = vand.u32 2147483647, %v1330
        %vm2390 = vcmp.lt.f32.partialorder %v2389, 0.0004427343
        %v2391 = vsel %vm2390, %v2388, %v2385
        %v2392 = vadd.f32 %v1332, 1.0
        %v2393 = vlog2.pop %v2392
        %v2394 = vmul.f32 %v2393, 0.6931472
        %v2395 = vmul.f32 -0.5, %v1332
        %v2396 = vadd.f32 %v2395, 1.0
        %v2397 = vmul.f32 %v2396, %v1332
        %v2398 = vand.u32 2147483647, %v1332
        %vm2399 = vcmp.lt.f32.partialorder %v2398, 0.0004427343
        %v2400 = vsel %vm2399, %v2397, %v2394
        %v2401 = vadd.f32 %v1334, 1.0
        %v2402 = vlog2.pop %v2401
        %v2403 = vmul.f32 %v2402, 0.6931472
        %v2404 = vmul.f32 -0.5, %v1334
        %v2405 = vadd.f32 %v2404, 1.0
        %v2406 = vmul.f32 %v2405, %v1334
        %v2407 = vand.u32 2147483647, %v1334
        %vm2408 = vcmp.lt.f32.partialorder %v2407, 0.0004427343
        %v2409 = vsel %vm2408, %v2406, %v2403
        %v2410 = vadd.f32 %v1336, 1.0
        %v2411 = vlog2.pop %v2410
        %v2412 = vmul.f32 %v2411, 0.6931472
        %v2413 = vmul.f32 -0.5, %v1336
        %v2414 = vadd.f32 %v2413, 1.0
        %v2415 = vmul.f32 %v2414, %v1336
        %v2416 = vand.u32 2147483647, %v1336
        %vm2417 = vcmp.lt.f32.partialorder %v2416, 0.0004427343
        %v2418 = vsel %vm2417, %v2415, %v2412
        %v2419 = vadd.f32 %v1338, 1.0
        %v2420 = vlog2.pop %v2419
        %v2421 = vmul.f32 %v2420, 0.6931472
        %v2422 = vmul.f32 -0.5, %v1338
        %v2423 = vadd.f32 %v2422, 1.0
        %v2424 = vmul.f32 %v2423, %v1338
        %v2425 = vand.u32 2147483647, %v1338
        %vm2426 = vcmp.lt.f32.partialorder %v2425, 0.0004427343
        %v2427 = vsel %vm2426, %v2424, %v2421
        %v2428 = vadd.f32 %v1340, 1.0
        %v2429 = vlog2.pop %v2428
        %v2430 = vmul.f32 %v2429, 0.6931472
        %v2431 = vmul.f32 -0.5, %v1340
        %v2432 = vadd.f32 %v2431, 1.0
        %v2433 = vmul.f32 %v2432, %v1340
        %v2434 = vand.u32 2147483647, %v1340
        %vm2435 = vcmp.lt.f32.partialorder %v2434, 0.0004427343
        %v2436 = vsel %vm2435, %v2433, %v2430
        %v2437 = vadd.f32 %v1342, 1.0
        %v2438 = vlog2.pop %v2437
        %v2439 = vmul.f32 %v2438, 0.6931472
        %v2440 = vmul.f32 -0.5, %v1342
        %v2441 = vadd.f32 %v2440, 1.0
        %v2442 = vmul.f32 %v2441, %v1342
        %v2443 = vand.u32 2147483647, %v1342
        %vm2444 = vcmp.lt.f32.partialorder %v2443, 0.0004427343
        %v2445 = vsel %vm2444, %v2442, %v2439
        %v2446 = vadd.f32 %v1344, 1.0
        %v2447 = vlog2.pop %v2446
        %v2448 = vmul.f32 %v2447, 0.6931472
        %v2449 = vmul.f32 -0.5, %v1344
        %v2450 = vadd.f32 %v2449, 1.0
        %v2451 = vmul.f32 %v2450, %v1344
        %v2452 = vand.u32 2147483647, %v1344
        %vm2453 = vcmp.lt.f32.partialorder %v2452, 0.0004427343
        %v2454 = vsel %vm2453, %v2451, %v2448
        %v2455 = vadd.f32 %v1346, 1.0
        %v2456 = vlog2.pop %v2455
        %v2457 = vmul.f32 %v2456, 0.6931472
        %v2458 = vmul.f32 -0.5, %v1346
        %v2459 = vadd.f32 %v2458, 1.0
        %v2460 = vmul.f32 %v2459, %v1346
        %v2461 = vand.u32 2147483647, %v1346
        %vm2462 = vcmp.lt.f32.partialorder %v2461, 0.0004427343
        %v2463 = vsel %vm2462, %v2460, %v2457
        %v2464 = vadd.f32 %v1348, 1.0
        %v2465 = vlog2.pop %v2464
        %v2466 = vmul.f32 %v2465, 0.6931472
        %v2467 = vmul.f32 -0.5, %v1348
        %v2468 = vadd.f32 %v2467, 1.0
        %v2469 = vmul.f32 %v2468, %v1348
        %v2470 = vand.u32 2147483647, %v1348
        %vm2471 = vcmp.lt.f32.partialorder %v2470, 0.0004427343
        %v2472 = vsel %vm2471, %v2469, %v2466
        %v2473 = vadd.f32 %v1350, 1.0
        %v2474 = vlog2.pop %v2473
        %v2475 = vmul.f32 %v2474, 0.6931472
        %v2476 = vmul.f32 -0.5, %v1350
        %v2477 = vadd.f32 %v2476, 1.0
        %v2478 = vmul.f32 %v2477, %v1350
        %v2479 = vand.u32 2147483647, %v1350
        %vm2480 = vcmp.lt.f32.partialorder %v2479, 0.0004427343
        %v2481 = vsel %vm2480, %v2478, %v2475
        %v2482 = vadd.f32 %v1352, 1.0
        %v2483 = vlog2.pop %v2482
        %v2484 = vmul.f32 %v2483, 0.6931472
        %v2485 = vmul.f32 -0.5, %v1352
        %v2486 = vadd.f32 %v2485, 1.0
        %v2487 = vmul.f32 %v2486, %v1352
        %v2488 = vand.u32 2147483647, %v1352
        %vm2489 = vcmp.lt.f32.partialorder %v2488, 0.0004427343
        %v2490 = vsel %vm2489, %v2487, %v2484
        %v2491 = vadd.f32 %v1354, 1.0
        %v2492 = vlog2.pop %v2491
        %v2493 = vmul.f32 %v2492, 0.6931472
        %v2494 = vmul.f32 -0.5, %v1354
        %v2495 = vadd.f32 %v2494, 1.0
        %v2496 = vmul.f32 %v2495, %v1354
        %v2497 = vand.u32 2147483647, %v1354
        %vm2498 = vcmp.lt.f32.partialorder %v2497, 0.0004427343
        %v2499 = vsel %vm2498, %v2496, %v2493
        %v2500 = vadd.f32 %v1356, 1.0
        %v2501 = vlog2.pop %v2500
        %v2502 = vmul.f32 %v2501, 0.6931472
        %v2503 = vmul.f32 -0.5, %v1356
        %v2504 = vadd.f32 %v2503, 1.0
        %v2505 = vmul.f32 %v2504, %v1356
        %v2506 = vand.u32 2147483647, %v1356
        %vm2507 = vcmp.lt.f32.partialorder %v2506, 0.0004427343
        %v2508 = vsel %vm2507, %v2505, %v2502
        %v2509 = vadd.f32 %v717, %v1365
        %v2510 = vadd.f32 %v718, %v1374
        %v2511 = vadd.f32 %v719, %v1383
        %v2512 = vadd.f32 %v720, %v1392
        %v2513 = vadd.f32 %v721, %v1401
        %v2514 = vadd.f32 %v722, %v1410
        %v2515 = vadd.f32 %v723, %v1419
        %v2516 = vadd.f32 %v724, %v1428
        %v2517 = vadd.f32 %v725, %v1437
        %v2518 = vadd.f32 %v726, %v1446
        %v2519 = vadd.f32 %v727, %v1455
        %v2520 = vadd.f32 %v728, %v1464
        %v2521 = vadd.f32 %v729, %v1473
        %v2522 = vadd.f32 %v730, %v1482
        %v2523 = vadd.f32 %v731, %v1491
        %v2524 = vadd.f32 %v732, %v1500
        %v2525 = vadd.f32 %v733, %v1509
        %v2526 = vadd.f32 %v734, %v1518
        %v2527 = vadd.f32 %v735, %v1527
        %v2528 = vadd.f32 %v736, %v1536
        %v2529 = vadd.f32 %v737, %v1545
        %v2530 = vadd.f32 %v738, %v1554
        %v2531 = vadd.f32 %v739, %v1563
        %v2532 = vadd.f32 %v740, %v1572
        %v2533 = vadd.f32 %v741, %v1581
        %v2534 = vadd.f32 %v742, %v1590
        %v2535 = vadd.f32 %v743, %v1599
        %v2536 = vadd.f32 %v744, %v1608
        %v2537 = vadd.f32 %v745, %v1617
        %v2538 = vadd.f32 %v746, %v1626
        %v2539 = vadd.f32 %v747, %v1635
        %v2540 = vadd.f32 %v748, %v1644
        %v2541 = vadd.f32 %v749, %v1653
        %v2542 = vadd.f32 %v750, %v1662
        %v2543 = vadd.f32 %v751, %v1671
        %v2544 = vadd.f32 %v752, %v1680
        %v2545 = vadd.f32 %v753, %v1689
        %v2546 = vadd.f32 %v754, %v1698
        %v2547 = vadd.f32 %v755, %v1707
        %v2548 = vadd.f32 %v756, %v1716
        %v2549 = vadd.f32 %v757, %v1725
        %v2550 = vadd.f32 %v758, %v1734
        %v2551 = vadd.f32 %v759, %v1743
        %v2552 = vadd.f32 %v760, %v1752
        %v2553 = vadd.f32 %v761, %v1761
        %v2554 = vadd.f32 %v762, %v1770
        %v2555 = vadd.f32 %v763, %v1779
        %v2556 = vadd.f32 %v764, %v1788
        %v2557 = vadd.f32 %v765, %v1797
        %v2558 = vadd.f32 %v766, %v1806
        %v2559 = vadd.f32 %v767, %v1815
        %v2560 = vadd.f32 %v768, %v1824
        %v2561 = vadd.f32 %v769, %v1833
        %v2562 = vadd.f32 %v770, %v1842
        %v2563 = vadd.f32 %v771, %v1851
        %v2564 = vadd.f32 %v772, %v1860
        %v2565 = vadd.f32 %v773, %v1869
        %v2566 = vadd.f32 %v774, %v1878
        %v2567 = vadd.f32 %v775, %v1887
        %v2568 = vadd.f32 %v776, %v1896
        %v2569 = vadd.f32 %v777, %v1905
        %v2570 = vadd.f32 %v778, %v1914
        %v2571 = vadd.f32 %v779, %v1923
        %v2572 = vadd.f32 %v780, %v1932
        %v2573 = vadd.f32 %v781, %v1941
        %v2574 = vadd.f32 %v782, %v1950
        %v2575 = vadd.f32 %v783, %v1959
        %v2576 = vadd.f32 %v784, %v1968
        %v2577 = vadd.f32 %v785, %v1977
        %v2578 = vadd.f32 %v786, %v1986
        %v2579 = vadd.f32 %v787, %v1995
        %v2580 = vadd.f32 %v788, %v2004
        %v2581 = vadd.f32 %v789, %v2013
        %v2582 = vadd.f32 %v790, %v2022
        %v2583 = vadd.f32 %v791, %v2031
        %v2584 = vadd.f32 %v792, %v2040
        %v2585 = vadd.f32 %v793, %v2049
        %v2586 = vadd.f32 %v794, %v2058
        %v2587 = vadd.f32 %v795, %v2067
        %v2588 = vadd.f32 %v796, %v2076
        %v2589 = vadd.f32 %v797, %v2085
        %v2590 = vadd.f32 %v798, %v2094
        %v2591 = vadd.f32 %v799, %v2103
        %v2592 = vadd.f32 %v800, %v2112
        %v2593 = vadd.f32 %v801, %v2121
        %v2594 = vadd.f32 %v802, %v2130
        %v2595 = vadd.f32 %v803, %v2139
        %v2596 = vadd.f32 %v804, %v2148
        %v2597 = vadd.f32 %v805, %v2157
        %v2598 = vadd.f32 %v806, %v2166
        %v2599 = vadd.f32 %v807, %v2175
        %v2600 = vadd.f32 %v808, %v2184
        %v2601 = vadd.f32 %v809, %v2193
        %v2602 = vadd.f32 %v810, %v2202
        %v2603 = vadd.f32 %v811, %v2211
        %v2604 = vadd.f32 %v812, %v2220
        %v2605 = vadd.f32 %v813, %v2229
        %v2606 = vadd.f32 %v814, %v2238
        %v2607 = vadd.f32 %v815, %v2247
        %v2608 = vadd.f32 %v816, %v2256
        %v2609 = vadd.f32 %v817, %v2265
        %v2610 = vadd.f32 %v818, %v2274
        %v2611 = vadd.f32 %v819, %v2283
        %v2612 = vadd.f32 %v820, %v2292
        %v2613 = vadd.f32 %v821, %v2301
        %v2614 = vadd.f32 %v822, %v2310
        %v2615 = vadd.f32 %v823, %v2319
        %v2616 = vadd.f32 %v824, %v2328
        %v2617 = vadd.f32 %v825, %v2337
        %v2618 = vadd.f32 %v826, %v2346
        %v2619 = vadd.f32 %v827, %v2355
        %v2620 = vadd.f32 %v828, %v2364
        %v2621 = vadd.f32 %v829, %v2373
        %v2622 = vadd.f32 %v830, %v2382
        %v2623 = vadd.f32 %v831, %v2391
        %v2624 = vadd.f32 %v832, %v2400
        %v2625 = vadd.f32 %v833, %v2409
        %v2626 = vadd.f32 %v834, %v2418
        %v2627 = vadd.f32 %v835, %v2427
        %v2628 = vadd.f32 %v836, %v2436
        %v2629 = vadd.f32 %v837, %v2445
        %v2630 = vadd.f32 %v838, %v2454
        %v2631 = vadd.f32 %v839, %v2463
        %v2632 = vadd.f32 %v840, %v2472
        %v2633 = vadd.f32 %v841, %v2481
        %v2634 = vadd.f32 %v842, %v2490
        %v2635 = vadd.f32 %v843, %v2499
        %v2636 = vadd.f32 %v844, %v2508
        %vm2637 = vcmp.gt.f32.partialorder %v333, 0.5
        %vm2638 = vcmp.gt.f32.partialorder %v334, 0.5
        %vm2639 = vcmp.gt.f32.partialorder %v335, 0.5
        %vm2640 = vcmp.gt.f32.partialorder %v336, 0.5
        %vm2641 = vcmp.gt.f32.partialorder %v337, 0.5
        %vm2642 = vcmp.gt.f32.partialorder %v338, 0.5
        %vm2643 = vcmp.gt.f32.partialorder %v339, 0.5
        %vm2644 = vcmp.gt.f32.partialorder %v340, 0.5
        %vm2645 = vcmp.gt.f32.partialorder %v341, 0.5
        %vm2646 = vcmp.gt.f32.partialorder %v342, 0.5
        %vm2647 = vcmp.gt.f32.partialorder %v343, 0.5
        %vm2648 = vcmp.gt.f32.partialorder %v344, 0.5
        %vm2649 = vcmp.gt.f32.partialorder %v345, 0.5
        %vm2650 = vcmp.gt.f32.partialorder %v346, 0.5
        %vm2651 = vcmp.gt.f32.partialorder %v347, 0.5
        %vm2652 = vcmp.gt.f32.partialorder %v348, 0.5
        %vm2653 = vcmp.gt.f32.partialorder %v349, 0.5
        %vm2654 = vcmp.gt.f32.partialorder %v350, 0.5
        %vm2655 = vcmp.gt.f32.partialorder %v351, 0.5
        %vm2656 = vcmp.gt.f32.partialorder %v352, 0.5
        %vm2657 = vcmp.gt.f32.partialorder %v353, 0.5
        %vm2658 = vcmp.gt.f32.partialorder %v354, 0.5
        %vm2659 = vcmp.gt.f32.partialorder %v355, 0.5
        %vm2660 = vcmp.gt.f32.partialorder %v356, 0.5
        %vm2661 = vcmp.gt.f32.partialorder %v357, 0.5
        %vm2662 = vcmp.gt.f32.partialorder %v358, 0.5
        %vm2663 = vcmp.gt.f32.partialorder %v359, 0.5
        %vm2664 = vcmp.gt.f32.partialorder %v360, 0.5
        %vm2665 = vcmp.gt.f32.partialorder %v361, 0.5
        %vm2666 = vcmp.gt.f32.partialorder %v362, 0.5
        %vm2667 = vcmp.gt.f32.partialorder %v363, 0.5
        %vm2668 = vcmp.gt.f32.partialorder %v364, 0.5
        %vm2669 = vcmp.gt.f32.partialorder %v365, 0.5
        %vm2670 = vcmp.gt.f32.partialorder %v366, 0.5
        %vm2671 = vcmp.gt.f32.partialorder %v367, 0.5
        %vm2672 = vcmp.gt.f32.partialorder %v368, 0.5
        %vm2673 = vcmp.gt.f32.partialorder %v369, 0.5
        %vm2674 = vcmp.gt.f32.partialorder %v370, 0.5
        %vm2675 = vcmp.gt.f32.partialorder %v371, 0.5
        %vm2676 = vcmp.gt.f32.partialorder %v372, 0.5
        %vm2677 = vcmp.gt.f32.partialorder %v373, 0.5
        %vm2678 = vcmp.gt.f32.partialorder %v374, 0.5
        %vm2679 = vcmp.gt.f32.partialorder %v375, 0.5
        %vm2680 = vcmp.gt.f32.partialorder %v376, 0.5
        %vm2681 = vcmp.gt.f32.partialorder %v377, 0.5
        %vm2682 = vcmp.gt.f32.partialorder %v378, 0.5
        %vm2683 = vcmp.gt.f32.partialorder %v379, 0.5
        %vm2684 = vcmp.gt.f32.partialorder %v380, 0.5
        %vm2685 = vcmp.gt.f32.partialorder %v381, 0.5
        %vm2686 = vcmp.gt.f32.partialorder %v382, 0.5
        %vm2687 = vcmp.gt.f32.partialorder %v383, 0.5
        %vm2688 = vcmp.gt.f32.partialorder %v384, 0.5
        %vm2689 = vcmp.gt.f32.partialorder %v385, 0.5
        %vm2690 = vcmp.gt.f32.partialorder %v386, 0.5
        %vm2691 = vcmp.gt.f32.partialorder %v387, 0.5
        %vm2692 = vcmp.gt.f32.partialorder %v388, 0.5
        %vm2693 = vcmp.gt.f32.partialorder %v389, 0.5
        %vm2694 = vcmp.gt.f32.partialorder %v390, 0.5
        %vm2695 = vcmp.gt.f32.partialorder %v391, 0.5
        %vm2696 = vcmp.gt.f32.partialorder %v392, 0.5
        %vm2697 = vcmp.gt.f32.partialorder %v393, 0.5
        %vm2698 = vcmp.gt.f32.partialorder %v394, 0.5
        %vm2699 = vcmp.gt.f32.partialorder %v395, 0.5
        %vm2700 = vcmp.gt.f32.partialorder %v396, 0.5
        %vm2701 = vcmp.gt.f32.partialorder %v397, 0.5
        %vm2702 = vcmp.gt.f32.partialorder %v398, 0.5
        %vm2703 = vcmp.gt.f32.partialorder %v399, 0.5
        %vm2704 = vcmp.gt.f32.partialorder %v400, 0.5
        %vm2705 = vcmp.gt.f32.partialorder %v401, 0.5
        %vm2706 = vcmp.gt.f32.partialorder %v402, 0.5
        %vm2707 = vcmp.gt.f32.partialorder %v403, 0.5
        %vm2708 = vcmp.gt.f32.partialorder %v404, 0.5
        %vm2709 = vcmp.gt.f32.partialorder %v405, 0.5
        %vm2710 = vcmp.gt.f32.partialorder %v406, 0.5
        %vm2711 = vcmp.gt.f32.partialorder %v407, 0.5
        %vm2712 = vcmp.gt.f32.partialorder %v408, 0.5
        %vm2713 = vcmp.gt.f32.partialorder %v409, 0.5
        %vm2714 = vcmp.gt.f32.partialorder %v410, 0.5
        %vm2715 = vcmp.gt.f32.partialorder %v411, 0.5
        %vm2716 = vcmp.gt.f32.partialorder %v412, 0.5
        %vm2717 = vcmp.gt.f32.partialorder %v413, 0.5
        %vm2718 = vcmp.gt.f32.partialorder %v414, 0.5
        %vm2719 = vcmp.gt.f32.partialorder %v415, 0.5
        %vm2720 = vcmp.gt.f32.partialorder %v416, 0.5
        %vm2721 = vcmp.gt.f32.partialorder %v417, 0.5
        %vm2722 = vcmp.gt.f32.partialorder %v418, 0.5
        %vm2723 = vcmp.gt.f32.partialorder %v419, 0.5
        %vm2724 = vcmp.gt.f32.partialorder %v420, 0.5
        %vm2725 = vcmp.gt.f32.partialorder %v421, 0.5
        %vm2726 = vcmp.gt.f32.partialorder %v422, 0.5
        %vm2727 = vcmp.gt.f32.partialorder %v423, 0.5
        %vm2728 = vcmp.gt.f32.partialorder %v424, 0.5
        %vm2729 = vcmp.gt.f32.partialorder %v425, 0.5
        %vm2730 = vcmp.gt.f32.partialorder %v426, 0.5
        %vm2731 = vcmp.gt.f32.partialorder %v427, 0.5
        %vm2732 = vcmp.gt.f32.partialorder %v428, 0.5
        %vm2733 = vcmp.gt.f32.partialorder %v429, 0.5
        %vm2734 = vcmp.gt.f32.partialorder %v430, 0.5
        %vm2735 = vcmp.gt.f32.partialorder %v431, 0.5
        %vm2736 = vcmp.gt.f32.partialorder %v432, 0.5
        %vm2737 = vcmp.gt.f32.partialorder %v433, 0.5
        %vm2738 = vcmp.gt.f32.partialorder %v434, 0.5
        %vm2739 = vcmp.gt.f32.partialorder %v435, 0.5
        %vm2740 = vcmp.gt.f32.partialorder %v436, 0.5
        %vm2741 = vcmp.gt.f32.partialorder %v437, 0.5
        %vm2742 = vcmp.gt.f32.partialorder %v438, 0.5
        %vm2743 = vcmp.gt.f32.partialorder %v439, 0.5
        %vm2744 = vcmp.gt.f32.partialorder %v440, 0.5
        %vm2745 = vcmp.gt.f32.partialorder %v441, 0.5
        %vm2746 = vcmp.gt.f32.partialorder %v442, 0.5
        %vm2747 = vcmp.gt.f32.partialorder %v443, 0.5
        %vm2748 = vcmp.gt.f32.partialorder %v444, 0.5
        %vm2749 = vcmp.gt.f32.partialorder %v445, 0.5
        %vm2750 = vcmp.gt.f32.partialorder %v446, 0.5
        %vm2751 = vcmp.gt.f32.partialorder %v447, 0.5
        %vm2752 = vcmp.gt.f32.partialorder %v448, 0.5
        %vm2753 = vcmp.gt.f32.partialorder %v449, 0.5
        %vm2754 = vcmp.gt.f32.partialorder %v450, 0.5
        %vm2755 = vcmp.gt.f32.partialorder %v451, 0.5
        %vm2756 = vcmp.gt.f32.partialorder %v452, 0.5
        %vm2757 = vcmp.gt.f32.partialorder %v453, 0.5
        %vm2758 = vcmp.gt.f32.partialorder %v454, 0.5
        %vm2759 = vcmp.gt.f32.partialorder %v455, 0.5
        %vm2760 = vcmp.gt.f32.partialorder %v456, 0.5
        %vm2761 = vcmp.gt.f32.partialorder %v457, 0.5
        %vm2762 = vcmp.gt.f32.partialorder %v458, 0.5
        %vm2763 = vcmp.gt.f32.partialorder %v459, 0.5
        %vm2764 = vcmp.gt.f32.partialorder %v460, 0.5
        %v2765 = vsel %vm2637, 0.75, 0.25
        %v2766 = vsel %vm2638, 0.75, 0.25
        %v2767 = vsel %vm2639, 0.75, 0.25
        %v2768 = vsel %vm2640, 0.75, 0.25
        %v2769 = vsel %vm2641, 0.75, 0.25
        %v2770 = vsel %vm2642, 0.75, 0.25
        %v2771 = vsel %vm2643, 0.75, 0.25
        %v2772 = vsel %vm2644, 0.75, 0.25
        %v2773 = vsel %vm2645, 0.75, 0.25
        %v2774 = vsel %vm2646, 0.75, 0.25
        %v2775 = vsel %vm2647, 0.75, 0.25
        %v2776 = vsel %vm2648, 0.75, 0.25
        %v2777 = vsel %vm2649, 0.75, 0.25
        %v2778 = vsel %vm2650, 0.75, 0.25
        %v2779 = vsel %vm2651, 0.75, 0.25
        %v2780 = vsel %vm2652, 0.75, 0.25
        %v2781 = vsel %vm2653, 0.75, 0.25
        %v2782 = vsel %vm2654, 0.75, 0.25
        %v2783 = vsel %vm2655, 0.75, 0.25
        %v2784 = vsel %vm2656, 0.75, 0.25
        %v2785 = vsel %vm2657, 0.75, 0.25
        %v2786 = vsel %vm2658, 0.75, 0.25
        %v2787 = vsel %vm2659, 0.75, 0.25
        %v2788 = vsel %vm2660, 0.75, 0.25
        %v2789 = vsel %vm2661, 0.75, 0.25
        %v2790 = vsel %vm2662, 0.75, 0.25
        %v2791 = vsel %vm2663, 0.75, 0.25
        %v2792 = vsel %vm2664, 0.75, 0.25
        %v2793 = vsel %vm2665, 0.75, 0.25
        %v2794 = vsel %vm2666, 0.75, 0.25
        %v2795 = vsel %vm2667, 0.75, 0.25
        %v2796 = vsel %vm2668, 0.75, 0.25
        %v2797 = vsel %vm2669, 0.75, 0.25
        %v2798 = vsel %vm2670, 0.75, 0.25
        %v2799 = vsel %vm2671, 0.75, 0.25
        %v2800 = vsel %vm2672, 0.75, 0.25
        %v2801 = vsel %vm2673, 0.75, 0.25
        %v2802 = vsel %vm2674, 0.75, 0.25
        %v2803 = vsel %vm2675, 0.75, 0.25
        %v2804 = vsel %vm2676, 0.75, 0.25
        %v2805 = vsel %vm2677, 0.75, 0.25
        %v2806 = vsel %vm2678, 0.75, 0.25
        %v2807 = vsel %vm2679, 0.75, 0.25
        %v2808 = vsel %vm2680, 0.75, 0.25
        %v2809 = vsel %vm2681, 0.75, 0.25
        %v2810 = vsel %vm2682, 0.75, 0.25
        %v2811 = vsel %vm2683, 0.75, 0.25
        %v2812 = vsel %vm2684, 0.75, 0.25
        %v2813 = vsel %vm2685, 0.75, 0.25
        %v2814 = vsel %vm2686, 0.75, 0.25
        %v2815 = vsel %vm2687, 0.75, 0.25
        %v2816 = vsel %vm2688, 0.75, 0.25
        %v2817 = vsel %vm2689, 0.75, 0.25
        %v2818 = vsel %vm2690, 0.75, 0.25
        %v2819 = vsel %vm2691, 0.75, 0.25
        %v2820 = vsel %vm2692, 0.75, 0.25
        %v2821 = vsel %vm2693, 0.75, 0.25
        %v2822 = vsel %vm2694, 0.75, 0.25
        %v2823 = vsel %vm2695, 0.75, 0.25
        %v2824 = vsel %vm2696, 0.75, 0.25
        %v2825 = vsel %vm2697, 0.75, 0.25
        %v2826 = vsel %vm2698, 0.75, 0.25
        %v2827 = vsel %vm2699, 0.75, 0.25
        %v2828 = vsel %vm2700, 0.75, 0.25
        %v2829 = vsel %vm2701, 0.75, 0.25
        %v2830 = vsel %vm2702, 0.75, 0.25
        %v2831 = vsel %vm2703, 0.75, 0.25
        %v2832 = vsel %vm2704, 0.75, 0.25
        %v2833 = vsel %vm2705, 0.75, 0.25
        %v2834 = vsel %vm2706, 0.75, 0.25
        %v2835 = vsel %vm2707, 0.75, 0.25
        %v2836 = vsel %vm2708, 0.75, 0.25
        %v2837 = vsel %vm2709, 0.75, 0.25
        %v2838 = vsel %vm2710, 0.75, 0.25
        %v2839 = vsel %vm2711, 0.75, 0.25
        %v2840 = vsel %vm2712, 0.75, 0.25
        %v2841 = vsel %vm2713, 0.75, 0.25
        %v2842 = vsel %vm2714, 0.75, 0.25
        %v2843 = vsel %vm2715, 0.75, 0.25
        %v2844 = vsel %vm2716, 0.75, 0.25
        %v2845 = vsel %vm2717, 0.75, 0.25
        %v2846 = vsel %vm2718, 0.75, 0.25
        %v2847 = vsel %vm2719, 0.75, 0.25
        %v2848 = vsel %vm2720, 0.75, 0.25
        %v2849 = vsel %vm2721, 0.75, 0.25
        %v2850 = vsel %vm2722, 0.75, 0.25
        %v2851 = vsel %vm2723, 0.75, 0.25
        %v2852 = vsel %vm2724, 0.75, 0.25
        %v2853 = vsel %vm2725, 0.75, 0.25
        %v2854 = vsel %vm2726, 0.75, 0.25
        %v2855 = vsel %vm2727, 0.75, 0.25
        %v2856 = vsel %vm2728, 0.75, 0.25
        %v2857 = vsel %vm2729, 0.75, 0.25
        %v2858 = vsel %vm2730, 0.75, 0.25
        %v2859 = vsel %vm2731, 0.75, 0.25
        %v2860 = vsel %vm2732, 0.75, 0.25
        %v2861 = vsel %vm2733, 0.75, 0.25
        %v2862 = vsel %vm2734, 0.75, 0.25
        %v2863 = vsel %vm2735, 0.75, 0.25
        %v2864 = vsel %vm2736, 0.75, 0.25
        %v2865 = vsel %vm2737, 0.75, 0.25
        %v2866 = vsel %vm2738, 0.75, 0.25
        %v2867 = vsel %vm2739, 0.75, 0.25
        %v2868 = vsel %vm2740, 0.75, 0.25
        %v2869 = vsel %vm2741, 0.75, 0.25
        %v2870 = vsel %vm2742, 0.75, 0.25
        %v2871 = vsel %vm2743, 0.75, 0.25
        %v2872 = vsel %vm2744, 0.75, 0.25
        %v2873 = vsel %vm2745, 0.75, 0.25
        %v2874 = vsel %vm2746, 0.75, 0.25
        %v2875 = vsel %vm2747, 0.75, 0.25
        %v2876 = vsel %vm2748, 0.75, 0.25
        %v2877 = vsel %vm2749, 0.75, 0.25
        %v2878 = vsel %vm2750, 0.75, 0.25
        %v2879 = vsel %vm2751, 0.75, 0.25
        %v2880 = vsel %vm2752, 0.75, 0.25
        %v2881 = vsel %vm2753, 0.75, 0.25
        %v2882 = vsel %vm2754, 0.75, 0.25
        %v2883 = vsel %vm2755, 0.75, 0.25
        %v2884 = vsel %vm2756, 0.75, 0.25
        %v2885 = vsel %vm2757, 0.75, 0.25
        %v2886 = vsel %vm2758, 0.75, 0.25
        %v2887 = vsel %vm2759, 0.75, 0.25
        %v2888 = vsel %vm2760, 0.75, 0.25
        %v2889 = vsel %vm2761, 0.75, 0.25
        %v2890 = vsel %vm2762, 0.75, 0.25
        %v2891 = vsel %vm2763, 0.75, 0.25
        %v2892 = vsel %vm2764, 0.75, 0.25
        %v2893 = vsub.f32 0.0, %v2509
        %v2894 = vsub.f32 0.0, %v2510
        %v2895 = vsub.f32 0.0, %v2511
        %v2896 = vsub.f32 0.0, %v2512
        %v2897 = vsub.f32 0.0, %v2513
        %v2898 = vsub.f32 0.0, %v2514
        %v2899 = vsub.f32 0.0, %v2515
        %v2900 = vsub.f32 0.0, %v2516
        %v2901 = vsub.f32 0.0, %v2517
        %v2902 = vsub.f32 0.0, %v2518
        %v2903 = vsub.f32 0.0, %v2519
        %v2904 = vsub.f32 0.0, %v2520
        %v2905 = vsub.f32 0.0, %v2521
        %v2906 = vsub.f32 0.0, %v2522
        %v2907 = vsub.f32 0.0, %v2523
        %v2908 = vsub.f32 0.0, %v2524
        %v2909 = vsub.f32 0.0, %v2525
        %v2910 = vsub.f32 0.0, %v2526
        %v2911 = vsub.f32 0.0, %v2527
        %v2912 = vsub.f32 0.0, %v2528
        %v2913 = vsub.f32 0.0, %v2529
        %v2914 = vsub.f32 0.0, %v2530
        %v2915 = vsub.f32 0.0, %v2531
        %v2916 = vsub.f32 0.0, %v2532
        %v2917 = vsub.f32 0.0, %v2533
        %v2918 = vsub.f32 0.0, %v2534
        %v2919 = vsub.f32 0.0, %v2535
        %v2920 = vsub.f32 0.0, %v2536
        %v2921 = vsub.f32 0.0, %v2537
        %v2922 = vsub.f32 0.0, %v2538
        %v2923 = vsub.f32 0.0, %v2539
        %v2924 = vsub.f32 0.0, %v2540
        %v2925 = vsub.f32 0.0, %v2541
        %v2926 = vsub.f32 0.0, %v2542
        %v2927 = vsub.f32 0.0, %v2543
        %v2928 = vsub.f32 0.0, %v2544
        %v2929 = vsub.f32 0.0, %v2545
        %v2930 = vsub.f32 0.0, %v2546
        %v2931 = vsub.f32 0.0, %v2547
        %v2932 = vsub.f32 0.0, %v2548
        %v2933 = vsub.f32 0.0, %v2549
        %v2934 = vsub.f32 0.0, %v2550
        %v2935 = vsub.f32 0.0, %v2551
        %v2936 = vsub.f32 0.0, %v2552
        %v2937 = vsub.f32 0.0, %v2553
        %v2938 = vsub.f32 0.0, %v2554
        %v2939 = vsub.f32 0.0, %v2555
        %v2940 = vsub.f32 0.0, %v2556
        %v2941 = vsub.f32 0.0, %v2557
        %v2942 = vsub.f32 0.0, %v2558
        %v2943 = vsub.f32 0.0, %v2559
        %v2944 = vsub.f32 0.0, %v2560
        %v2945 = vsub.f32 0.0, %v2561
        %v2946 = vsub.f32 0.0, %v2562
        %v2947 = vsub.f32 0.0, %v2563
        %v2948 = vsub.f32 0.0, %v2564
        %v2949 = vsub.f32 0.0, %v2565
        %v2950 = vsub.f32 0.0, %v2566
        %v2951 = vsub.f32 0.0, %v2567
        %v2952 = vsub.f32 0.0, %v2568
        %v2953 = vsub.f32 0.0, %v2569
        %v2954 = vsub.f32 0.0, %v2570
        %v2955 = vsub.f32 0.0, %v2571
        %v2956 = vsub.f32 0.0, %v2572
        %v2957 = vsub.f32 0.0, %v2573
        %v2958 = vsub.f32 0.0, %v2574
        %v2959 = vsub.f32 0.0, %v2575
        %v2960 = vsub.f32 0.0, %v2576
        %v2961 = vsub.f32 0.0, %v2577
        %v2962 = vsub.f32 0.0, %v2578
        %v2963 = vsub.f32 0.0, %v2579
        %v2964 = vsub.f32 0.0, %v2580
        %v2965 = vsub.f32 0.0, %v2581
        %v2966 = vsub.f32 0.0, %v2582
        %v2967 = vsub.f32 0.0, %v2583
        %v2968 = vsub.f32 0.0, %v2584
        %v2969 = vsub.f32 0.0, %v2585
        %v2970 = vsub.f32 0.0, %v2586
        %v2971 = vsub.f32 0.0, %v2587
        %v2972 = vsub.f32 0.0, %v2588
        %v2973 = vsub.f32 0.0, %v2589
        %v2974 = vsub.f32 0.0, %v2590
        %v2975 = vsub.f32 0.0, %v2591
        %v2976 = vsub.f32 0.0, %v2592
        %v2977 = vsub.f32 0.0, %v2593
        %v2978 = vsub.f32 0.0, %v2594
        %v2979 = vsub.f32 0.0, %v2595
        %v2980 = vsub.f32 0.0, %v2596
        %v2981 = vsub.f32 0.0, %v2597
        %v2982 = vsub.f32 0.0, %v2598
        %v2983 = vsub.f32 0.0, %v2599
        %v2984 = vsub.f32 0.0, %v2600
        %v2985 = vsub.f32 0.0, %v2601
        %v2986 = vsub.f32 0.0, %v2602
        %v2987 = vsub.f32 0.0, %v2603
        %v2988 = vsub.f32 0.0, %v2604
        %v2989 = vsub.f32 0.0, %v2605
        %v2990 = vsub.f32 0.0, %v2606
        %v2991 = vsub.f32 0.0, %v2607
        %v2992 = vsub.f32 0.0, %v2608
        %v2993 = vsub.f32 0.0, %v2609
        %v2994 = vsub.f32 0.0, %v2610
        %v2995 = vsub.f32 0.0, %v2611
        %v2996 = vsub.f32 0.0, %v2612
        %v2997 = vsub.f32 0.0, %v2613
        %v2998 = vsub.f32 0.0, %v2614
        %v2999 = vsub.f32 0.0, %v2615
        %v3000 = vsub.f32 0.0, %v2616
        %v3001 = vsub.f32 0.0, %v2617
        %v3002 = vsub.f32 0.0, %v2618
        %v3003 = vsub.f32 0.0, %v2619
        %v3004 = vsub.f32 0.0, %v2620
        %v3005 = vsub.f32 0.0, %v2621
        %v3006 = vsub.f32 0.0, %v2622
        %v3007 = vsub.f32 0.0, %v2623
        %v3008 = vsub.f32 0.0, %v2624
        %v3009 = vsub.f32 0.0, %v2625
        %v3010 = vsub.f32 0.0, %v2626
        %v3011 = vsub.f32 0.0, %v2627
        %v3012 = vsub.f32 0.0, %v2628
        %v3013 = vsub.f32 0.0, %v2629
        %v3014 = vsub.f32 0.0, %v2630
        %v3015 = vsub.f32 0.0, %v2631
        %v3016 = vsub.f32 0.0, %v2632
        %v3017 = vsub.f32 0.0, %v2633
        %v3018 = vsub.f32 0.0, %v2634
        %v3019 = vsub.f32 0.0, %v2635
        %v3020 = vsub.f32 0.0, %v2636
        %v3021 = vmul.f32 %v2893, 1.442695
        %v3022 = vpow.pop %v3021
        %v3023 = vmul.f32 %v2894, 1.442695
        %v3024 = vpow.pop %v3023
        %v3025 = vmul.f32 %v2895, 1.442695
        %v3026 = vpow.pop %v3025
        %v3027 = vmul.f32 %v2896, 1.442695
        %v3028 = vpow.pop %v3027
        %v3029 = vmul.f32 %v2897, 1.442695
        %v3030 = vpow.pop %v3029
        %v3031 = vmul.f32 %v2898, 1.442695
        %v3032 = vpow.pop %v3031
        %v3033 = vmul.f32 %v2899, 1.442695
        %v3034 = vpow.pop %v3033
        %v3035 = vmul.f32 %v2900, 1.442695
        %v3036 = vpow.pop %v3035
        %v3037 = vmul.f32 %v2901, 1.442695
        %v3038 = vpow.pop %v3037
        %v3039 = vmul.f32 %v2902, 1.442695
        %v3040 = vpow.pop %v3039
        %v3041 = vmul.f32 %v2903, 1.442695
        %v3042 = vpow.pop %v3041
        %v3043 = vmul.f32 %v2904, 1.442695
        %v3044 = vpow.pop %v3043
        %v3045 = vmul.f32 %v2905, 1.442695
        %v3046 = vpow.pop %v3045
        %v3047 = vmul.f32 %v2906, 1.442695
        %v3048 = vpow.pop %v3047
        %v3049 = vmul.f32 %v2907, 1.442695
        %v3050 = vpow.pop %v3049
        %v3051 = vmul.f32 %v2908, 1.442695
        %v3052 = vpow.pop %v3051
        %v3053 = vmul.f32 %v2909, 1.442695
        %v3054 = vpow.pop %v3053
        %v3055 = vmul.f32 %v2910, 1.442695
        %v3056 = vpow.pop %v3055
        %v3057 = vmul.f32 %v2911, 1.442695
        %v3058 = vpow.pop %v3057
        %v3059 = vmul.f32 %v2912, 1.442695
        %v3060 = vpow.pop %v3059
        %v3061 = vmul.f32 %v2913, 1.442695
        %v3062 = vpow.pop %v3061
        %v3063 = vmul.f32 %v2914, 1.442695
        %v3064 = vpow.pop %v3063
        %v3065 = vmul.f32 %v2915, 1.442695
        %v3066 = vpow.pop %v3065
        %v3067 = vmul.f32 %v2916, 1.442695
        %v3068 = vpow.pop %v3067
        %v3069 = vmul.f32 %v2917, 1.442695
        %v3070 = vpow.pop %v3069
        %v3071 = vmul.f32 %v2918, 1.442695
        %v3072 = vpow.pop %v3071
        %v3073 = vmul.f32 %v2919, 1.442695
        %v3074 = vpow.pop %v3073
        %v3075 = vmul.f32 %v2920, 1.442695
        %v3076 = vpow.pop %v3075
        %v3077 = vmul.f32 %v2921, 1.442695
        %v3078 = vpow.pop %v3077
        %v3079 = vmul.f32 %v2922, 1.442695
        %v3080 = vpow.pop %v3079
        %v3081 = vmul.f32 %v2923, 1.442695
        %v3082 = vpow.pop %v3081
        %v3083 = vmul.f32 %v2924, 1.442695
        %v3084 = vpow.pop %v3083
        %v3085 = vmul.f32 %v2925, 1.442695
        %v3086 = vpow.pop %v3085
        %v3087 = vmul.f32 %v2926, 1.442695
        %v3088 = vpow.pop %v3087
        %v3089 = vmul.f32 %v2927, 1.442695
        %v3090 = vpow.pop %v3089
        %v3091 = vmul.f32 %v2928, 1.442695
        %v3092 = vpow.pop %v3091
        %v3093 = vmul.f32 %v2929, 1.442695
        %v3094 = vpow.pop %v3093
        %v3095 = vmul.f32 %v2930, 1.442695
        %v3096 = vpow.pop %v3095
        %v3097 = vmul.f32 %v2931, 1.442695
        %v3098 = vpow.pop %v3097
        %v3099 = vmul.f32 %v2932, 1.442695
        %v3100 = vpow.pop %v3099
        %v3101 = vmul.f32 %v2933, 1.442695
        %v3102 = vpow.pop %v3101
        %v3103 = vmul.f32 %v2934, 1.442695
        %v3104 = vpow.pop %v3103
        %v3105 = vmul.f32 %v2935, 1.442695
        %v3106 = vpow.pop %v3105
        %v3107 = vmul.f32 %v2936, 1.442695
        %v3108 = vpow.pop %v3107
        %v3109 = vmul.f32 %v2937, 1.442695
        %v3110 = vpow.pop %v3109
        %v3111 = vmul.f32 %v2938, 1.442695
        %v3112 = vpow.pop %v3111
        %v3113 = vmul.f32 %v2939, 1.442695
        %v3114 = vpow.pop %v3113
        %v3115 = vmul.f32 %v2940, 1.442695
        %v3116 = vpow.pop %v3115
        %v3117 = vmul.f32 %v2941, 1.442695
        %v3118 = vpow.pop %v3117
        %v3119 = vmul.f32 %v2942, 1.442695
        %v3120 = vpow.pop %v3119
        %v3121 = vmul.f32 %v2943, 1.442695
        %v3122 = vpow.pop %v3121
        %v3123 = vmul.f32 %v2944, 1.442695
        %v3124 = vpow.pop %v3123
        %v3125 = vmul.f32 %v2945, 1.442695
        %v3126 = vpow.pop %v3125
        %v3127 = vmul.f32 %v2946, 1.442695
        %v3128 = vpow.pop %v3127
        %v3129 = vmul.f32 %v2947, 1.442695
        %v3130 = vpow.pop %v3129
        %v3131 = vmul.f32 %v2948, 1.442695
        %v3132 = vpow.pop %v3131
        %v3133 = vmul.f32 %v2949, 1.442695
        %v3134 = vpow.pop %v3133
        %v3135 = vmul.f32 %v2950, 1.442695
        %v3136 = vpow.pop %v3135
        %v3137 = vmul.f32 %v2951, 1.442695
        %v3138 = vpow.pop %v3137
        %v3139 = vmul.f32 %v2952, 1.442695
        %v3140 = vpow.pop %v3139
        %v3141 = vmul.f32 %v2953, 1.442695
        %v3142 = vpow.pop %v3141
        %v3143 = vmul.f32 %v2954, 1.442695
        %v3144 = vpow.pop %v3143
        %v3145 = vmul.f32 %v2955, 1.442695
        %v3146 = vpow.pop %v3145
        %v3147 = vmul.f32 %v2956, 1.442695
        %v3148 = vpow.pop %v3147
        %v3149 = vmul.f32 %v2957, 1.442695
        %v3150 = vpow.pop %v3149
        %v3151 = vmul.f32 %v2958, 1.442695
        %v3152 = vpow.pop %v3151
        %v3153 = vmul.f32 %v2959, 1.442695
        %v3154 = vpow.pop %v3153
        %v3155 = vmul.f32 %v2960, 1.442695
        %v3156 = vpow.pop %v3155
        %v3157 = vmul.f32 %v2961, 1.442695
        %v3158 = vpow.pop %v3157
        %v3159 = vmul.f32 %v2962, 1.442695
        %v3160 = vpow.pop %v3159
        %v3161 = vmul.f32 %v2963, 1.442695
        %v3162 = vpow.pop %v3161
        %v3163 = vmul.f32 %v2964, 1.442695
        %v3164 = vpow.pop %v3163
        %v3165 = vmul.f32 %v2965, 1.442695
        %v3166 = vpow.pop %v3165
        %v3167 = vmul.f32 %v2966, 1.442695
        %v3168 = vpow.pop %v3167
        %v3169 = vmul.f32 %v2967, 1.442695
        %v3170 = vpow.pop %v3169
        %v3171 = vmul.f32 %v2968, 1.442695
        %v3172 = vpow.pop %v3171
        %v3173 = vmul.f32 %v2969, 1.442695
        %v3174 = vpow.pop %v3173
        %v3175 = vmul.f32 %v2970, 1.442695
        %v3176 = vpow.pop %v3175
        %v3177 = vmul.f32 %v2971, 1.442695
        %v3178 = vpow.pop %v3177
        %v3179 = vmul.f32 %v2972, 1.442695
        %v3180 = vpow.pop %v3179
        %v3181 = vmul.f32 %v2973, 1.442695
        %v3182 = vpow.pop %v3181
        %v3183 = vmul.f32 %v2974, 1.442695
        %v3184 = vpow.pop %v3183
        %v3185 = vmul.f32 %v2975, 1.442695
        %v3186 = vpow.pop %v3185
        %v3187 = vmul.f32 %v2976, 1.442695
        %v3188 = vpow.pop %v3187
        %v3189 = vmul.f32 %v2977, 1.442695
        %v3190 = vpow.pop %v3189
        %v3191 = vmul.f32 %v2978, 1.442695
        %v3192 = vpow.pop %v3191
        %v3193 = vmul.f32 %v2979, 1.442695
        %v3194 = vpow.pop %v3193
        %v3195 = vmul.f32 %v2980, 1.442695
        %v3196 = vpow.pop %v3195
        %v3197 = vmul.f32 %v2981, 1.442695
        %v3198 = vpow.pop %v3197
        %v3199 = vmul.f32 %v2982, 1.442695
        %v3200 = vpow.pop %v3199
        %v3201 = vmul.f32 %v2983, 1.442695
        %v3202 = vpow.pop %v3201
        %v3203 = vmul.f32 %v2984, 1.442695
        %v3204 = vpow.pop %v3203
        %v3205 = vmul.f32 %v2985, 1.442695
        %v3206 = vpow.pop %v3205
        %v3207 = vmul.f32 %v2986, 1.442695
        %v3208 = vpow.pop %v3207
        %v3209 = vmul.f32 %v2987, 1.442695
        %v3210 = vpow.pop %v3209
        %v3211 = vmul.f32 %v2988, 1.442695
        %v3212 = vpow.pop %v3211
        %v3213 = vmul.f32 %v2989, 1.442695
        %v3214 = vpow.pop %v3213
        %v3215 = vmul.f32 %v2990, 1.442695
        %v3216 = vpow.pop %v3215
        %v3217 = vmul.f32 %v2991, 1.442695
        %v3218 = vpow.pop %v3217
        %v3219 = vmul.f32 %v2992, 1.442695
        %v3220 = vpow.pop %v3219
        %v3221 = vmul.f32 %v2993, 1.442695
        %v3222 = vpow.pop %v3221
        %v3223 = vmul.f32 %v2994, 1.442695
        %v3224 = vpow.pop %v3223
        %v3225 = vmul.f32 %v2995, 1.442695
        %v3226 = vpow.pop %v3225
        %v3227 = vmul.f32 %v2996, 1.442695
        %v3228 = vpow.pop %v3227
        %v3229 = vmul.f32 %v2997, 1.442695
        %v3230 = vpow.pop %v3229
        %v3231 = vmul.f32 %v2998, 1.442695
        %v3232 = vpow.pop %v3231
        %v3233 = vmul.f32 %v2999, 1.442695
        %v3234 = vpow.pop %v3233
        %v3235 = vmul.f32 %v3000, 1.442695
        %v3236 = vpow.pop %v3235
        %v3237 = vmul.f32 %v3001, 1.442695
        %v3238 = vpow.pop %v3237
        %v3239 = vmul.f32 %v3002, 1.442695
        %v3240 = vpow.pop %v3239
        %v3241 = vmul.f32 %v3003, 1.442695
        %v3242 = vpow.pop %v3241
        %v3243 = vmul.f32 %v3004, 1.442695
        %v3244 = vpow.pop %v3243
        %v3245 = vmul.f32 %v3005, 1.442695
        %v3246 = vpow.pop %v3245
        %v3247 = vmul.f32 %v3006, 1.442695
        %v3248 = vpow.pop %v3247
        %v3249 = vmul.f32 %v3007, 1.442695
        %v3250 = vpow.pop %v3249
        %v3251 = vmul.f32 %v3008, 1.442695
        %v3252 = vpow.pop %v3251
        %v3253 = vmul.f32 %v3009, 1.442695
        %v3254 = vpow.pop %v3253
        %v3255 = vmul.f32 %v3010, 1.442695
        %v3256 = vpow.pop %v3255
        %v3257 = vmul.f32 %v3011, 1.442695
        %v3258 = vpow.pop %v3257
        %v3259 = vmul.f32 %v3012, 1.442695
        %v3260 = vpow.pop %v3259
        %v3261 = vmul.f32 %v3013, 1.442695
        %v3262 = vpow.pop %v3261
        %v3263 = vmul.f32 %v3014, 1.442695
        %v3264 = vpow.pop %v3263
        %v3265 = vmul.f32 %v3015, 1.442695
        %v3266 = vpow.pop %v3265
        %v3267 = vmul.f32 %v3016, 1.442695
        %v3268 = vpow.pop %v3267
        %v3269 = vmul.f32 %v3017, 1.442695
        %v3270 = vpow.pop %v3269
        %v3271 = vmul.f32 %v3018, 1.442695
        %v3272 = vpow.pop %v3271
        %v3273 = vmul.f32 %v3019, 1.442695
        %v3274 = vpow.pop %v3273
        %v3275 = vmul.f32 %v3020, 1.442695
        %v3276 = vpow.pop %v3275
        %v3277 = vsub.f32 1.0, %v3022
        %v3278 = vsub.f32 1.0, %v3024
        %v3279 = vsub.f32 1.0, %v3026
        %v3280 = vsub.f32 1.0, %v3028
        %v3281 = vsub.f32 1.0, %v3030
        %v3282 = vsub.f32 1.0, %v3032
        %v3283 = vsub.f32 1.0, %v3034
        %v3284 = vsub.f32 1.0, %v3036
        %v3285 = vsub.f32 1.0, %v3038
        %v3286 = vsub.f32 1.0, %v3040
        %v3287 = vsub.f32 1.0, %v3042
        %v3288 = vsub.f32 1.0, %v3044
        %v3289 = vsub.f32 1.0, %v3046
        %v3290 = vsub.f32 1.0, %v3048
        %v3291 = vsub.f32 1.0, %v3050
        %v3292 = vsub.f32 1.0, %v3052
        %v3293 = vsub.f32 1.0, %v3054
        %v3294 = vsub.f32 1.0, %v3056
        %v3295 = vsub.f32 1.0, %v3058
        %v3296 = vsub.f32 1.0, %v3060
        %v3297 = vsub.f32 1.0, %v3062
        %v3298 = vsub.f32 1.0, %v3064
        %v3299 = vsub.f32 1.0, %v3066
        %v3300 = vsub.f32 1.0, %v3068
        %v3301 = vsub.f32 1.0, %v3070
        %v3302 = vsub.f32 1.0, %v3072
        %v3303 = vsub.f32 1.0, %v3074
        %v3304 = vsub.f32 1.0, %v3076
        %v3305 = vsub.f32 1.0, %v3078
        %v3306 = vsub.f32 1.0, %v3080
        %v3307 = vsub.f32 1.0, %v3082
        %v3308 = vsub.f32 1.0, %v3084
        %v3309 = vsub.f32 1.0, %v3086
        %v3310 = vsub.f32 1.0, %v3088
        %v3311 = vsub.f32 1.0, %v3090
        %v3312 = vsub.f32 1.0, %v3092
        %v3313 = vsub.f32 1.0, %v3094
        %v3314 = vsub.f32 1.0, %v3096
        %v3315 = vsub.f32 1.0, %v3098
        %v3316 = vsub.f32 1.0, %v3100
        %v3317 = vsub.f32 1.0, %v3102
        %v3318 = vsub.f32 1.0, %v3104
        %v3319 = vsub.f32 1.0, %v3106
        %v3320 = vsub.f32 1.0, %v3108
        %v3321 = vsub.f32 1.0, %v3110
        %v3322 = vsub.f32 1.0, %v3112
        %v3323 = vsub.f32 1.0, %v3114
        %v3324 = vsub.f32 1.0, %v3116
        %v3325 = vsub.f32 1.0, %v3118
        %v3326 = vsub.f32 1.0, %v3120
        %v3327 = vsub.f32 1.0, %v3122
        %v3328 = vsub.f32 1.0, %v3124
        %v3329 = vsub.f32 1.0, %v3126
        %v3330 = vsub.f32 1.0, %v3128
        %v3331 = vsub.f32 1.0, %v3130
        %v3332 = vsub.f32 1.0, %v3132
        %v3333 = vsub.f32 1.0, %v3134
        %v3334 = vsub.f32 1.0, %v3136
        %v3335 = vsub.f32 1.0, %v3138
        %v3336 = vsub.f32 1.0, %v3140
        %v3337 = vsub.f32 1.0, %v3142
        %v3338 = vsub.f32 1.0, %v3144
        %v3339 = vsub.f32 1.0, %v3146
        %v3340 = vsub.f32 1.0, %v3148
        %v3341 = vsub.f32 1.0, %v3150
        %v3342 = vsub.f32 1.0, %v3152
        %v3343 = vsub.f32 1.0, %v3154
        %v3344 = vsub.f32 1.0, %v3156
        %v3345 = vsub.f32 1.0, %v3158
        %v3346 = vsub.f32 1.0, %v3160
        %v3347 = vsub.f32 1.0, %v3162
        %v3348 = vsub.f32 1.0, %v3164
        %v3349 = vsub.f32 1.0, %v3166
        %v3350 = vsub.f32 1.0, %v3168
        %v3351 = vsub.f32 1.0, %v3170
        %v3352 = vsub.f32 1.0, %v3172
        %v3353 = vsub.f32 1.0, %v3174
        %v3354 = vsub.f32 1.0, %v3176
        %v3355 = vsub.f32 1.0, %v3178
        %v3356 = vsub.f32 1.0, %v3180
        %v3357 = vsub.f32 1.0, %v3182
        %v3358 = vsub.f32 1.0, %v3184
        %v3359 = vsub.f32 1.0, %v3186
        %v3360 = vsub.f32 1.0, %v3188
        %v3361 = vsub.f32 1.0, %v3190
        %v3362 = vsub.f32 1.0, %v3192
        %v3363 = vsub.f32 1.0, %v3194
        %v3364 = vsub.f32 1.0, %v3196
        %v3365 = vsub.f32 1.0, %v3198
        %v3366 = vsub.f32 1.0, %v3200
        %v3367 = vsub.f32 1.0, %v3202
        %v3368 = vsub.f32 1.0, %v3204
        %v3369 = vsub.f32 1.0, %v3206
        %v3370 = vsub.f32 1.0, %v3208
        %v3371 = vsub.f32 1.0, %v3210
        %v3372 = vsub.f32 1.0, %v3212
        %v3373 = vsub.f32 1.0, %v3214
        %v3374 = vsub.f32 1.0, %v3216
        %v3375 = vsub.f32 1.0, %v3218
        %v3376 = vsub.f32 1.0, %v3220
        %v3377 = vsub.f32 1.0, %v3222
        %v3378 = vsub.f32 1.0, %v3224
        %v3379 = vsub.f32 1.0, %v3226
        %v3380 = vsub.f32 1.0, %v3228
        %v3381 = vsub.f32 1.0, %v3230
        %v3382 = vsub.f32 1.0, %v3232
        %v3383 = vsub.f32 1.0, %v3234
        %v3384 = vsub.f32 1.0, %v3236
        %v3385 = vsub.f32 1.0, %v3238
        %v3386 = vsub.f32 1.0, %v3240
        %v3387 = vsub.f32 1.0, %v3242
        %v3388 = vsub.f32 1.0, %v3244
        %v3389 = vsub.f32 1.0, %v3246
        %v3390 = vsub.f32 1.0, %v3248
        %v3391 = vsub.f32 1.0, %v3250
        %v3392 = vsub.f32 1.0, %v3252
        %v3393 = vsub.f32 1.0, %v3254
        %v3394 = vsub.f32 1.0, %v3256
        %v3395 = vsub.f32 1.0, %v3258
        %v3396 = vsub.f32 1.0, %v3260
        %v3397 = vsub.f32 1.0, %v3262
        %v3398 = vsub.f32 1.0, %v3264
        %v3399 = vsub.f32 1.0, %v3266
        %v3400 = vsub.f32 1.0, %v3268
        %v3401 = vsub.f32 1.0, %v3270
        %v3402 = vsub.f32 1.0, %v3272
        %v3403 = vsub.f32 1.0, %v3274
        %v3404 = vsub.f32 1.0, %v3276
        %v3405 = vmul.f32 %v3277, %v3277
        %v3406 = vmul.f32 %v3278, %v3278
        %v3407 = vmul.f32 %v3279, %v3279
        %v3408 = vmul.f32 %v3280, %v3280
        %v3409 = vmul.f32 %v3281, %v3281
        %v3410 = vmul.f32 %v3282, %v3282
        %v3411 = vmul.f32 %v3283, %v3283
        %v3412 = vmul.f32 %v3284, %v3284
        %v3413 = vmul.f32 %v3285, %v3285
        %v3414 = vmul.f32 %v3286, %v3286
        %v3415 = vmul.f32 %v3287, %v3287
        %v3416 = vmul.f32 %v3288, %v3288
        %v3417 = vmul.f32 %v3289, %v3289
        %v3418 = vmul.f32 %v3290, %v3290
        %v3419 = vmul.f32 %v3291, %v3291
        %v3420 = vmul.f32 %v3292, %v3292
        %v3421 = vmul.f32 %v3293, %v3293
        %v3422 = vmul.f32 %v3294, %v3294
        %v3423 = vmul.f32 %v3295, %v3295
        %v3424 = vmul.f32 %v3296, %v3296
        %v3425 = vmul.f32 %v3297, %v3297
        %v3426 = vmul.f32 %v3298, %v3298
        %v3427 = vmul.f32 %v3299, %v3299
        %v3428 = vmul.f32 %v3300, %v3300
        %v3429 = vmul.f32 %v3301, %v3301
        %v3430 = vmul.f32 %v3302, %v3302
        %v3431 = vmul.f32 %v3303, %v3303
        %v3432 = vmul.f32 %v3304, %v3304
        %v3433 = vmul.f32 %v3305, %v3305
        %v3434 = vmul.f32 %v3306, %v3306
        %v3435 = vmul.f32 %v3307, %v3307
        %v3436 = vmul.f32 %v3308, %v3308
        %v3437 = vmul.f32 %v3309, %v3309
        %v3438 = vmul.f32 %v3310, %v3310
        %v3439 = vmul.f32 %v3311, %v3311
        %v3440 = vmul.f32 %v3312, %v3312
        %v3441 = vmul.f32 %v3313, %v3313
        %v3442 = vmul.f32 %v3314, %v3314
        %v3443 = vmul.f32 %v3315, %v3315
        %v3444 = vmul.f32 %v3316, %v3316
        %v3445 = vmul.f32 %v3317, %v3317
        %v3446 = vmul.f32 %v3318, %v3318
        %v3447 = vmul.f32 %v3319, %v3319
        %v3448 = vmul.f32 %v3320, %v3320
        %v3449 = vmul.f32 %v3321, %v3321
        %v3450 = vmul.f32 %v3322, %v3322
        %v3451 = vmul.f32 %v3323, %v3323
        %v3452 = vmul.f32 %v3324, %v3324
        %v3453 = vmul.f32 %v3325, %v3325
        %v3454 = vmul.f32 %v3326, %v3326
        %v3455 = vmul.f32 %v3327, %v3327
        %v3456 = vmul.f32 %v3328, %v3328
        %v3457 = vmul.f32 %v3329, %v3329
        %v3458 = vmul.f32 %v3330, %v3330
        %v3459 = vmul.f32 %v3331, %v3331
        %v3460 = vmul.f32 %v3332, %v3332
        %v3461 = vmul.f32 %v3333, %v3333
        %v3462 = vmul.f32 %v3334, %v3334
        %v3463 = vmul.f32 %v3335, %v3335
        %v3464 = vmul.f32 %v3336, %v3336
        %v3465 = vmul.f32 %v3337, %v3337
        %v3466 = vmul.f32 %v3338, %v3338
        %v3467 = vmul.f32 %v3339, %v3339
        %v3468 = vmul.f32 %v3340, %v3340
        %v3469 = vmul.f32 %v3341, %v3341
        %v3470 = vmul.f32 %v3342, %v3342
        %v3471 = vmul.f32 %v3343, %v3343
        %v3472 = vmul.f32 %v3344, %v3344
        %v3473 = vmul.f32 %v3345, %v3345
        %v3474 = vmul.f32 %v3346, %v3346
        %v3475 = vmul.f32 %v3347, %v3347
        %v3476 = vmul.f32 %v3348, %v3348
        %v3477 = vmul.f32 %v3349, %v3349
        %v3478 = vmul.f32 %v3350, %v3350
        %v3479 = vmul.f32 %v3351, %v3351
        %v3480 = vmul.f32 %v3352, %v3352
        %v3481 = vmul.f32 %v3353, %v3353
        %v3482 = vmul.f32 %v3354, %v3354
        %v3483 = vmul.f32 %v3355, %v3355
        %v3484 = vmul.f32 %v3356, %v3356
        %v3485 = vmul.f32 %v3357, %v3357
        %v3486 = vmul.f32 %v3358, %v3358
        %v3487 = vmul.f32 %v3359, %v3359
        %v3488 = vmul.f32 %v3360, %v3360
        %v3489 = vmul.f32 %v3361, %v3361
        %v3490 = vmul.f32 %v3362, %v3362
        %v3491 = vmul.f32 %v3363, %v3363
        %v3492 = vmul.f32 %v3364, %v3364
        %v3493 = vmul.f32 %v3365, %v3365
        %v3494 = vmul.f32 %v3366, %v3366
        %v3495 = vmul.f32 %v3367, %v3367
        %v3496 = vmul.f32 %v3368, %v3368
        %v3497 = vmul.f32 %v3369, %v3369
        %v3498 = vmul.f32 %v3370, %v3370
        %v3499 = vmul.f32 %v3371, %v3371
        %v3500 = vmul.f32 %v3372, %v3372
        %v3501 = vmul.f32 %v3373, %v3373
        %v3502 = vmul.f32 %v3374, %v3374
        %v3503 = vmul.f32 %v3375, %v3375
        %v3504 = vmul.f32 %v3376, %v3376
        %v3505 = vmul.f32 %v3377, %v3377
        %v3506 = vmul.f32 %v3378, %v3378
        %v3507 = vmul.f32 %v3379, %v3379
        %v3508 = vmul.f32 %v3380, %v3380
        %v3509 = vmul.f32 %v3381, %v3381
        %v3510 = vmul.f32 %v3382, %v3382
        %v3511 = vmul.f32 %v3383, %v3383
        %v3512 = vmul.f32 %v3384, %v3384
        %v3513 = vmul.f32 %v3385, %v3385
        %v3514 = vmul.f32 %v3386, %v3386
        %v3515 = vmul.f32 %v3387, %v3387
        %v3516 = vmul.f32 %v3388, %v3388
        %v3517 = vmul.f32 %v3389, %v3389
        %v3518 = vmul.f32 %v3390, %v3390
        %v3519 = vmul.f32 %v3391, %v3391
        %v3520 = vmul.f32 %v3392, %v3392
        %v3521 = vmul.f32 %v3393, %v3393
        %v3522 = vmul.f32 %v3394, %v3394
        %v3523 = vmul.f32 %v3395, %v3395
        %v3524 = vmul.f32 %v3396, %v3396
        %v3525 = vmul.f32 %v3397, %v3397
        %v3526 = vmul.f32 %v3398, %v3398
        %v3527 = vmul.f32 %v3399, %v3399
        %v3528 = vmul.f32 %v3400, %v3400
        %v3529 = vmul.f32 %v3401, %v3401
        %v3530 = vmul.f32 %v3402, %v3402
        %v3531 = vmul.f32 %v3403, %v3403
        %v3532 = vmul.f32 %v3404, %v3404
        %v3533 = vmul.f32 %v2765, %v3405
        %v3534 = vmul.f32 %v2766, %v3406
        %v3535 = vmul.f32 %v2767, %v3407
        %v3536 = vmul.f32 %v2768, %v3408
        %v3537 = vmul.f32 %v2769, %v3409
        %v3538 = vmul.f32 %v2770, %v3410
        %v3539 = vmul.f32 %v2771, %v3411
        %v3540 = vmul.f32 %v2772, %v3412
        %v3541 = vmul.f32 %v2773, %v3413
        %v3542 = vmul.f32 %v2774, %v3414
        %v3543 = vmul.f32 %v2775, %v3415
        %v3544 = vmul.f32 %v2776, %v3416
        %v3545 = vmul.f32 %v2777, %v3417
        %v3546 = vmul.f32 %v2778, %v3418
        %v3547 = vmul.f32 %v2779, %v3419
        %v3548 = vmul.f32 %v2780, %v3420
        %v3549 = vmul.f32 %v2781, %v3421
        %v3550 = vmul.f32 %v2782, %v3422
        %v3551 = vmul.f32 %v2783, %v3423
        %v3552 = vmul.f32 %v2784, %v3424
        %v3553 = vmul.f32 %v2785, %v3425
        %v3554 = vmul.f32 %v2786, %v3426
        %v3555 = vmul.f32 %v2787, %v3427
        %v3556 = vmul.f32 %v2788, %v3428
        %v3557 = vmul.f32 %v2789, %v3429
        %v3558 = vmul.f32 %v2790, %v3430
        %v3559 = vmul.f32 %v2791, %v3431
        %v3560 = vmul.f32 %v2792, %v3432
        %v3561 = vmul.f32 %v2793, %v3433
        %v3562 = vmul.f32 %v2794, %v3434
        %v3563 = vmul.f32 %v2795, %v3435
        %v3564 = vmul.f32 %v2796, %v3436
        %v3565 = vmul.f32 %v2797, %v3437
        %v3566 = vmul.f32 %v2798, %v3438
        %v3567 = vmul.f32 %v2799, %v3439
        %v3568 = vmul.f32 %v2800, %v3440
        %v3569 = vmul.f32 %v2801, %v3441
        %v3570 = vmul.f32 %v2802, %v3442
        %v3571 = vmul.f32 %v2803, %v3443
        %v3572 = vmul.f32 %v2804, %v3444
        %v3573 = vmul.f32 %v2805, %v3445
        %v3574 = vmul.f32 %v2806, %v3446
        %v3575 = vmul.f32 %v2807, %v3447
        %v3576 = vmul.f32 %v2808, %v3448
        %v3577 = vmul.f32 %v2809, %v3449
        %v3578 = vmul.f32 %v2810, %v3450
        %v3579 = vmul.f32 %v2811, %v3451
        %v3580 = vmul.f32 %v2812, %v3452
        %v3581 = vmul.f32 %v2813, %v3453
        %v3582 = vmul.f32 %v2814, %v3454
        %v3583 = vmul.f32 %v2815, %v3455
        %v3584 = vmul.f32 %v2816, %v3456
        %v3585 = vmul.f32 %v2817, %v3457
        %v3586 = vmul.f32 %v2818, %v3458
        %v3587 = vmul.f32 %v2819, %v3459
        %v3588 = vmul.f32 %v2820, %v3460
        %v3589 = vmul.f32 %v2821, %v3461
        %v3590 = vmul.f32 %v2822, %v3462
        %v3591 = vmul.f32 %v2823, %v3463
        %v3592 = vmul.f32 %v2824, %v3464
        %v3593 = vmul.f32 %v2825, %v3465
        %v3594 = vmul.f32 %v2826, %v3466
        %v3595 = vmul.f32 %v2827, %v3467
        %v3596 = vmul.f32 %v2828, %v3468
        %v3597 = vmul.f32 %v2829, %v3469
        %v3598 = vmul.f32 %v2830, %v3470
        %v3599 = vmul.f32 %v2831, %v3471
        %v3600 = vmul.f32 %v2832, %v3472
        %v3601 = vmul.f32 %v2833, %v3473
        %v3602 = vmul.f32 %v2834, %v3474
        %v3603 = vmul.f32 %v2835, %v3475
        %v3604 = vmul.f32 %v2836, %v3476
        %v3605 = vmul.f32 %v2837, %v3477
        %v3606 = vmul.f32 %v2838, %v3478
        %v3607 = vmul.f32 %v2839, %v3479
        %v3608 = vmul.f32 %v2840, %v3480
        %v3609 = vmul.f32 %v2841, %v3481
        %v3610 = vmul.f32 %v2842, %v3482
        %v3611 = vmul.f32 %v2843, %v3483
        %v3612 = vmul.f32 %v2844, %v3484
        %v3613 = vmul.f32 %v2845, %v3485
        %v3614 = vmul.f32 %v2846, %v3486
        %v3615 = vmul.f32 %v2847, %v3487
        %v3616 = vmul.f32 %v2848, %v3488
        %v3617 = vmul.f32 %v2849, %v3489
        %v3618 = vmul.f32 %v2850, %v3490
        %v3619 = vmul.f32 %v2851, %v3491
        %v3620 = vmul.f32 %v2852, %v3492
        %v3621 = vmul.f32 %v2853, %v3493
        %v3622 = vmul.f32 %v2854, %v3494
        %v3623 = vmul.f32 %v2855, %v3495
        %v3624 = vmul.f32 %v2856, %v3496
        %v3625 = vmul.f32 %v2857, %v3497
        %v3626 = vmul.f32 %v2858, %v3498
        %v3627 = vmul.f32 %v2859, %v3499
        %v3628 = vmul.f32 %v2860, %v3500
        %v3629 = vmul.f32 %v2861, %v3501
        %v3630 = vmul.f32 %v2862, %v3502
        %v3631 = vmul.f32 %v2863, %v3503
        %v3632 = vmul.f32 %v2864, %v3504
        %v3633 = vmul.f32 %v2865, %v3505
        %v3634 = vmul.f32 %v2866, %v3506
        %v3635 = vmul.f32 %v2867, %v3507
        %v3636 = vmul.f32 %v2868, %v3508
        %v3637 = vmul.f32 %v2869, %v3509
        %v3638 = vmul.f32 %v2870, %v3510
        %v3639 = vmul.f32 %v2871, %v3511
        %v3640 = vmul.f32 %v2872, %v3512
        %v3641 = vmul.f32 %v2873, %v3513
        %v3642 = vmul.f32 %v2874, %v3514
        %v3643 = vmul.f32 %v2875, %v3515
        %v3644 = vmul.f32 %v2876, %v3516
        %v3645 = vmul.f32 %v2877, %v3517
        %v3646 = vmul.f32 %v2878, %v3518
        %v3647 = vmul.f32 %v2879, %v3519
        %v3648 = vmul.f32 %v2880, %v3520
        %v3649 = vmul.f32 %v2881, %v3521
        %v3650 = vmul.f32 %v2882, %v3522
        %v3651 = vmul.f32 %v2883, %v3523
        %v3652 = vmul.f32 %v2884, %v3524
        %v3653 = vmul.f32 %v2885, %v3525
        %v3654 = vmul.f32 %v2886, %v3526
        %v3655 = vmul.f32 %v2887, %v3527
        %v3656 = vmul.f32 %v2888, %v3528
        %v3657 = vmul.f32 %v2889, %v3529
        %v3658 = vmul.f32 %v2890, %v3530
        %v3659 = vmul.f32 %v2891, %v3531
        %v3660 = vmul.f32 %v2892, %v3532
        %v3661 = vmul.f32 %v3533, %v2509
        %v3662 = vmul.f32 %v3534, %v2510
        %v3663 = vmul.f32 %v3535, %v2511
        %v3664 = vmul.f32 %v3536, %v2512
        %v3665 = vmul.f32 %v3537, %v2513
        %v3666 = vmul.f32 %v3538, %v2514
        %v3667 = vmul.f32 %v3539, %v2515
        %v3668 = vmul.f32 %v3540, %v2516
        %v3669 = vmul.f32 %v3541, %v2517
        %v3670 = vmul.f32 %v3542, %v2518
        %v3671 = vmul.f32 %v3543, %v2519
        %v3672 = vmul.f32 %v3544, %v2520
        %v3673 = vmul.f32 %v3545, %v2521
        %v3674 = vmul.f32 %v3546, %v2522
        %v3675 = vmul.f32 %v3547, %v2523
        %v3676 = vmul.f32 %v3548, %v2524
        %v3677 = vmul.f32 %v3549, %v2525
        %v3678 = vmul.f32 %v3550, %v2526
        %v3679 = vmul.f32 %v3551, %v2527
        %v3680 = vmul.f32 %v3552, %v2528
        %v3681 = vmul.f32 %v3553, %v2529
        %v3682 = vmul.f32 %v3554, %v2530
        %v3683 = vmul.f32 %v3555, %v2531
        %v3684 = vmul.f32 %v3556, %v2532
        %v3685 = vmul.f32 %v3557, %v2533
        %v3686 = vmul.f32 %v3558, %v2534
        %v3687 = vmul.f32 %v3559, %v2535
        %v3688 = vmul.f32 %v3560, %v2536
        %v3689 = vmul.f32 %v3561, %v2537
        %v3690 = vmul.f32 %v3562, %v2538
        %v3691 = vmul.f32 %v3563, %v2539
        %v3692 = vmul.f32 %v3564, %v2540
        %v3693 = vmul.f32 %v3565, %v2541
        %v3694 = vmul.f32 %v3566, %v2542
        %v3695 = vmul.f32 %v3567, %v2543
        %v3696 = vmul.f32 %v3568, %v2544
        %v3697 = vmul.f32 %v3569, %v2545
        %v3698 = vmul.f32 %v3570, %v2546
        %v3699 = vmul.f32 %v3571, %v2547
        %v3700 = vmul.f32 %v3572, %v2548
        %v3701 = vmul.f32 %v3573, %v2549
        %v3702 = vmul.f32 %v3574, %v2550
        %v3703 = vmul.f32 %v3575, %v2551
        %v3704 = vmul.f32 %v3576, %v2552
        %v3705 = vmul.f32 %v3577, %v2553
        %v3706 = vmul.f32 %v3578, %v2554
        %v3707 = vmul.f32 %v3579, %v2555
        %v3708 = vmul.f32 %v3580, %v2556
        %v3709 = vmul.f32 %v3581, %v2557
        %v3710 = vmul.f32 %v3582, %v2558
        %v3711 = vmul.f32 %v3583, %v2559
        %v3712 = vmul.f32 %v3584, %v2560
        %v3713 = vmul.f32 %v3585, %v2561
        %v3714 = vmul.f32 %v3586, %v2562
        %v3715 = vmul.f32 %v3587, %v2563
        %v3716 = vmul.f32 %v3588, %v2564
        %v3717 = vmul.f32 %v3589, %v2565
        %v3718 = vmul.f32 %v3590, %v2566
        %v3719 = vmul.f32 %v3591, %v2567
        %v3720 = vmul.f32 %v3592, %v2568
        %v3721 = vmul.f32 %v3593, %v2569
        %v3722 = vmul.f32 %v3594, %v2570
        %v3723 = vmul.f32 %v3595, %v2571
        %v3724 = vmul.f32 %v3596, %v2572
        %v3725 = vmul.f32 %v3597, %v2573
        %v3726 = vmul.f32 %v3598, %v2574
        %v3727 = vmul.f32 %v3599, %v2575
        %v3728 = vmul.f32 %v3600, %v2576
        %v3729 = vmul.f32 %v3601, %v2577
        %v3730 = vmul.f32 %v3602, %v2578
        %v3731 = vmul.f32 %v3603, %v2579
        %v3732 = vmul.f32 %v3604, %v2580
        %v3733 = vmul.f32 %v3605, %v2581
        %v3734 = vmul.f32 %v3606, %v2582
        %v3735 = vmul.f32 %v3607, %v2583
        %v3736 = vmul.f32 %v3608, %v2584
        %v3737 = vmul.f32 %v3609, %v2585
        %v3738 = vmul.f32 %v3610, %v2586
        %v3739 = vmul.f32 %v3611, %v2587
        %v3740 = vmul.f32 %v3612, %v2588
        %v3741 = vmul.f32 %v3613, %v2589
        %v3742 = vmul.f32 %v3614, %v2590
        %v3743 = vmul.f32 %v3615, %v2591
        %v3744 = vmul.f32 %v3616, %v2592
        %v3745 = vmul.f32 %v3617, %v2593
        %v3746 = vmul.f32 %v3618, %v2594
        %v3747 = vmul.f32 %v3619, %v2595
        %v3748 = vmul.f32 %v3620, %v2596
        %v3749 = vmul.f32 %v3621, %v2597
        %v3750 = vmul.f32 %v3622, %v2598
        %v3751 = vmul.f32 %v3623, %v2599
        %v3752 = vmul.f32 %v3624, %v2600
        %v3753 = vmul.f32 %v3625, %v2601
        %v3754 = vmul.f32 %v3626, %v2602
        %v3755 = vmul.f32 %v3627, %v2603
        %v3756 = vmul.f32 %v3628, %v2604
        %v3757 = vmul.f32 %v3629, %v2605
        %v3758 = vmul.f32 %v3630, %v2606
        %v3759 = vmul.f32 %v3631, %v2607
        %v3760 = vmul.f32 %v3632, %v2608
        %v3761 = vmul.f32 %v3633, %v2609
        %v3762 = vmul.f32 %v3634, %v2610
        %v3763 = vmul.f32 %v3635, %v2611
        %v3764 = vmul.f32 %v3636, %v2612
        %v3765 = vmul.f32 %v3637, %v2613
        %v3766 = vmul.f32 %v3638, %v2614
        %v3767 = vmul.f32 %v3639, %v2615
        %v3768 = vmul.f32 %v3640, %v2616
        %v3769 = vmul.f32 %v3641, %v2617
        %v3770 = vmul.f32 %v3642, %v2618
        %v3771 = vmul.f32 %v3643, %v2619
        %v3772 = vmul.f32 %v3644, %v2620
        %v3773 = vmul.f32 %v3645, %v2621
        %v3774 = vmul.f32 %v3646, %v2622
        %v3775 = vmul.f32 %v3647, %v2623
        %v3776 = vmul.f32 %v3648, %v2624
        %v3777 = vmul.f32 %v3649, %v2625
        %v3778 = vmul.f32 %v3650, %v2626
        %v3779 = vmul.f32 %v3651, %v2627
        %v3780 = vmul.f32 %v3652, %v2628
        %v3781 = vmul.f32 %v3653, %v2629
        %v3782 = vmul.f32 %v3654, %v2630
        %v3783 = vmul.f32 %v3655, %v2631
        %v3784 = vmul.f32 %v3656, %v2632
        %v3785 = vmul.f32 %v3657, %v2633
        %v3786 = vmul.f32 %v3658, %v2634
        %v3787 = vmul.f32 %v3659, %v2635
        %v3788 = vmul.f32 %v3660, %v2636
        %s3789 = smul.u32 %s22, 512
        %v3790 = vlaneseq
        %v3791 = vshrl.u32 %v3790, 7
        %v3792 = vadd.s32 %v3791, 8
        %v3793 = vadd.s32 %v3791, 16
        %v3794 = vadd.s32 %v3791, 24
        %v3795 = vadd.s32 %v3791, 32
        %v3796 = vadd.s32 %v3791, 40
        %v3797 = vadd.s32 %v3791, 48
        %v3798 = vadd.s32 %v3791, 56
        %v3799 = vadd.s32 %v3791, 64
        %v3800 = vadd.s32 %v3791, 72
        %v3801 = vadd.s32 %v3791, 80
        %v3802 = vadd.s32 %v3791, 88
        %v3803 = vadd.s32 %v3791, 96
        %v3804 = vadd.s32 %v3791, 104
        %v3805 = vadd.s32 %v3791, 112
        %v3806 = vadd.s32 %v3791, 120
        %v3807 = vadd.s32 %v3791, 128
        %v3808 = vadd.s32 %v3791, 136
        %v3809 = vadd.s32 %v3791, 144
        %v3810 = vadd.s32 %v3791, 152
        %v3811 = vadd.s32 %v3791, 160
        %v3812 = vadd.s32 %v3791, 168
        %v3813 = vadd.s32 %v3791, 176
        %v3814 = vadd.s32 %v3791, 184
        %v3815 = vadd.s32 %v3791, 192
        %v3816 = vadd.s32 %v3791, 200
        %v3817 = vadd.s32 %v3791, 208
        %v3818 = vadd.s32 %v3791, 216
        %v3819 = vadd.s32 %v3791, 224
        %v3820 = vadd.s32 %v3791, 232
        %v3821 = vadd.s32 %v3791, 240
        %v3822 = vadd.s32 %v3791, 248
        %v3823 = vadd.s32 %v3791, 256
        %v3824 = vadd.s32 %v3791, 264
        %v3825 = vadd.s32 %v3791, 272
        %v3826 = vadd.s32 %v3791, 280
        %v3827 = vadd.s32 %v3791, 288
        %v3828 = vadd.s32 %v3791, 296
        %v3829 = vadd.s32 %v3791, 304
        %v3830 = vadd.s32 %v3791, 312
        %v3831 = vadd.s32 %v3791, 320
        %v3832 = vadd.s32 %v3791, 328
        %v3833 = vadd.s32 %v3791, 336
        %v3834 = vadd.s32 %v3791, 344
        %v3835 = vadd.s32 %v3791, 352
        %v3836 = vadd.s32 %v3791, 360
        %v3837 = vadd.s32 %v3791, 368
        %v3838 = vadd.s32 %v3791, 376
        %v3839 = vadd.s32 %v3791, 384
        %v3840 = vadd.s32 %v3791, 392
        %v3841 = vadd.s32 %v3791, 400
        %v3842 = vadd.s32 %v3791, 408
        %v3843 = vadd.s32 %v3791, 416
        %v3844 = vadd.s32 %v3791, 424
        %v3845 = vadd.s32 %v3791, 432
        %v3846 = vadd.s32 %v3791, 440
        %v3847 = vadd.s32 %v3791, 448
        %v3848 = vadd.s32 %v3791, 456
        %v3849 = vadd.s32 %v3791, 464
        %v3850 = vadd.s32 %v3791, 472
        %v3851 = vadd.s32 %v3791, 480
        %v3852 = vadd.s32 %v3791, 488
        %v3853 = vadd.s32 %v3791, 496
        %v3854 = vadd.s32 %v3791, 504
        %v3855 = vstv %s3789
        %v3856 = vadd.s32 %v3855, %v3791
        %v3857 = vadd.s32 %v3855, %v3792
        %v3858 = vadd.s32 %v3855, %v3793
        %v3859 = vadd.s32 %v3855, %v3794
        %v3860 = vadd.s32 %v3855, %v3795
        %v3861 = vadd.s32 %v3855, %v3796
        %v3862 = vadd.s32 %v3855, %v3797
        %v3863 = vadd.s32 %v3855, %v3798
        %v3864 = vadd.s32 %v3855, %v3799
        %v3865 = vadd.s32 %v3855, %v3800
        %v3866 = vadd.s32 %v3855, %v3801
        %v3867 = vadd.s32 %v3855, %v3802
        %v3868 = vadd.s32 %v3855, %v3803
        %v3869 = vadd.s32 %v3855, %v3804
        %v3870 = vadd.s32 %v3855, %v3805
        %v3871 = vadd.s32 %v3855, %v3806
        %v3872 = vadd.s32 %v3855, %v3807
        %v3873 = vadd.s32 %v3855, %v3808
        %v3874 = vadd.s32 %v3855, %v3809
        %v3875 = vadd.s32 %v3855, %v3810
        %v3876 = vadd.s32 %v3855, %v3811
        %v3877 = vadd.s32 %v3855, %v3812
        %v3878 = vadd.s32 %v3855, %v3813
        %v3879 = vadd.s32 %v3855, %v3814
        %v3880 = vadd.s32 %v3855, %v3815
        %v3881 = vadd.s32 %v3855, %v3816
        %v3882 = vadd.s32 %v3855, %v3817
        %v3883 = vadd.s32 %v3855, %v3818
        %v3884 = vadd.s32 %v3855, %v3819
        %v3885 = vadd.s32 %v3855, %v3820
        %v3886 = vadd.s32 %v3855, %v3821
        %v3887 = vadd.s32 %v3855, %v3822
        %v3888 = vadd.s32 %v3855, %v3823
        %v3889 = vadd.s32 %v3855, %v3824
        %v3890 = vadd.s32 %v3855, %v3825
        %v3891 = vadd.s32 %v3855, %v3826
        %v3892 = vadd.s32 %v3855, %v3827
        %v3893 = vadd.s32 %v3855, %v3828
        %v3894 = vadd.s32 %v3855, %v3829
        %v3895 = vadd.s32 %v3855, %v3830
        %v3896 = vadd.s32 %v3855, %v3831
        %v3897 = vadd.s32 %v3855, %v3832
        %v3898 = vadd.s32 %v3855, %v3833
        %v3899 = vadd.s32 %v3855, %v3834
        %v3900 = vadd.s32 %v3855, %v3835
        %v3901 = vadd.s32 %v3855, %v3836
        %v3902 = vadd.s32 %v3855, %v3837
        %v3903 = vadd.s32 %v3855, %v3838
        %v3904 = vadd.s32 %v3855, %v3839
        %v3905 = vadd.s32 %v3855, %v3840
        %v3906 = vadd.s32 %v3855, %v3841
        %v3907 = vadd.s32 %v3855, %v3842
        %v3908 = vadd.s32 %v3855, %v3843
        %v3909 = vadd.s32 %v3855, %v3844
        %v3910 = vadd.s32 %v3855, %v3845
        %v3911 = vadd.s32 %v3855, %v3846
        %v3912 = vadd.s32 %v3855, %v3847
        %v3913 = vadd.s32 %v3855, %v3848
        %v3914 = vadd.s32 %v3855, %v3849
        %v3915 = vadd.s32 %v3855, %v3850
        %v3916 = vadd.s32 %v3855, %v3851
        %v3917 = vadd.s32 %v3855, %v3852
        %v3918 = vadd.s32 %v3855, %v3853
        %v3919 = vadd.s32 %v3855, %v3854
        %vm3920 = vcmp.lt.s32.totalorder %v3856, 1000
        %vm3921 = vcmp.lt.s32.totalorder %v3857, 1000
        %vm3922 = vcmp.lt.s32.totalorder %v3858, 1000
        %vm3923 = vcmp.lt.s32.totalorder %v3859, 1000
        %vm3924 = vcmp.lt.s32.totalorder %v3860, 1000
        %vm3925 = vcmp.lt.s32.totalorder %v3861, 1000
        %vm3926 = vcmp.lt.s32.totalorder %v3862, 1000
        %vm3927 = vcmp.lt.s32.totalorder %v3863, 1000
        %vm3928 = vcmp.lt.s32.totalorder %v3864, 1000
        %vm3929 = vcmp.lt.s32.totalorder %v3865, 1000
        %vm3930 = vcmp.lt.s32.totalorder %v3866, 1000
        %vm3931 = vcmp.lt.s32.totalorder %v3867, 1000
        %vm3932 = vcmp.lt.s32.totalorder %v3868, 1000
        %vm3933 = vcmp.lt.s32.totalorder %v3869, 1000
        %vm3934 = vcmp.lt.s32.totalorder %v3870, 1000
        %vm3935 = vcmp.lt.s32.totalorder %v3871, 1000
        %vm3936 = vcmp.lt.s32.totalorder %v3872, 1000
        %vm3937 = vcmp.lt.s32.totalorder %v3873, 1000
        %vm3938 = vcmp.lt.s32.totalorder %v3874, 1000
        %vm3939 = vcmp.lt.s32.totalorder %v3875, 1000
        %vm3940 = vcmp.lt.s32.totalorder %v3876, 1000
        %vm3941 = vcmp.lt.s32.totalorder %v3877, 1000
        %vm3942 = vcmp.lt.s32.totalorder %v3878, 1000
        %vm3943 = vcmp.lt.s32.totalorder %v3879, 1000
        %vm3944 = vcmp.lt.s32.totalorder %v3880, 1000
        %vm3945 = vcmp.lt.s32.totalorder %v3881, 1000
        %vm3946 = vcmp.lt.s32.totalorder %v3882, 1000
        %vm3947 = vcmp.lt.s32.totalorder %v3883, 1000
        %vm3948 = vcmp.lt.s32.totalorder %v3884, 1000
        %vm3949 = vcmp.lt.s32.totalorder %v3885, 1000
        %vm3950 = vcmp.lt.s32.totalorder %v3886, 1000
        %vm3951 = vcmp.lt.s32.totalorder %v3887, 1000
        %vm3952 = vcmp.lt.s32.totalorder %v3888, 1000
        %vm3953 = vcmp.lt.s32.totalorder %v3889, 1000
        %vm3954 = vcmp.lt.s32.totalorder %v3890, 1000
        %vm3955 = vcmp.lt.s32.totalorder %v3891, 1000
        %vm3956 = vcmp.lt.s32.totalorder %v3892, 1000
        %vm3957 = vcmp.lt.s32.totalorder %v3893, 1000
        %vm3958 = vcmp.lt.s32.totalorder %v3894, 1000
        %vm3959 = vcmp.lt.s32.totalorder %v3895, 1000
        %vm3960 = vcmp.lt.s32.totalorder %v3896, 1000
        %vm3961 = vcmp.lt.s32.totalorder %v3897, 1000
        %vm3962 = vcmp.lt.s32.totalorder %v3898, 1000
        %vm3963 = vcmp.lt.s32.totalorder %v3899, 1000
        %vm3964 = vcmp.lt.s32.totalorder %v3900, 1000
        %vm3965 = vcmp.lt.s32.totalorder %v3901, 1000
        %vm3966 = vcmp.lt.s32.totalorder %v3902, 1000
        %vm3967 = vcmp.lt.s32.totalorder %v3903, 1000
        %vm3968 = vcmp.lt.s32.totalorder %v3904, 1000
        %vm3969 = vcmp.lt.s32.totalorder %v3905, 1000
        %vm3970 = vcmp.lt.s32.totalorder %v3906, 1000
        %vm3971 = vcmp.lt.s32.totalorder %v3907, 1000
        %vm3972 = vcmp.lt.s32.totalorder %v3908, 1000
        %vm3973 = vcmp.lt.s32.totalorder %v3909, 1000
        %vm3974 = vcmp.lt.s32.totalorder %v3910, 1000
        %vm3975 = vcmp.lt.s32.totalorder %v3911, 1000
        %vm3976 = vcmp.lt.s32.totalorder %v3912, 1000
        %vm3977 = vcmp.lt.s32.totalorder %v3913, 1000
        %vm3978 = vcmp.lt.s32.totalorder %v3914, 1000
        %vm3979 = vcmp.lt.s32.totalorder %v3915, 1000
        %vm3980 = vcmp.lt.s32.totalorder %v3916, 1000
        %vm3981 = vcmp.lt.s32.totalorder %v3917, 1000
        %vm3982 = vcmp.lt.s32.totalorder %v3918, 1000
        %vm3983 = vcmp.lt.s32.totalorder %v3919, 1000
        %v3984 = vsel %vm3920, %v3661, 0.0
        %v3985 = vsel %vm3920, %v3662, 0.0
        %v3986 = vsel %vm3921, %v3663, 0.0
        %v3987 = vsel %vm3921, %v3664, 0.0
        %v3988 = vsel %vm3922, %v3665, 0.0
        %v3989 = vsel %vm3922, %v3666, 0.0
        %v3990 = vsel %vm3923, %v3667, 0.0
        %v3991 = vsel %vm3923, %v3668, 0.0
        %v3992 = vsel %vm3924, %v3669, 0.0
        %v3993 = vsel %vm3924, %v3670, 0.0
        %v3994 = vsel %vm3925, %v3671, 0.0
        %v3995 = vsel %vm3925, %v3672, 0.0
        %v3996 = vsel %vm3926, %v3673, 0.0
        %v3997 = vsel %vm3926, %v3674, 0.0
        %v3998 = vsel %vm3927, %v3675, 0.0
        %v3999 = vsel %vm3927, %v3676, 0.0
        %v4000 = vsel %vm3928, %v3677, 0.0
        %v4001 = vsel %vm3928, %v3678, 0.0
        %v4002 = vsel %vm3929, %v3679, 0.0
        %v4003 = vsel %vm3929, %v3680, 0.0
        %v4004 = vsel %vm3930, %v3681, 0.0
        %v4005 = vsel %vm3930, %v3682, 0.0
        %v4006 = vsel %vm3931, %v3683, 0.0
        %v4007 = vsel %vm3931, %v3684, 0.0
        %v4008 = vsel %vm3932, %v3685, 0.0
        %v4009 = vsel %vm3932, %v3686, 0.0
        %v4010 = vsel %vm3933, %v3687, 0.0
        %v4011 = vsel %vm3933, %v3688, 0.0
        %v4012 = vsel %vm3934, %v3689, 0.0
        %v4013 = vsel %vm3934, %v3690, 0.0
        %v4014 = vsel %vm3935, %v3691, 0.0
        %v4015 = vsel %vm3935, %v3692, 0.0
        %v4016 = vsel %vm3936, %v3693, 0.0
        %v4017 = vsel %vm3936, %v3694, 0.0
        %v4018 = vsel %vm3937, %v3695, 0.0
        %v4019 = vsel %vm3937, %v3696, 0.0
        %v4020 = vsel %vm3938, %v3697, 0.0
        %v4021 = vsel %vm3938, %v3698, 0.0
        %v4022 = vsel %vm3939, %v3699, 0.0
        %v4023 = vsel %vm3939, %v3700, 0.0
        %v4024 = vsel %vm3940, %v3701, 0.0
        %v4025 = vsel %vm3940, %v3702, 0.0
        %v4026 = vsel %vm3941, %v3703, 0.0
        %v4027 = vsel %vm3941, %v3704, 0.0
        %v4028 = vsel %vm3942, %v3705, 0.0
        %v4029 = vsel %vm3942, %v3706, 0.0
        %v4030 = vsel %vm3943, %v3707, 0.0
        %v4031 = vsel %vm3943, %v3708, 0.0
        %v4032 = vsel %vm3944, %v3709, 0.0
        %v4033 = vsel %vm3944, %v3710, 0.0
        %v4034 = vsel %vm3945, %v3711, 0.0
        %v4035 = vsel %vm3945, %v3712, 0.0
        %v4036 = vsel %vm3946, %v3713, 0.0
        %v4037 = vsel %vm3946, %v3714, 0.0
        %v4038 = vsel %vm3947, %v3715, 0.0
        %v4039 = vsel %vm3947, %v3716, 0.0
        %v4040 = vsel %vm3948, %v3717, 0.0
        %v4041 = vsel %vm3948, %v3718, 0.0
        %v4042 = vsel %vm3949, %v3719, 0.0
        %v4043 = vsel %vm3949, %v3720, 0.0
        %v4044 = vsel %vm3950, %v3721, 0.0
        %v4045 = vsel %vm3950, %v3722, 0.0
        %v4046 = vsel %vm3951, %v3723, 0.0
        %v4047 = vsel %vm3951, %v3724, 0.0
        %v4048 = vsel %vm3952, %v3725, 0.0
        %v4049 = vsel %vm3952, %v3726, 0.0
        %v4050 = vsel %vm3953, %v3727, 0.0
        %v4051 = vsel %vm3953, %v3728, 0.0
        %v4052 = vsel %vm3954, %v3729, 0.0
        %v4053 = vsel %vm3954, %v3730, 0.0
        %v4054 = vsel %vm3955, %v3731, 0.0
        %v4055 = vsel %vm3955, %v3732, 0.0
        %v4056 = vsel %vm3956, %v3733, 0.0
        %v4057 = vsel %vm3956, %v3734, 0.0
        %v4058 = vsel %vm3957, %v3735, 0.0
        %v4059 = vsel %vm3957, %v3736, 0.0
        %v4060 = vsel %vm3958, %v3737, 0.0
        %v4061 = vsel %vm3958, %v3738, 0.0
        %v4062 = vsel %vm3959, %v3739, 0.0
        %v4063 = vsel %vm3959, %v3740, 0.0
        %v4064 = vsel %vm3960, %v3741, 0.0
        %v4065 = vsel %vm3960, %v3742, 0.0
        %v4066 = vsel %vm3961, %v3743, 0.0
        %v4067 = vsel %vm3961, %v3744, 0.0
        %v4068 = vsel %vm3962, %v3745, 0.0
        %v4069 = vsel %vm3962, %v3746, 0.0
        %v4070 = vsel %vm3963, %v3747, 0.0
        %v4071 = vsel %vm3963, %v3748, 0.0
        %v4072 = vsel %vm3964, %v3749, 0.0
        %v4073 = vsel %vm3964, %v3750, 0.0
        %v4074 = vsel %vm3965, %v3751, 0.0
        %v4075 = vsel %vm3965, %v3752, 0.0
        %v4076 = vsel %vm3966, %v3753, 0.0
        %v4077 = vsel %vm3966, %v3754, 0.0
        %v4078 = vsel %vm3967, %v3755, 0.0
        %v4079 = vsel %vm3967, %v3756, 0.0
        %v4080 = vsel %vm3968, %v3757, 0.0
        %v4081 = vsel %vm3968, %v3758, 0.0
        %v4082 = vsel %vm3969, %v3759, 0.0
        %v4083 = vsel %vm3969, %v3760, 0.0
        %v4084 = vsel %vm3970, %v3761, 0.0
        %v4085 = vsel %vm3970, %v3762, 0.0
        %v4086 = vsel %vm3971, %v3763, 0.0
        %v4087 = vsel %vm3971, %v3764, 0.0
        %v4088 = vsel %vm3972, %v3765, 0.0
        %v4089 = vsel %vm3972, %v3766, 0.0
        %v4090 = vsel %vm3973, %v3767, 0.0
        %v4091 = vsel %vm3973, %v3768, 0.0
        %v4092 = vsel %vm3974, %v3769, 0.0
        %v4093 = vsel %vm3974, %v3770, 0.0
        %v4094 = vsel %vm3975, %v3771, 0.0
        %v4095 = vsel %vm3975, %v3772, 0.0
        %v4096 = vsel %vm3976, %v3773, 0.0
        %v4097 = vsel %vm3976, %v3774, 0.0
        %v4098 = vsel %vm3977, %v3775, 0.0
        %v4099 = vsel %vm3977, %v3776, 0.0
        %v4100 = vsel %vm3978, %v3777, 0.0
        %v4101 = vsel %vm3978, %v3778, 0.0
        %v4102 = vsel %vm3979, %v3779, 0.0
        %v4103 = vsel %vm3979, %v3780, 0.0
        %v4104 = vsel %vm3980, %v3781, 0.0
        %v4105 = vsel %vm3980, %v3782, 0.0
        %v4106 = vsel %vm3981, %v3783, 0.0
        %v4107 = vsel %vm3981, %v3784, 0.0
        %v4108 = vsel %vm3982, %v3785, 0.0
        %v4109 = vsel %vm3982, %v3786, 0.0
        %v4110 = vsel %vm3983, %v3787, 0.0
        %v4111 = vsel %vm3983, %v3788, 0.0
        %v4112 = vadd.f32 %v3984, %v3985
        %v4113 = vadd.f32 %v4112, %v3986
        %v4114 = vadd.f32 %v4113, %v3987
        %v4115 = vadd.f32 %v4114, %v3988
        %v4116 = vadd.f32 %v4115, %v3989
        %v4117 = vadd.f32 %v4116, %v3990
        %v4118 = vadd.f32 %v4117, %v3991
        %v4119 = vadd.f32 %v4118, %v3992
        %v4120 = vadd.f32 %v4119, %v3993
        %v4121 = vadd.f32 %v4120, %v3994
        %v4122 = vadd.f32 %v4121, %v3995
        %v4123 = vadd.f32 %v4122, %v3996
        %v4124 = vadd.f32 %v4123, %v3997
        %v4125 = vadd.f32 %v4124, %v3998
        %v4126 = vadd.f32 %v4125, %v3999
        %v4127 = vadd.f32 %v4126, %v4000
        %v4128 = vadd.f32 %v4127, %v4001
        %v4129 = vadd.f32 %v4128, %v4002
        %v4130 = vadd.f32 %v4129, %v4003
        %v4131 = vadd.f32 %v4130, %v4004
        %v4132 = vadd.f32 %v4131, %v4005
        %v4133 = vadd.f32 %v4132, %v4006
        %v4134 = vadd.f32 %v4133, %v4007
        %v4135 = vadd.f32 %v4134, %v4008
        %v4136 = vadd.f32 %v4135, %v4009
        %v4137 = vadd.f32 %v4136, %v4010
        %v4138 = vadd.f32 %v4137, %v4011
        %v4139 = vadd.f32 %v4138, %v4012
        %v4140 = vadd.f32 %v4139, %v4013
        %v4141 = vadd.f32 %v4140, %v4014
        %v4142 = vadd.f32 %v4141, %v4015
        %v4143 = vadd.f32 %v4142, %v4016
        %v4144 = vadd.f32 %v4143, %v4017
        %v4145 = vadd.f32 %v4144, %v4018
        %v4146 = vadd.f32 %v4145, %v4019
        %v4147 = vadd.f32 %v4146, %v4020
        %v4148 = vadd.f32 %v4147, %v4021
        %v4149 = vadd.f32 %v4148, %v4022
        %v4150 = vadd.f32 %v4149, %v4023
        %v4151 = vadd.f32 %v4150, %v4024
        %v4152 = vadd.f32 %v4151, %v4025
        %v4153 = vadd.f32 %v4152, %v4026
        %v4154 = vadd.f32 %v4153, %v4027
        %v4155 = vadd.f32 %v4154, %v4028
        %v4156 = vadd.f32 %v4155, %v4029
        %v4157 = vadd.f32 %v4156, %v4030
        %v4158 = vadd.f32 %v4157, %v4031
        %v4159 = vadd.f32 %v4158, %v4032
        %v4160 = vadd.f32 %v4159, %v4033
        %v4161 = vadd.f32 %v4160, %v4034
        %v4162 = vadd.f32 %v4161, %v4035
        %v4163 = vadd.f32 %v4162, %v4036
        %v4164 = vadd.f32 %v4163, %v4037
        %v4165 = vadd.f32 %v4164, %v4038
        %v4166 = vadd.f32 %v4165, %v4039
        %v4167 = vadd.f32 %v4166, %v4040
        %v4168 = vadd.f32 %v4167, %v4041
        %v4169 = vadd.f32 %v4168, %v4042
        %v4170 = vadd.f32 %v4169, %v4043
        %v4171 = vadd.f32 %v4170, %v4044
        %v4172 = vadd.f32 %v4171, %v4045
        %v4173 = vadd.f32 %v4172, %v4046
        %v4174 = vadd.f32 %v4173, %v4047
        %v4175 = vadd.f32 %v4174, %v4048
        %v4176 = vadd.f32 %v4175, %v4049
        %v4177 = vadd.f32 %v4176, %v4050
        %v4178 = vadd.f32 %v4177, %v4051
        %v4179 = vadd.f32 %v4178, %v4052
        %v4180 = vadd.f32 %v4179, %v4053
        %v4181 = vadd.f32 %v4180, %v4054
        %v4182 = vadd.f32 %v4181, %v4055
        %v4183 = vadd.f32 %v4182, %v4056
        %v4184 = vadd.f32 %v4183, %v4057
        %v4185 = vadd.f32 %v4184, %v4058
        %v4186 = vadd.f32 %v4185, %v4059
        %v4187 = vadd.f32 %v4186, %v4060
        %v4188 = vadd.f32 %v4187, %v4061
        %v4189 = vadd.f32 %v4188, %v4062
        %v4190 = vadd.f32 %v4189, %v4063
        %v4191 = vadd.f32 %v4190, %v4064
        %v4192 = vadd.f32 %v4191, %v4065
        %v4193 = vadd.f32 %v4192, %v4066
        %v4194 = vadd.f32 %v4193, %v4067
        %v4195 = vadd.f32 %v4194, %v4068
        %v4196 = vadd.f32 %v4195, %v4069
        %v4197 = vadd.f32 %v4196, %v4070
        %v4198 = vadd.f32 %v4197, %v4071
        %v4199 = vadd.f32 %v4198, %v4072
        %v4200 = vadd.f32 %v4199, %v4073
        %v4201 = vadd.f32 %v4200, %v4074
        %v4202 = vadd.f32 %v4201, %v4075
        %v4203 = vadd.f32 %v4202, %v4076
        %v4204 = vadd.f32 %v4203, %v4077
        %v4205 = vadd.f32 %v4204, %v4078
        %v4206 = vadd.f32 %v4205, %v4079
        %v4207 = vadd.f32 %v4206, %v4080
        %v4208 = vadd.f32 %v4207, %v4081
        %v4209 = vadd.f32 %v4208, %v4082
        %v4210 = vadd.f32 %v4209, %v4083
        %v4211 = vadd.f32 %v4210, %v4084
        %v4212 = vadd.f32 %v4211, %v4085
        %v4213 = vadd.f32 %v4212, %v4086
        %v4214 = vadd.f32 %v4213, %v4087
        %v4215 = vadd.f32 %v4214, %v4088
        %v4216 = vadd.f32 %v4215, %v4089
        %v4217 = vadd.f32 %v4216, %v4090
        %v4218 = vadd.f32 %v4217, %v4091
        %v4219 = vadd.f32 %v4218, %v4092
        %v4220 = vadd.f32 %v4219, %v4093
        %v4221 = vadd.f32 %v4220, %v4094
        %v4222 = vadd.f32 %v4221, %v4095
        %v4223 = vadd.f32 %v4222, %v4096
        %v4224 = vadd.f32 %v4223, %v4097
        %v4225 = vadd.f32 %v4224, %v4098
        %v4226 = vadd.f32 %v4225, %v4099
        %v4227 = vadd.f32 %v4226, %v4100
        %v4228 = vadd.f32 %v4227, %v4101
        %v4229 = vadd.f32 %v4228, %v4102
        %v4230 = vadd.f32 %v4229, %v4103
        %v4231 = vadd.f32 %v4230, %v4104
        %v4232 = vadd.f32 %v4231, %v4105
        %v4233 = vadd.f32 %v4232, %v4106
        %v4234 = vadd.f32 %v4233, %v4107
        %v4235 = vadd.f32 %v4234, %v4108
        %v4236 = vadd.f32 %v4235, %v4109
        %v4237 = vadd.f32 %v4236, %v4110
        %v4238 = vadd.f32 %v4237, %v4111
        %4239 = vadd.xlane.f32.xlu0 %v4238
        %v4240 = vpop.xlane.xlu0 %4239
        %v4241 = vrot.slane %v4240, 4
        %v4242 = vadd.f32 %v4240, %v4241
        %v4243 = vrot.slane %v4242, 2
        %v4244 = vadd.f32 %v4242, %v4243
        %v4245 = vrot.slane %v4244, 1
        %v4246 = vadd.f32 %v4244, %v4245
        %s4247 = vtos %v4246
        %v4248 = vstv %s4247
        %4249 = vst [vmem:[%s202] sm:$0x1] %v4248
        %s4250 = sand.u32 %s82, 1
        %s4251 = scalar_lea.sflag [#allocation4], %s4250
        %s4252 = sand.u32 %s82, 1
        %s4253 = scalar_lea.vmem [#allocation7], %s4252
        // Predicated region
        $region37: #{tpu_custom_call.1} parent=27 // pred_check
          %p4254 = pneg %p92
        $region38: #{tpu_custom_call.1} parent=27 // pred_check_branch
          %4256 = sbr.rel (%p4254) target = $region40
        $region39: #{tpu_custom_call.1} parent=27 // pred_region
          %s4258 = ssub.s32 16, 16
          %4259 = vsyncadd %s4251, %s4258
          %s4260 = smul.addr %s22, 16
          %s4261 = scalar_lea.hbm %s2, %s4260
          %s4263 = sshll.u32 %s4253, 4
          %s4264 = int_to_ptr.vmem [resolvable:$true] %s4263
          %4266 = dma.vmem_to_hbm [thread:$0]  %s4264, 16, %s4261, %s4251
        $region40: #{tpu_custom_call.1} parent=27 // pred_fallthru
          _
      $region28: #{tpu_custom_call.1} parent=5 // pred_fallthru
        _
      %p4267 = scmp.le.s32.totalorder 2, %s17
      // Predicated region
      $region41: #{tpu_custom_call.1} parent=5 // pred_check
        %p4268 = pneg %p4267
      $region42: #{tpu_custom_call.1} parent=5 // pred_check_branch
        %4270 = sbr.rel (%p4268) target = $region44
      $region43: #{tpu_custom_call.1} parent=5 // pred_region
        %s4271 = ssub.s32 %s17, 2
        // Predicated region
        $region45: #{tpu_custom_call.1} parent=43 // pred_check
          %p4272 = pneg %p98
        $region46: #{tpu_custom_call.1} parent=43 // pred_check_branch
          %4274 = sbr.rel (%p4272) target = $region48
        $region47: #{tpu_custom_call.1} parent=43 // pred_region
          %s4275 = sand.u32 %s83, 1
          %s4276 = scalar_lea.sflag [#allocation4], %s4275
          %s4277 = sand.u32 %s83, 1
          %s4278 = scalar_lea.vmem [#allocation7], %s4277
          %4279 = dma.done %s4276, 16
        $region48: #{tpu_custom_call.1} parent=43 // pred_fallthru
          _
      $region44: #{tpu_custom_call.1} parent=5 // pred_fallthru
        _
    $region6: #{tpu_custom_call.1} parent=1 // loop_footer
      %s21 = sadd.s32 1, %s17
    $region7: #{tpu_custom_call.1} parent=1 // loop_footer_branch
      %16 = sbr.rel target = $region3
    $region8: #{tpu_custom_call.1} parent=1 // loop_exit
      _
    %4280 = vsyncpa [#allocation3], 1
    %s4281 = scalar_lea.sflag [#allocation3], 1
    %4282 = vsyncpa %s4281, 1
    %4283 = vsyncpa [#allocation6], 1
    %s4284 = scalar_lea.sflag [#allocation6], 1
    %4285 = vsyncpa %s4284, 1
    %4286 = vsyncpa [#allocation4], 1
    %s4287 = scalar_lea.sflag [#allocation4], 1
    %4288 = vsyncpa %s4287, 1

</llo_original>
